<compile_context>
chip_gen: v7x
topology: tpu7x:2x2x1
jax: 0.10.0
libtpu: 0.0.40
codegen_flags: <defaults>
</compile_context>

<pallas_src>
import math
from functools import partial

import numpy as np
import jax
import jax.numpy as jnp
from jax.experimental import pallas as pl
from jax.experimental.pallas import tpu as pltpu

# MXU input dtype (accumulation stays f32; elementwise math stays f32 -> v5e safe)
MXU_DTYPE = jnp.bfloat16


def _round_up(x, m):
    return ((x + m - 1) // m) * m


def _vmem_limit_bytes():
    """Generation-aware scoped-VMEM budget: ~3/4 of physical, capped at 96 MiB."""
    try:
        info = pltpu.get_tpu_info()
        cap = None
        for name in ("vmem_capacity_bytes", "vmem_size_bytes", "vmem_bytes"):
            cap = getattr(info, name, None)
            if cap:
                break
        if not cap:
            return 48 * 1024 * 1024
        return int(min(cap * 3 // 4, 96 * 1024 * 1024))
    except Exception:
        return 48 * 1024 * 1024            # safe on v5e / v6e / v7x


VMEM_LIMIT = _vmem_limit_bytes()


def _pick_tile(dim, cap):
    """Largest tile <= cap dividing dim; prefer 256-multiples (v6e/v7x MXU)."""
    if dim <= cap:
        return dim
    t = (cap // 256) * 256
    while t >= 256:
        if dim % t == 0:
            return t
        t -= 256
    t = (cap // 128) * 128
    while t >= 128:
        if dim % t == 0:
            return t
        t -= 128
    return dim  # unreachable for 128-multiple dims


# --------------------------------------------------------------------------
# Weight packing (done once at init: pad to 128-multiples, cast to bf16)
# --------------------------------------------------------------------------

def pack_linear(w, b):
    """w: (K, N) f32 input-major, b: (N,) f32 -> pre-padded bf16 weight pack."""
    K, N = w.shape
    Kp, Np = _round_up(K, 128), _round_up(N, 128)
    wp = jnp.pad(w, ((0, Kp - K), (0, Np - N))).astype(MXU_DTYPE)
    bp = jnp.pad(b, (0, Np - N)).reshape(1, Np).astype(jnp.float32)
    return {"w": wp, "b": bp}


def pack_ln(g, b):
    D = g.shape[0]
    Dp = _round_up(D, 128)
    return {"g": jnp.pad(g, (0, Dp - D)).reshape(1, Dp).astype(jnp.float32),
            "b": jnp.pad(b, (0, Dp - D)).reshape(1, Dp).astype(jnp.float32)}


# --------------------------------------------------------------------------
# Tiled linear:  y = act(x @ w + b) (+ residual) (+ fused LayerNorm)
# --------------------------------------------------------------------------

def linear_pallas(x, lin, n_out, activation=None, residual=None,
                  layernorm=None, eps=1e-5):
    """x: (M, K) f32, lin: packed bf16 weight dict, n_out: real output width.

    Optional fused epilogue (in the last-K flush):
      activation='relu', residual add, and LayerNorm over the real n_out cols.
    """
    w, bias = lin["w"], lin["b"]            # (Kp, Np) bf16, (1, Np) f32
    Kp, Np = w.shape
    M, K = x.shape
    N = int(n_out)
    assert K <= Kp and N <= Np, (K, Kp, N, Np)

    tm = min(256, _round_up(M, 8))
    Mp = _round_up(M, tm)
    tk = _pick_tile(Kp, 1024)
    tn = Np if layernorm is not None else _pick_tile(Np, 2048)
    nk = Kp // tk

    xp = x if (Mp == M and Kp == K) else jnp.pad(x, ((0, Mp - M), (0, Kp - K)))
    has_res = residual is not None
    if has_res:
        rp = (residual if (Mp == M and Np == N)
              else jnp.pad(residual, ((0, Mp - M), (0, Np - N))))
    has_ln = layernorm is not None

    def kernel(*refs):
        x_ref, w_ref, b_ref = refs[0], refs[1], refs[2]
        idx = 3
        r_ref = g_ref = bt_ref = None
        if has_res:
            r_ref = refs[idx]; idx += 1
        if has_ln:
            g_ref, bt_ref = refs[idx], refs[idx + 1]; idx += 2
        o_ref, acc_ref = refs[idx], refs[idx + 1]

        k_i = pl.program_id(2)

        @pl.when(k_i == 0)
        def _init():
            acc_ref[...] = jnp.zeros_like(acc_ref)

        acc_ref[...] += jnp.dot(x_ref[...].astype(MXU_DTYPE), w_ref[...],
                                preferred_element_type=jnp.float32)

        @pl.when(k_i == nk - 1)
        def _flush():
            r = acc_ref[...] + b_ref[...]
            if activation == "relu":
                r = jnp.maximum(r, 0.0)
            if has_res:
                r = r + r_ref[...]
            if has_ln:
                mu = jnp.sum(r, axis=-1, keepdims=True) * (1.0 / N)
                xc = r - mu
                if Np != N:
                    col = jax.lax.broadcasted_iota(jnp.int32, r.shape, 1)
                    xc = jnp.where(col < N, xc, 0.0)
                var = jnp.sum(xc * xc, axis=-1, keepdims=True) * (1.0 / N)
                inv = jax.lax.rsqrt(var + eps)
                r = xc * inv * g_ref[...] + bt_ref[...]
            o_ref[...] = r.astype(o_ref.dtype)

    # weight stream spec: 3-deep buffering when the weight block index varies
    w_map = lambda i, j, k: (k, j)
    weight_spec = pl.BlockSpec((tk, tn), w_map)
    if (Kp // tk) * (Np // tn) >= 2:
        try:
            weight_spec = pl.BlockSpec((tk, tn), w_map,
                                       pipeline_mode=pl.Buffered(3))
        except Exception:
            weight_spec = pl.BlockSpec((tk, tn), w_map)

    in_specs = [pl.BlockSpec((tm, tk), lambda i, j, k: (i, k)),
                weight_spec,
                pl.BlockSpec((1, tn), lambda i, j, k: (0, j))]
    ins = [xp, w, bias]
    if has_res:
        in_specs.append(pl.BlockSpec((tm, tn), lambda i, j, k: (i, j)))
        ins.append(rp)
    if has_ln:
        in_specs.append(pl.BlockSpec((1, tn), lambda i, j, k: (0, j)))
        in_specs.append(pl.BlockSpec((1, tn), lambda i, j, k: (0, j)))
        ins.extend([layernorm["g"], layernorm["b"]])

    out = pl.pallas_call(
        kernel,
        out_shape=jax.ShapeDtypeStruct((Mp, Np), jnp.float32),
        grid=(Mp // tm, Np // tn, nk),
        in_specs=in_specs,
        out_specs=pl.BlockSpec((tm, tn), lambda i, j, k: (i, j)),
        scratch_shapes=[pltpu.VMEM((tm, tn), jnp.float32)],
        compiler_params=pltpu.CompilerParams(
            dimension_semantics=("parallel", "parallel", "arbitrary"),
            vmem_limit_bytes=VMEM_LIMIT),
    )(*ins)

    if Mp != M or Np != N:
        out = out[:M, :N]
    return out


# --------------------------------------------------------------------------
# Multi-head attention core: one batch element per grid step, heads unrolled.
# --------------------------------------------------------------------------

def mha_attention_pallas(q, k, v, mask_bias, nhead):
    """q,k,v: (B, L, E) f32, mask_bias: (B, 1, L) f32 additive key bias.

    Returns (attn_out (B, L, E) f32, head-averaged weights (B, L, L) f32).
    """
    B, L, E = q.shape
    dh = E // nhead
    scale = 1.0 / math.sqrt(dh)
    aligned = (dh % 128 == 0)       # lane-aligned per-head stores (prod shapes)

    def kernel(bias_ref, q_ref, k_ref, v_ref, o_ref, w_ref):
        bias = bias_ref[0]                        # (1, L) broadcasts over rows
        qb, kb, vb = q_ref[0], k_ref[0], v_ref[0]  # (L, E) each
        w_acc = jnp.zeros((L, L), jnp.float32)
        outs = []
        for h in range(nhead):                    # static unroll (nhead small)
            lo = h * dh
            s = jax.lax.dot_general(
                qb[:, lo:lo + dh].astype(MXU_DTYPE),
                kb[:, lo:lo + dh].astype(MXU_DTYPE),
                (((1,), (1,)), ((), ())),
                preferred_element_type=jnp.float32) * scale
            s = s + bias
            m = jnp.max(s, axis=-1, keepdims=True)
            e = jnp.exp(s - m)
            p = e * pl.reciprocal(jnp.sum(e, axis=-1, keepdims=True), approx=True)
            oh = jnp.dot(p.astype(MXU_DTYPE), vb[:, lo:lo + dh].astype(MXU_DTYPE),
                         preferred_element_type=jnp.float32)
            w_acc = w_acc + p
            if aligned:
                o_ref[0, :, lo:lo + dh] = oh       # lane-dense direct store
            else:
                outs.append(oh)
        if not aligned:
            o_ref[0] = jnp.concatenate(outs, axis=-1)
        w_ref[0] = w_acc * (1.0 / nhead)

    out, wts = pl.pallas_call(
        kernel,
        out_shape=(jax.ShapeDtypeStruct((B, L, E), jnp.float32),
                   jax.ShapeDtypeStruct((B, L, L), jnp.float32)),
        grid=(B,),
        in_specs=[pl.BlockSpec((1, 1, L), lambda b: (b, 0, 0)),
                  pl.BlockSpec((1, L, E), lambda b: (b, 0, 0)),
                  pl.BlockSpec((1, L, E), lambda b: (b, 0, 0)),
                  pl.BlockSpec((1, L, E), lambda b: (b, 0, 0))],
        out_specs=(pl.BlockSpec((1, L, E), lambda b: (b, 0, 0)),
                   pl.BlockSpec((1, L, L), lambda b: (b, 0, 0))),
        compiler_params=pltpu.CompilerParams(
            dimension_semantics=("parallel",),     # megacore over batch (v7x)
            vmem_limit_bytes=VMEM_LIMIT),
    )(mask_bias, q, k, v)
    return out, wts


# --------------------------------------------------------------------------
# Transformer layers (batch-first glue around the Pallas kernels)
# --------------------------------------------------------------------------

def multihead_attention(qk_src, v_src, key_pad_mask, p, nhead, E):
    """torch.nn.MultiheadAttention core (eval, average_attn_weights=True),
    WITHOUT the output projection (the caller fuses it with residual+LN)."""
    B, L, _ = qk_src.shape
    qk_flat = qk_src.reshape(B * L, E)
    q = linear_pallas(qk_flat, p["q"], E).reshape(B, L, E)
    k = linear_pallas(qk_flat, p["k"], E).reshape(B, L, E)
    v = linear_pallas(v_src.reshape(B * L, E), p["v"], E).reshape(B, L, E)

    # large finite negative instead of -inf (robust against all-masked rows)
    bias = jnp.where(key_pad_mask, -1e30, 0.0).astype(jnp.float32).reshape(B, 1, L)
    return mha_attention_pallas(q, k, v, bias, nhead)


def encoder_layer(src, mask, p, nhead, E, F):
    B, L, _ = src.shape
    attn, w = multihead_attention(src, src, mask, p["attn"], nhead, E)
    src_flat = src.reshape(B * L, E)
    # out-proj + residual + LayerNorm fused in one kernel flush
    s = linear_pallas(attn.reshape(B * L, E), p["attn"]["o"], E,
                      residual=src_flat, layernorm=p["norm1"])
    h = linear_pallas(s, p["lin1"], F, activation="relu")
    s = linear_pallas(h, p["lin2"], E, residual=s, layernorm=p["norm2"])
    return s.reshape(B, L, E), w


def decoder_layer(x, mask, pos, p, nhead, E, F):
    B, L, _ = x.shape
    qk = x + pos
    attn, w = multihead_attention(qk, x, mask, p["attn"], nhead, E)
    x_flat = x.reshape(B * L, E)
    tgt = linear_pallas(attn.reshape(B * L, E), p["attn"]["o"], E,
                        residual=x_flat, layernorm=p["norm3"])
    h = linear_pallas(tgt, p["lin1"], F, activation="relu")
    tgt = linear_pallas(h, p["lin2"], E, residual=tgt)   # fused residual, no LN
    return tgt.reshape(B, L, E), w


# --------------------------------------------------------------------------
# Device-side forward (single jit: encoder -> decoder -> output gather)
# --------------------------------------------------------------------------

@partial(jax.jit, static_argnames=("nhead", "shapes", "mode"))
def _device_forward(features, enc_dst, enc_mask, dec_src, dec_dst, pos0, pos1,
                    ga, gb, wa, wb, enc_layers, dec_layers, pos_w,
                    *, nhead, shapes, mode):
    l, b, L2, Bm1, D, F = shapes

    # scatter features into per-frame buckets: (b, l, D), batch-first
    rel = jnp.zeros((b * l, D), jnp.float32).at[enc_dst].set(features)
    x = rel.reshape(b, l, D)

    enc_ws = []
    for p in enc_layers:
        x, w = encoder_layer(x, enc_mask, p, nhead, D, F)
        enc_ws.append(w)
    local_w = jnp.stack(enc_ws, axis=0) if enc_ws else None

    # encoder output row for each original feature
    lo_feat = x.reshape(b * l, D)[enc_dst]                       # (N, D)

    # sliding-window pairs for the temporal decoder
    gi = jnp.zeros((Bm1 * L2, D), jnp.float32).at[dec_dst].set(lo_feat[dec_src])
    pos = (jnp.zeros((Bm1 * L2, D), jnp.float32)
           .at[pos0].set(pos_w[0]).at[pos1].set(pos_w[1]))
    gmask = (jnp.sum(gi, axis=1) == 0).reshape(Bm1, L2)

    y = gi.reshape(Bm1, L2, D)
    pos = pos.reshape(Bm1, L2, D)
    dec_ws = []
    for p in dec_layers:
        y, w = decoder_layer(y, gmask, pos, p, nhead, D, F)
        dec_ws.append(w)
    global_w = jnp.stack(dec_ws, axis=0) if dec_ws else None

    go = y.reshape(Bm1 * L2, D)
    if mode in ("latter", "both"):
        out = (jnp.take(go, ga, axis=0) * wa[:, None]
               + jnp.take(go, gb, axis=0) * wb[:, None])
    else:
        out = jnp.zeros_like(features)
    return out, global_w, local_w


# --------------------------------------------------------------------------
# Full "transformer" module forward (host builds small integer index plans)
# --------------------------------------------------------------------------

def transformer_forward(features, im_idx, params, mode="latter"):
    nhead = int(params["nhead"])
    F = int(params["dim_feedforward"])
    im = np.asarray(im_idx).astype(np.int64)
    N = im.shape[0]
    D = int(features.shape[1])

    b = int(im[-1] + 1)
    counts = np.bincount(im, minlength=b)[:b]
    l = int(counts.max())                 # count of the mode value
    L2, Bm1 = 2 * l, b - 1

    # rank of each feature within its frame (stable original order) — vectorized
    starts = np.zeros(b, np.int64)
    starts[1:] = np.cumsum(counts)[:-1]
    order = np.argsort(im, kind="stable")
    rank = np.empty(N, np.int64)
    rank[order] = np.arange(N) - starts[im[order]]
    enc_dst = (im * l + rank).astype(np.int32)

    # encoder key-padding mask (True = pad)
    enc_mask = (np.arange(l)[None, :] >= counts[:, None])

    frames = [order[starts[j]:starts[j] + counts[j]] for j in range(b)]

    # sliding-window scatter plan (frame j then frame j+1, per window j)
    dec_src_l, dec_dst_l, pos0_l, pos1_l = [], [], [], []
    for j in range(Bm1):
        cj, cj1 = int(counts[j]), int(counts[j + 1])
        base = j * L2
        dec_src_l.append(frames[j]); dec_src_l.append(frames[j + 1])
        dec_dst_l.append(base + np.arange(cj + cj1))
        pos0_l.append(base + np.arange(cj))
        pos1_l.append(base + cj + np.arange(cj1))
    _cat = lambda lst: (np.concatenate(lst).astype(np.int32) if lst
                        else np.zeros((0,), np.int32))
    dec_src, dec_dst = _cat(dec_src_l), _cat(dec_dst_l)
    pos0, pos1 = _cat(pos0_l), _cat(pos1_l)

    # final output gather plan (replaces the python scatter loops) — vectorized
    ga = np.zeros(N, np.int32)
    gb = np.zeros(N, np.int32)
    wa = np.zeros(N, np.float32)
    wb = np.zeros(N, np.float32)
    if mode in ("latter", "both") and b >= 2:
        f0 = frames[0]
        ga[f0] = rank[f0]; gb[f0] = rank[f0]; wa[f0] = 1.0
        for t in range(1, b):
            ft = frames[t]
            a_idx = (t - 1) * L2 + counts[t - 1] + rank[ft]
            if mode == "latter" or t == b - 1:
                ga[ft] = a_idx; gb[ft] = a_idx; wa[ft] = 1.0
            else:  # mode == "both", middle frames: average of both windows
                ga[ft] = a_idx
                gb[ft] = t * L2 + rank[ft]
                wa[ft] = 0.5; wb[ft] = 0.5

    shapes = (int(l), int(b), int(L2), int(Bm1), int(D), int(F))
    out, global_w, local_w = _device_forward(
        jnp.asarray(features, jnp.float32),
        jnp.asarray(enc_dst), jnp.asarray(enc_mask),
        jnp.asarray(dec_src), jnp.asarray(dec_dst),
        jnp.asarray(pos0), jnp.asarray(pos1),
        jnp.asarray(ga), jnp.asarray(gb), jnp.asarray(wa), jnp.asarray(wb),
        params["enc_layers"], params["dec_layers"], params["pos_embed"],
        nhead=nhead, shapes=shapes, mode=mode)
    return out, global_w, local_w


# --------------------------------------------------------------------------
# Deterministic parameter init (weights stored input-major, pre-padded bf16)
# --------------------------------------------------------------------------

def init_mha_params(key, E):
    k1, k2, k3, k4 = jax.random.split(key, 4)
    w_qkv = jax.random.normal(k1, (E, 3 * E), jnp.float32) * 0.05
    b_qkv = jax.random.normal(k2, (3 * E,), jnp.float32) * 0.02
    w_o = jax.random.normal(k3, (E, E), jnp.float32) * 0.05
    b_o = jax.random.normal(k4, (E,), jnp.float32) * 0.02
    return {
        "q": pack_linear(w_qkv[:, :E], b_qkv[:E]),
        "k": pack_linear(w_qkv[:, E:2 * E], b_qkv[E:2 * E]),
        "v": pack_linear(w_qkv[:, 2 * E:], b_qkv[2 * E:]),
        "o": pack_linear(w_o, b_o),
    }


def init_layer_params(key, E, F, kind):
    ka, k1, k2, k3, k4 = jax.random.split(key, 5)
    p = {
        "attn": init_mha_params(ka, E),
        "lin1": pack_linear(jax.random.normal(k1, (E, F), jnp.float32) * 0.05,
                            jax.random.normal(k2, (F,), jnp.float32) * 0.02),
        "lin2": pack_linear(jax.random.normal(k3, (F, E), jnp.float32) * 0.05,
                            jax.random.normal(k4, (E,), jnp.float32) * 0.02),
    }
    ones, zeros = jnp.ones((E,), jnp.float32), jnp.zeros((E,), jnp.float32)
    if kind == "enc":
        p["norm1"] = pack_ln(ones, zeros)
        p["norm2"] = pack_ln(ones, zeros)
    else:
        p["norm3"] = pack_ln(ones, zeros)
    return p


def init_transformer_params(key, E, nhead, F, enc_layer_num, dec_layer_num):
    ke, kd, kp = jax.random.split(key, 3)
    enc_p = init_layer_params(ke, E, F, "enc")
    dec_p = init_layer_params(kd, E, F, "dec")
    # _get_clones uses copy.deepcopy -> identical parameters in every layer.
    return {
        "nhead": nhead,
        "dim_feedforward": F,
        "enc_layers": [enc_p for _ in range(enc_layer_num)],
        "dec_layers": [dec_p for _ in range(dec_layer_num)],
        "pos_embed": jax.random.uniform(kp, (2, E), jnp.float32),  # nn.init.uniform_
    }


if __name__ == "__main__":
    E, NHEAD, FF = 128, 4, 256          # small stand-ins for (1936, 8, 2048)
    key = jax.random.PRNGKey(0)
    kf, kp = jax.random.split(key)

    im_idx = np.array([0, 0, 0, 1, 1, 1, 2, 2, 3, 3], dtype=np.int32)
    N = im_idx.shape[0]
    features = jax.random.normal(kf, (N, E), dtype=jnp.float32)

    params = init_transformer_params(kp, E, NHEAD, FF,
                                     enc_layer_num=1, dec_layer_num=3)

    out, global_w, local_w = transformer_forward(features, im_idx, params,
                                                 mode="latter")
    jax.block_until_ready((out, global_w, local_w))
    assert out.shape == (N, E)
    assert local_w.shape == (1, 4, 3, 3)      # (enc_layers, b, l, l)
    assert global_w.shape == (3, 3, 6, 6)     # (dec_layers, b-1, 2l, 2l)
    assert bool(jnp.all(jnp.isfinite(out)))
    print("KERNEL_OK")
</pallas_src>

<mosaic_0001>
module attributes {stable_mosaic.version = 11 : i64} {
  func.func @kernel(%arg0: i32, %arg1: i32, %arg2: i32, %arg3: memref<16x128xf32, #tpu.memory_space<vmem>>, %arg4: memref<128x128xbf16, #tpu.memory_space<vmem>>, %arg5: memref<1x128xf32, #tpu.memory_space<vmem>>, %arg6: memref<16x128xf32, #tpu.memory_space<vmem>>, %arg7: memref<16x128xf32, #tpu.memory_space<vmem>>) attributes {dimension_semantics = [#tpu.dimension_semantics<parallel>, #tpu.dimension_semantics<parallel>, #tpu.dimension_semantics<arbitrary>], iteration_bounds = array<i64: 1, 1, 1>, scalar_prefetch = 0 : i64, scratch_operands = 1 : i64, tpu.core_type = #tpu.core_type<tc>, window_params = [{transform_indices = @transform_0, window_bounds = array<i64: 16, 128>}, {transform_indices = @transform_1, window_bounds = array<i64: 128, 128>}, {transform_indices = @transform_2, window_bounds = array<i64: 1, 128>}, {transform_indices = @transform_3, window_bounds = array<i64: 16, 128>}]} {
    %c0_i32 = arith.constant 0 : i32
    %0 = arith.cmpi eq, %arg2, %c0_i32 : i32
    %1 = arith.extui %0 : i1 to i32
    %c0_i32_0 = arith.constant 0 : i32
    %2 = arith.cmpi ne, %1, %c0_i32_0 : i32
    scf.if %2 {
      %cst_10 = arith.constant 0.000000e+00 : f32
      %13 = vector.broadcast %cst_10 : f32 to vector<16x128xf32>
      %c0_11 = arith.constant 0 : index
      %c0_12 = arith.constant 0 : index
      %14 = vector.load %arg7[%c0_11, %c0_12] : memref<16x128xf32, #tpu.memory_space<vmem>>, vector<16x128xf32>
      tpu.vector_store %arg7[%c0_11, %c0_12], %13 {strides = array<i32>} : memref<16x128xf32, #tpu.memory_space<vmem>>, vector<16x128xf32>,
    } else {
    }
    %c0 = arith.constant 0 : index
    %c0_1 = arith.constant 0 : index
    %3 = vector.load %arg7[%c0, %c0_1] : memref<16x128xf32, #tpu.memory_space<vmem>>, vector<16x128xf32>
    %c0_2 = arith.constant 0 : index
    %c0_3 = arith.constant 0 : index
    %4 = vector.load %arg3[%c0_2, %c0_3] : memref<16x128xf32, #tpu.memory_space<vmem>>, vector<16x128xf32>
    %5 = arith.truncf %4 : vector<16x128xf32> to vector<16x128xbf16>
    %c0_4 = arith.constant 0 : index
    %c0_5 = arith.constant 0 : index
    %6 = vector.load %arg4[%c0_4, %c0_5] : memref<128x128xbf16, #tpu.memory_space<vmem>>, vector<128x128xbf16>
    %cst = arith.constant dense<0.000000e+00> : vector<16x128xf32>
    %7 = tpu.matmul %5, %6, %cst {dimension_numbers = #tpu.dot_dimension_numbers<[1], [0], [0], [1], [0, 0, 1, 1], [], []>} : vector<16x128xbf16>, vector<128x128xbf16>, vector<16x128xf32> -> vector<16x128xf32>
    %8 = arith.addf %3, %7 : vector<16x128xf32>
    %c0_6 = arith.constant 0 : index
    %c0_7 = arith.constant 0 : index
    %9 = vector.load %arg7[%c0_6, %c0_7] : memref<16x128xf32, #tpu.memory_space<vmem>>, vector<16x128xf32>
    tpu.vector_store %arg7[%c0_6, %c0_7], %8 {strides = array<i32>} : memref<16x128xf32, #tpu.memory_space<vmem>>, vector<16x128xf32>,
    %c0_i32_8 = arith.constant 0 : i32
    %10 = arith.cmpi eq, %arg2, %c0_i32_8 : i32
    %11 = arith.extui %10 : i1 to i32
    %c0_i32_9 = arith.constant 0 : i32
    %12 = arith.cmpi ne, %11, %c0_i32_9 : i32
    scf.if %12 {
      %c0_10 = arith.constant 0 : index
      %c0_11 = arith.constant 0 : index
      %13 = vector.load %arg7[%c0_10, %c0_11] : memref<16x128xf32, #tpu.memory_space<vmem>>, vector<16x128xf32>
      %c0_12 = arith.constant 0 : index
      %c0_13 = arith.constant 0 : index
      %14 = vector.load %arg5[%c0_12, %c0_13] : memref<1x128xf32, #tpu.memory_space<vmem>>, vector<1x128xf32>
      %15 = vector.broadcast %14 : vector<1x128xf32> to vector<16x128xf32>
      %16 = arith.addf %13, %15 : vector<16x128xf32>
      %c0_14 = arith.constant 0 : index
      %c0_15 = arith.constant 0 : index
      %17 = vector.load %arg6[%c0_14, %c0_15] : memref<16x128xf32, #tpu.memory_space<vmem>>, vector<16x128xf32>
      tpu.vector_store %arg6[%c0_14, %c0_15], %16 {strides = array<i32>} : memref<16x128xf32, #tpu.memory_space<vmem>>, vector<16x128xf32>,
    } else {
    }
    return
  }
  func.func @transform_0(%arg0: i32, %arg1: i32, %arg2: i32) -> (i32, i32) {
    %c0_i32 = arith.constant 0 : i32
    return %arg0, %arg2 : i32, i32
  }
  func.func @transform_1(%arg0: i32, %arg1: i32, %arg2: i32) -> (i32, i32) {
    %c0_i32 = arith.constant 0 : i32
    return %arg2, %arg1 : i32, i32
  }
  func.func @transform_2(%arg0: i32, %arg1: i32, %arg2: i32) -> (i32, i32) {
    %c0_i32 = arith.constant 0 : i32
    %c0_i32_0 = arith.constant 0 : i32
    return %c0_i32, %arg1 : i32, i32
  }
  func.func @transform_3(%arg0: i32, %arg1: i32, %arg2: i32) -> (i32, i32) {
    %c0_i32 = arith.constant 0 : i32
    return %arg0, %arg1 : i32, i32
  }
}

module attributes {stable_mosaic.version = 11 : i64} {
  func.func @kernel(%arg0: i32, %arg1: memref<1x1x3xf32, #tpu.memory_space<vmem>>, %arg2: memref<1x3x128xf32, #tpu.memory_space<vmem>>, %arg3: memref<1x3x128xf32, #tpu.memory_space<vmem>>, %arg4: memref<1x3x128xf32, #tpu.memory_space<vmem>>, %arg5: memref<1x3x128xf32, #tpu.memory_space<vmem>>, %arg6: memref<1x3x3xf32, #tpu.memory_space<vmem>>) attributes {dimension_semantics = [#tpu.dimension_semantics<parallel>], iteration_bounds = array<i64: 4>, scalar_prefetch = 0 : i64, scratch_operands = 0 : i64, tpu.core_type = #tpu.core_type<tc>, window_params = [{transform_indices = @transform_0, window_bounds = array<i64: 1, 1, 3>}, {transform_indices = @transform_1, window_bounds = array<i64: 1, 3, 128>}, {transform_indices = @transform_2, window_bounds = array<i64: 1, 3, 128>}, {transform_indices = @transform_3, window_bounds = array<i64: 1, 3, 128>}, {transform_indices = @transform_4, window_bounds = array<i64: 1, 3, 128>}, {transform_indices = @transform_5, window_bounds = array<i64: 1, 3, 3>}]} {
    %c0 = arith.constant 0 : index
    %c0_0 = arith.constant 0 : index
    %c0_1 = arith.constant 0 : index
    %0 = vector.load %arg1[%c0, %c0_0, %c0_1] : memref<1x1x3xf32, #tpu.memory_space<vmem>>, vector<1x1x3xf32>
    %1 = vector.shape_cast %0 : vector<1x1x3xf32> to vector<1x3xf32>
    %c0_2 = arith.constant 0 : index
    %c0_3 = arith.constant 0 : index
    %c0_4 = arith.constant 0 : index
    %2 = vector.load %arg2[%c0_2, %c0_3, %c0_4] : memref<1x3x128xf32, #tpu.memory_space<vmem>>, vector<1x3x128xf32>
    %3 = vector.shape_cast %2 : vector<1x3x128xf32> to vector<3x128xf32>
    %c0_5 = arith.constant 0 : index
    %c0_6 = arith.constant 0 : index
    %c0_7 = arith.constant 0 : index
    %4 = vector.load %arg3[%c0_5, %c0_6, %c0_7] : memref<1x3x128xf32, #tpu.memory_space<vmem>>, vector<1x3x128xf32>
    %5 = vector.shape_cast %4 : vector<1x3x128xf32> to vector<3x128xf32>
    %c0_8 = arith.constant 0 : index
    %c0_9 = arith.constant 0 : index
    %c0_10 = arith.constant 0 : index
    %6 = vector.load %arg4[%c0_8, %c0_9, %c0_10] : memref<1x3x128xf32, #tpu.memory_space<vmem>>, vector<1x3x128xf32>
    %7 = vector.shape_cast %6 : vector<1x3x128xf32> to vector<3x128xf32>
    %cst = arith.constant 0.000000e+00 : f32
    %8 = vector.broadcast %cst : f32 to vector<3x3xf32>
    %9 = vector.extract_strided_slice %3 {offsets = [0, 0], sizes = [3, 32], strides = [1, 1]} : vector<3x128xf32> to vector<3x32xf32>
    %10 = arith.truncf %9 : vector<3x32xf32> to vector<3x32xbf16>
    %11 = vector.extract_strided_slice %5 {offsets = [0, 0], sizes = [3, 32], strides = [1, 1]} : vector<3x128xf32> to vector<3x32xf32>
    %12 = arith.truncf %11 : vector<3x32xf32> to vector<3x32xbf16>
    %cst_11 = arith.constant dense<0.000000e+00> : vector<3x3xf32>
    %13 = tpu.matmul %10, %12, %cst_11 {dimension_numbers = #tpu.dot_dimension_numbers<[1], [1], [0], [0], [0, 0, 1, 0], [], []>} : vector<3x32xbf16>, vector<3x32xbf16>, vector<3x3xf32> -> vector<3x3xf32>
    %cst_12 = arith.constant 0.176776692 : f32
    %14 = vector.broadcast %cst_12 : f32 to vector<3x3xf32>
    %15 = arith.mulf %13, %14 : vector<3x3xf32>
    %16 = vector.broadcast %1 : vector<1x3xf32> to vector<3x3xf32>
    %17 = arith.addf %15, %16 : vector<3x3xf32>
    %cst_13 = arith.constant dense<0xFF800000> : vector<3xf32>
    %18 = vector.multi_reduction <maximumf>, %17, %cst_13 [1] : vector<3x3xf32> to vector<3xf32>
    %19 = vector.shape_cast %18 : vector<3xf32> to vector<3x1xf32>
    %20 = vector.broadcast %19 : vector<3x1xf32> to vector<3x3xf32>
    %21 = arith.subf %17, %20 : vector<3x3xf32>
    %22 = math.exp %21 : vector<3x3xf32>
    %cst_14 = arith.constant dense<0.000000e+00> : vector<3xf32>
    %23 = vector.multi_reduction <add>, %22, %cst_14 [1] : vector<3x3xf32> to vector<3xf32>
    %24 = vector.shape_cast %23 : vector<3xf32> to vector<3x1xf32>
    %25 = tpu.reciprocal %24 {approx = true} : vector<3x1xf32> -> vector<3x1xf32>
    %26 = vector.broadcast %25 : vector<3x1xf32> to vector<3x3xf32>
    %27 = arith.mulf %22, %26 : vector<3x3xf32>
    %28 = arith.truncf %27 : vector<3x3xf32> to vector<3x3xbf16>
    %29 = vector.extract_strided_slice %7 {offsets = [0, 0], sizes = [3, 32], strides = [1, 1]} : vector<3x128xf32> to vector<3x32xf32>
    %30 = arith.truncf %29 : vector<3x32xf32> to vector<3x32xbf16>
    %cst_15 = arith.constant dense<0.000000e+00> : vector<3x32xf32>
    %31 = tpu.matmul %28, %30, %cst_15 {dimension_numbers = #tpu.dot_dimension_numbers<[1], [0], [0], [1], [0, 0, 1, 1], [], []>} : vector<3x3xbf16>, vector<3x32xbf16>, vector<3x32xf32> -> vector<3x32xf32>
    %32 = arith.addf %8, %27 : vector<3x3xf32>
    %33 = vector.extract_strided_slice %3 {offsets = [0, 32], sizes = [3, 32], strides = [1, 1]} : vector<3x128xf32> to vector<3x32xf32>
    %34 = arith.truncf %33 : vector<3x32xf32> to vector<3x32xbf16>
    %35 = vector.extract_strided_slice %5 {offsets = [0, 32], sizes = [3, 32], strides = [1, 1]} : vector<3x128xf32> to vector<3x32xf32>
    %36 = arith.truncf %35 : vector<3x32xf32> to vector<3x32xbf16>
    %cst_16 = arith.constant dense<0.000000e+00> : vector<3x3xf32>
    %37 = tpu.matmul %34, %36, %cst_16 {dimension_numbers = #tpu.dot_dimension_numbers<[1], [1], [0], [0], [0, 0, 1, 0], [], []>} : vector<3x32xbf16>, vector<3x32xbf16>, vector<3x3xf32> -> vector<3x3xf32>
    %cst_17 = arith.constant 0.176776692 : f32
    %38 = vector.broadcast %cst_17 : f32 to vector<3x3xf32>
    %39 = arith.mulf %37, %38 : vector<3x3xf32>
    %40 = vector.broadcast %1 : vector<1x3xf32> to vector<3x3xf32>
    %41 = arith.addf %39, %40 : vector<3x3xf32>
    %cst_18 = arith.constant dense<0xFF800000> : vector<3xf32>
    %42 = vector.multi_reduction <maximumf>, %41, %cst_18 [1] : vector<3x3xf32> to vector<3xf32>
    %43 = vector.shape_cast %42 : vector<3xf32> to vector<3x1xf32>
    %44 = vector.broadcast %43 : vector<3x1xf32> to vector<3x3xf32>
    %45 = arith.subf %41, %44 : vector<3x3xf32>
    %46 = math.exp %45 : vector<3x3xf32>
    %cst_19 = arith.constant dense<0.000000e+00> : vector<3xf32>
    %47 = vector.multi_reduction <add>, %46, %cst_19 [1] : vector<3x3xf32> to vector<3xf32>
    %48 = vector.shape_cast %47 : vector<3xf32> to vector<3x1xf32>
    %49 = tpu.reciprocal %48 {approx = true} : vector<3x1xf32> -> vector<3x1xf32>
    %50 = vector.broadcast %49 : vector<3x1xf32> to vector<3x3xf32>
    %51 = arith.mulf %46, %50 : vector<3x3xf32>
    %52 = arith.truncf %51 : vector<3x3xf32> to vector<3x3xbf16>
    %53 = vector.extract_strided_slice %7 {offsets = [0, 32], sizes = [3, 32], strides = [1, 1]} : vector<3x128xf32> to vector<3x32xf32>
    %54 = arith.truncf %53 : vector<3x32xf32> to vector<3x32xbf16>
    %cst_20 = arith.constant dense<0.000000e+00> : vector<3x32xf32>
    %55 = tpu.matmul %52, %54, %cst_20 {dimension_numbers = #tpu.dot_dimension_numbers<[1], [0], [0], [1], [0, 0, 1, 1], [], []>} : vector<3x3xbf16>, vector<3x32xbf16>, vector<3x32xf32> -> vector<3x32xf32>
    %56 = arith.addf %32, %51 : vector<3x3xf32>
    %57 = vector.extract_strided_slice %3 {offsets = [0, 64], sizes = [3, 32], strides = [1, 1]} : vector<3x128xf32> to vector<3x32xf32>
    %58 = arith.truncf %57 : vector<3x32xf32> to vector<3x32xbf16>
    %59 = vector.extract_strided_slice %5 {offsets = [0, 64], sizes = [3, 32], strides = [1, 1]} : vector<3x128xf32> to vector<3x32xf32>
    %60 = arith.truncf %59 : vector<3x32xf32> to vector<3x32xbf16>
    %cst_21 = arith.constant dense<0.000000e+00> : vector<3x3xf32>
    %61 = tpu.matmul %58, %60, %cst_21 {dimension_numbers = #tpu.dot_dimension_numbers<[1], [1], [0], [0], [0, 0, 1, 0], [], []>} : vector<3x32xbf16>, vector<3x32xbf16>, vector<3x3xf32> -> vector<3x3xf32>
    %cst_22 = arith.constant 0.176776692 : f32
    %62 = vector.broadcast %cst_22 : f32 to vector<3x3xf32>
    %63 = arith.mulf %61, %62 : vector<3x3xf32>
    %64 = vector.broadcast %1 : vector<1x3xf32> to vector<3x3xf32>
    %65 = arith.addf %63, %64 : vector<3x3xf32>
    %cst_23 = arith.constant dense<0xFF800000> : vector<3xf32>
    %66 = vector.multi_reduction <maximumf>, %65, %cst_23 [1] : vector<3x3xf32> to vector<3xf32>
    %67 = vector.shape_cast %66 : vector<3xf32> to vector<3x1xf32>
    %68 = vector.broadcast %67 : vector<3x1xf32> to vector<3x3xf32>
    %69 = arith.subf %65, %68 : vector<3x3xf32>
    %70 = math.exp %69 : vector<3x3xf32>
    %cst_24 = arith.constant dense<0.000000e+00> : vector<3xf32>
    %71 = vector.multi_reduction <add>, %70, %cst_24 [1] : vector<3x3xf32> to vector<3xf32>
    %72 = vector.shape_cast %71 : vector<3xf32> to vector<3x1xf32>
    %73 = tpu.reciprocal %72 {approx = true} : vector<3x1xf32> -> vector<3x1xf32>
    %74 = vector.broadcast %73 : vector<3x1xf32> to vector<3x3xf32>
    %75 = arith.mulf %70, %74 : vector<3x3xf32>
    %76 = arith.truncf %75 : vector<3x3xf32> to vector<3x3xbf16>
    %77 = vector.extract_strided_slice %7 {offsets = [0, 64], sizes = [3, 32], strides = [1, 1]} : vector<3x128xf32> to vector<3x32xf32>
    %78 = arith.truncf %77 : vector<3x32xf32> to vector<3x32xbf16>
    %cst_25 = arith.constant dense<0.000000e+00> : vector<3x32xf32>
    %79 = tpu.matmul %76, %78, %cst_25 {dimension_numbers = #tpu.dot_dimension_numbers<[1], [0], [0], [1], [0, 0, 1, 1], [], []>} : vector<3x3xbf16>, vector<3x32xbf16>, vector<3x32xf32> -> vector<3x32xf32>
    %80 = arith.addf %56, %75 : vector<3x3xf32>
    %81 = vector.extract_strided_slice %3 {offsets = [0, 96], sizes = [3, 32], strides = [1, 1]} : vector<3x128xf32> to vector<3x32xf32>
    %82 = arith.truncf %81 : vector<3x32xf32> to vector<3x32xbf16>
    %83 = vector.extract_strided_slice %5 {offsets = [0, 96], sizes = [3, 32], strides = [1, 1]} : vector<3x128xf32> to vector<3x32xf32>
    %84 = arith.truncf %83 : vector<3x32xf32> to vector<3x32xbf16>
    %cst_26 = arith.constant dense<0.000000e+00> : vector<3x3xf32>
    %85 = tpu.matmul %82, %84, %cst_26 {dimension_numbers = #tpu.dot_dimension_numbers<[1], [1], [0], [0], [0, 0, 1, 0], [], []>} : vector<3x32xbf16>, vector<3x32xbf16>, vector<3x3xf32> -> vector<3x3xf32>
    %cst_27 = arith.constant 0.176776692 : f32
    %86 = vector.broadcast %cst_27 : f32 to vector<3x3xf32>
    %87 = arith.mulf %85, %86 : vector<3x3xf32>
    %88 = vector.broadcast %1 : vector<1x3xf32> to vector<3x3xf32>
    %89 = arith.addf %87, %88 : vector<3x3xf32>
    %cst_28 = arith.constant dense<0xFF800000> : vector<3xf32>
    %90 = vector.multi_reduction <maximumf>, %89, %cst_28 [1] : vector<3x3xf32> to vector<3xf32>
    %91 = vector.shape_cast %90 : vector<3xf32> to vector<3x1xf32>
    %92 = vector.broadcast %91 : vector<3x1xf32> to vector<3x3xf32>
    %93 = arith.subf %89, %92 : vector<3x3xf32>
    %94 = math.exp %93 : vector<3x3xf32>
    %cst_29 = arith.constant dense<0.000000e+00> : vector<3xf32>
    %95 = vector.multi_reduction <add>, %94, %cst_29 [1] : vector<3x3xf32> to vector<3xf32>
    %96 = vector.shape_cast %95 : vector<3xf32> to vector<3x1xf32>
    %97 = tpu.reciprocal %96 {approx = true} : vector<3x1xf32> -> vector<3x1xf32>
    %98 = vector.broadcast %97 : vector<3x1xf32> to vector<3x3xf32>
    %99 = arith.mulf %94, %98 : vector<3x3xf32>
    %100 = arith.truncf %99 : vector<3x3xf32> to vector<3x3xbf16>
    %101 = vector.extract_strided_slice %7 {offsets = [0, 96], sizes = [3, 32], strides = [1, 1]} : vector<3x128xf32> to vector<3x32xf32>
    %102 = arith.truncf %101 : vector<3x32xf32> to vector<3x32xbf16>
    %cst_30 = arith.constant dense<0.000000e+00> : vector<3x32xf32>
    %103 = tpu.matmul %100, %102, %cst_30 {dimension_numbers = #tpu.dot_dimension_numbers<[1], [0], [0], [1], [0, 0, 1, 1], [], []>} : vector<3x3xbf16>, vector<3x32xbf16>, vector<3x32xf32> -> vector<3x32xf32>
    %104 = arith.addf %80, %99 : vector<3x3xf32>
    %105 = tpu.concatenate %31, %55, %79, %103 in 1 : vector<3x32xf32>, vector<3x32xf32>, vector<3x32xf32>, vector<3x32xf32> -> vector<3x128xf32>
    %c0_31 = arith.constant 0 : index
    %c0_32 = arith.constant 0 : index
    %c0_33 = arith.constant 0 : index
    %106 = vector.load %arg5[%c0_31, %c0_32, %c0_33] : memref<1x3x128xf32, #tpu.memory_space<vmem>>, vector<1x3x128xf32>
    %107 = vector.shape_cast %106 : vector<1x3x128xf32> to vector<3x128xf32>
    %108 = vector.shape_cast %105 : vector<3x128xf32> to vector<1x3x128xf32>
    tpu.vector_store %arg5[%c0_31, %c0_32, %c0_33], %108 {strides = array<i32>} : memref<1x3x128xf32, #tpu.memory_space<vmem>>, vector<1x3x128xf32>,
    %cst_34 = arith.constant 2.500000e-01 : f32
    %109 = vector.broadcast %cst_34 : f32 to vector<3x3xf32>
    %110 = arith.mulf %104, %109 : vector<3x3xf32>
    %c0_35 = arith.constant 0 : index
    %c0_36 = arith.constant 0 : index
    %c0_37 = arith.constant 0 : index
    %111 = vector.load %arg6[%c0_35, %c0_36, %c0_37] : memref<1x3x3xf32, #tpu.memory_space<vmem>>, vector<1x3x3xf32>
    %112 = vector.shape_cast %111 : vector<1x3x3xf32> to vector<3x3xf32>
    %113 = vector.shape_cast %110 : vector<3x3xf32> to vector<1x3x3xf32>
    tpu.vector_store %arg6[%c0_35, %c0_36, %c0_37], %113 {strides = array<i32>} : memref<1x3x3xf32, #tpu.memory_space<vmem>>, vector<1x3x3xf32>,
    return
  }
  func.func @transform_0(%arg0: i32) -> (i32, i32, i32) {
    %c0_i32 = arith.constant 0 : i32
    %c0_i32_0 = arith.constant 0 : i32
    %c0_i32_1 = arith.constant 0 : i32
    return %arg0, %c0_i32, %c0_i32_0 : i32, i32, i32
  }
  func.func @transform_1(%arg0: i32) -> (i32, i32, i32) {
    %c0_i32 = arith.constant 0 : i32
    %c0_i32_0 = arith.constant 0 : i32
    %c0_i32_1 = arith.constant 0 : i32
    return %arg0, %c0_i32, %c0_i32_0 : i32, i32, i32
  }
  func.func @transform_2(%arg0: i32) -> (i32, i32, i32) {
    %c0_i32 = arith.constant 0 : i32
    %c0_i32_0 = arith.constant 0 : i32
    %c0_i32_1 = arith.constant 0 : i32
    return %arg0, %c0_i32, %c0_i32_0 : i32, i32, i32
  }
  func.func @transform_3(%arg0: i32) -> (i32, i32, i32) {
    %c0_i32 = arith.constant 0 : i32
    %c0_i32_0 = arith.constant 0 : i32
    %c0_i32_1 = arith.constant 0 : i32
    return %arg0, %c0_i32, %c0_i32_0 : i32, i32, i32
  }
  func.func @transform_4(%arg0: i32) -> (i32, i32, i32) {
    %c0_i32 = arith.constant 0 : i32
    %c0_i32_0 = arith.constant 0 : i32
    %c0_i32_1 = arith.constant 0 : i32
    return %arg0, %c0_i32, %c0_i32_0 : i32, i32, i32
  }
  func.func @transform_5(%arg0: i32) -> (i32, i32, i32) {
    %c0_i32 = arith.constant 0 : i32
    %c0_i32_0 = arith.constant 0 : i32
    %c0_i32_1 = arith.constant 0 : i32
    return %arg0, %c0_i32, %c0_i32_0 : i32, i32, i32
  }
}

module attributes {stable_mosaic.version = 11 : i64} {
  func.func @kernel(%arg0: i32, %arg1: i32, %arg2: i32, %arg3: memref<16x128xf32, #tpu.memory_space<vmem>>, %arg4: memref<128x128xbf16, #tpu.memory_space<vmem>>, %arg5: memref<1x128xf32, #tpu.memory_space<vmem>>, %arg6: memref<16x128xf32, #tpu.memory_space<vmem>>, %arg7: memref<1x128xf32, #tpu.memory_space<vmem>>, %arg8: memref<1x128xf32, #tpu.memory_space<vmem>>, %arg9: memref<16x128xf32, #tpu.memory_space<vmem>>, %arg10: memref<16x128xf32, #tpu.memory_space<vmem>>) attributes {dimension_semantics = [#tpu.dimension_semantics<parallel>, #tpu.dimension_semantics<parallel>, #tpu.dimension_semantics<arbitrary>], iteration_bounds = array<i64: 1, 1, 1>, scalar_prefetch = 0 : i64, scratch_operands = 1 : i64, tpu.core_type = #tpu.core_type<tc>, window_params = [{transform_indices = @transform_0, window_bounds = array<i64: 16, 128>}, {transform_indices = @transform_1, window_bounds = array<i64: 128, 128>}, {transform_indices = @transform_2, window_bounds = array<i64: 1, 128>}, {transform_indices = @transform_3, window_bounds = array<i64: 16, 128>}, {transform_indices = @transform_4, window_bounds = array<i64: 1, 128>}, {transform_indices = @transform_5, window_bounds = array<i64: 1, 128>}, {transform_indices = @transform_6, window_bounds = array<i64: 16, 128>}]} {
    %c0_i32 = arith.constant 0 : i32
    %0 = arith.cmpi eq, %arg2, %c0_i32 : i32
    %1 = arith.extui %0 : i1 to i32
    %c0_i32_0 = arith.constant 0 : i32
    %2 = arith.cmpi ne, %1, %c0_i32_0 : i32
    scf.if %2 {
      %cst_10 = arith.constant 0.000000e+00 : f32
      %13 = vector.broadcast %cst_10 : f32 to vector<16x128xf32>
      %c0_11 = arith.constant 0 : index
      %c0_12 = arith.constant 0 : index
      %14 = vector.load %arg10[%c0_11, %c0_12] : memref<16x128xf32, #tpu.memory_space<vmem>>, vector<16x128xf32>
      tpu.vector_store %arg10[%c0_11, %c0_12], %13 {strides = array<i32>} : memref<16x128xf32, #tpu.memory_space<vmem>>, vector<16x128xf32>,
    } else {
    }
    %c0 = arith.constant 0 : index
    %c0_1 = arith.constant 0 : index
    %3 = vector.load %arg10[%c0, %c0_1] : memref<16x128xf32, #tpu.memory_space<vmem>>, vector<16x128xf32>
    %c0_2 = arith.constant 0 : index
    %c0_3 = arith.constant 0 : index
    %4 = vector.load %arg3[%c0_2, %c0_3] : memref<16x128xf32, #tpu.memory_space<vmem>>, vector<16x128xf32>
    %5 = arith.truncf %4 : vector<16x128xf32> to vector<16x128xbf16>
    %c0_4 = arith.constant 0 : index
    %c0_5 = arith.constant 0 : index
    %6 = vector.load %arg4[%c0_4, %c0_5] : memref<128x128xbf16, #tpu.memory_space<vmem>>, vector<128x128xbf16>
    %cst = arith.constant dense<0.000000e+00> : vector<16x128xf32>
    %7 = tpu.matmul %5, %6, %cst {dimension_numbers = #tpu.dot_dimension_numbers<[1], [0], [0], [1], [0, 0, 1, 1], [], []>} : vector<16x128xbf16>, vector<128x128xbf16>, vector<16x128xf32> -> vector<16x128xf32>
    %8 = arith.addf %3, %7 : vector<16x128xf32>
    %c0_6 = arith.constant 0 : index
    %c0_7 = arith.constant 0 : index
    %9 = vector.load %arg10[%c0_6, %c0_7] : memref<16x128xf32, #tpu.memory_space<vmem>>, vector<16x128xf32>
    tpu.vector_store %arg10[%c0_6, %c0_7], %8 {strides = array<i32>} : memref<16x128xf32, #tpu.memory_space<vmem>>, vector<16x128xf32>,
    %c0_i32_8 = arith.constant 0 : i32
    %10 = arith.cmpi eq, %arg2, %c0_i32_8 : i32
    %11 = arith.extui %10 : i1 to i32
    %c0_i32_9 = arith.constant 0 : i32
    %12 = arith.cmpi ne, %11, %c0_i32_9 : i32
    scf.if %12 {
      %c0_10 = arith.constant 0 : index
      %c0_11 = arith.constant 0 : index
      %13 = vector.load %arg10[%c0_10, %c0_11] : memref<16x128xf32, #tpu.memory_space<vmem>>, vector<16x128xf32>
      %c0_12 = arith.constant 0 : index
      %c0_13 = arith.constant 0 : index
      %14 = vector.load %arg5[%c0_12, %c0_13] : memref<1x128xf32, #tpu.memory_space<vmem>>, vector<1x128xf32>
      %15 = vector.broadcast %14 : vector<1x128xf32> to vector<16x128xf32>
      %16 = arith.addf %13, %15 : vector<16x128xf32>
      %c0_14 = arith.constant 0 : index
      %c0_15 = arith.constant 0 : index
      %17 = vector.load %arg6[%c0_14, %c0_15] : memref<16x128xf32, #tpu.memory_space<vmem>>, vector<16x128xf32>
      %18 = arith.addf %16, %17 : vector<16x128xf32>
      %cst_16 = arith.constant dense<0.000000e+00> : vector<16xf32>
      %19 = vector.multi_reduction <add>, %18, %cst_16 [1] : vector<16x128xf32> to vector<16xf32>
      %20 = vector.shape_cast %19 : vector<16xf32> to vector<16x1xf32>
      %cst_17 = arith.constant 7.812500e-03 : f32
      %21 = vector.broadcast %cst_17 : f32 to vector<16x1xf32>
      %22 = arith.mulf %20, %21 : vector<16x1xf32>
      %23 = vector.broadcast %22 : vector<16x1xf32> to vector<16x128xf32>
      %24 = arith.subf %18, %23 : vector<16x128xf32>
      %25 = arith.mulf %24, %24 : vector<16x128xf32>
      %cst_18 = arith.constant dense<0.000000e+00> : vector<16xf32>
      %26 = vector.multi_reduction <add>, %25, %cst_18 [1] : vector<16x128xf32> to vector<16xf32>
      %27 = vector.shape_cast %26 : vector<16xf32> to vector<16x1xf32>
      %cst_19 = arith.constant 7.812500e-03 : f32
      %28 = vector.broadcast %cst_19 : f32 to vector<16x1xf32>
      %29 = arith.mulf %27, %28 : vector<16x1xf32>
      %cst_20 = arith.constant 9.99999974E-6 : f32
      %30 = vector.broadcast %cst_20 : f32 to vector<16x1xf32>
      %31 = arith.addf %29, %30 : vector<16x1xf32>
      %32 = math.rsqrt %31 : vector<16x1xf32>
      %33 = vector.broadcast %32 : vector<16x1xf32> to vector<16x128xf32>
      %34 = arith.mulf %24, %33 : vector<16x128xf32>
      %c0_21 = arith.constant 0 : index
      %c0_22 = arith.constant 0 : index
      %35 = vector.load %arg7[%c0_21, %c0_22] : memref<1x128xf32, #tpu.memory_space<vmem>>, vector<1x128xf32>
      %36 = vector.broadcast %35 : vector<1x128xf32> to vector<16x128xf32>
      %37 = arith.mulf %34, %36 : vector<16x128xf32>
      %c0_23 = arith.constant 0 : index
      %c0_24 = arith.constant 0 : index
      %38 = vector.load %arg8[%c0_23, %c0_24] : memref<1x128xf32, #tpu.memory_space<vmem>>, vector<1x128xf32>
      %39 = vector.broadcast %38 : vector<1x128xf32> to vector<16x128xf32>
      %40 = arith.addf %37, %39 : vector<16x128xf32>
      %c0_25 = arith.constant 0 : index
      %c0_26 = arith.constant 0 : index
      %41 = vector.load %arg9[%c0_25, %c0_26] : memref<16x128xf32, #tpu.memory_space<vmem>>, vector<16x128xf32>
      tpu.vector_store %arg9[%c0_25, %c0_26], %40 {strides = array<i32>} : memref<16x128xf32, #tpu.memory_space<vmem>>, vector<16x128xf32>,
    } else {
    }
    return
  }
  func.func @transform_0(%arg0: i32, %arg1: i32, %arg2: i32) -> (i32, i32) {
    %c0_i32 = arith.constant 0 : i32
    return %arg0, %arg2 : i32, i32
  }
  func.func @transform_1(%arg0: i32, %arg1: i32, %arg2: i32) -> (i32, i32) {
    %c0_i32 = arith.constant 0 : i32
    return %arg2, %arg1 : i32, i32
  }
  func.func @transform_2(%arg0: i32, %arg1: i32, %arg2: i32) -> (i32, i32) {
    %c0_i32 = arith.constant 0 : i32
    %c0_i32_0 = arith.constant 0 : i32
    return %c0_i32, %arg1 : i32, i32
  }
  func.func @transform_3(%arg0: i32, %arg1: i32, %arg2: i32) -> (i32, i32) {
    %c0_i32 = arith.constant 0 : i32
    return %arg0, %arg1 : i32, i32
  }
  func.func @transform_4(%arg0: i32, %arg1: i32, %arg2: i32) -> (i32, i32) {
    %c0_i32 = arith.constant 0 : i32
    %c0_i32_0 = arith.constant 0 : i32
    return %c0_i32, %arg1 : i32, i32
  }
  func.func @transform_5(%arg0: i32, %arg1: i32, %arg2: i32) -> (i32, i32) {
    %c0_i32 = arith.constant 0 : i32
    %c0_i32_0 = arith.constant 0 : i32
    return %c0_i32, %arg1 : i32, i32
  }
  func.func @transform_6(%arg0: i32, %arg1: i32, %arg2: i32) -> (i32, i32) {
    %c0_i32 = arith.constant 0 : i32
    return %arg0, %arg1 : i32, i32
  }
}

module attributes {stable_mosaic.version = 11 : i64} {
  func.func @kernel(%arg0: i32, %arg1: i32, %arg2: i32, %arg3: memref<16x128xf32, #tpu.memory_space<vmem>>, %arg4: memref<128x256xbf16, #tpu.memory_space<vmem>>, %arg5: memref<1x256xf32, #tpu.memory_space<vmem>>, %arg6: memref<16x256xf32, #tpu.memory_space<vmem>>, %arg7: memref<16x256xf32, #tpu.memory_space<vmem>>) attributes {dimension_semantics = [#tpu.dimension_semantics<parallel>, #tpu.dimension_semantics<parallel>, #tpu.dimension_semantics<arbitrary>], iteration_bounds = array<i64: 1, 1, 1>, scalar_prefetch = 0 : i64, scratch_operands = 1 : i64, tpu.core_type = #tpu.core_type<tc>, window_params = [{transform_indices = @transform_0, window_bounds = array<i64: 16, 128>}, {transform_indices = @transform_1, window_bounds = array<i64: 128, 256>}, {transform_indices = @transform_2, window_bounds = array<i64: 1, 256>}, {transform_indices = @transform_3, window_bounds = array<i64: 16, 256>}]} {
    %c0_i32 = arith.constant 0 : i32
    %0 = arith.cmpi eq, %arg2, %c0_i32 : i32
    %1 = arith.extui %0 : i1 to i32
    %c0_i32_0 = arith.constant 0 : i32
    %2 = arith.cmpi ne, %1, %c0_i32_0 : i32
    scf.if %2 {
      %cst_10 = arith.constant 0.000000e+00 : f32
      %13 = vector.broadcast %cst_10 : f32 to vector<16x256xf32>
      %c0_11 = arith.constant 0 : index
      %c0_12 = arith.constant 0 : index
      %14 = vector.load %arg7[%c0_11, %c0_12] : memref<16x256xf32, #tpu.memory_space<vmem>>, vector<16x256xf32>
      tpu.vector_store %arg7[%c0_11, %c0_12], %13 {strides = array<i32>} : memref<16x256xf32, #tpu.memory_space<vmem>>, vector<16x256xf32>,
    } else {
    }
    %c0 = arith.constant 0 : index
    %c0_1 = arith.constant 0 : index
    %3 = vector.load %arg7[%c0, %c0_1] : memref<16x256xf32, #tpu.memory_space<vmem>>, vector<16x256xf32>
    %c0_2 = arith.constant 0 : index
    %c0_3 = arith.constant 0 : index
    %4 = vector.load %arg3[%c0_2, %c0_3] : memref<16x128xf32, #tpu.memory_space<vmem>>, vector<16x128xf32>
    %5 = arith.truncf %4 : vector<16x128xf32> to vector<16x128xbf16>
    %c0_4 = arith.constant 0 : index
    %c0_5 = arith.constant 0 : index
    %6 = vector.load %arg4[%c0_4, %c0_5] : memref<128x256xbf16, #tpu.memory_space<vmem>>, vector<128x256xbf16>
    %cst = arith.constant dense<0.000000e+00> : vector<16x256xf32>
    %7 = tpu.matmul %5, %6, %cst {dimension_numbers = #tpu.dot_dimension_numbers<[1], [0], [0], [1], [0, 0, 1, 1], [], []>} : vector<16x128xbf16>, vector<128x256xbf16>, vector<16x256xf32> -> vector<16x256xf32>
    %8 = arith.addf %3, %7 : vector<16x256xf32>
    %c0_6 = arith.constant 0 : index
    %c0_7 = arith.constant 0 : index
    %9 = vector.load %arg7[%c0_6, %c0_7] : memref<16x256xf32, #tpu.memory_space<vmem>>, vector<16x256xf32>
    tpu.vector_store %arg7[%c0_6, %c0_7], %8 {strides = array<i32>} : memref<16x256xf32, #tpu.memory_space<vmem>>, vector<16x256xf32>,
    %c0_i32_8 = arith.constant 0 : i32
    %10 = arith.cmpi eq, %arg2, %c0_i32_8 : i32
    %11 = arith.extui %10 : i1 to i32
    %c0_i32_9 = arith.constant 0 : i32
    %12 = arith.cmpi ne, %11, %c0_i32_9 : i32
    scf.if %12 {
      %c0_10 = arith.constant 0 : index
      %c0_11 = arith.constant 0 : index
      %13 = vector.load %arg7[%c0_10, %c0_11] : memref<16x256xf32, #tpu.memory_space<vmem>>, vector<16x256xf32>
      %c0_12 = arith.constant 0 : index
      %c0_13 = arith.constant 0 : index
      %14 = vector.load %arg5[%c0_12, %c0_13] : memref<1x256xf32, #tpu.memory_space<vmem>>, vector<1x256xf32>
      %15 = vector.broadcast %14 : vector<1x256xf32> to vector<16x256xf32>
      %16 = arith.addf %13, %15 : vector<16x256xf32>
      %cst_14 = arith.constant 0.000000e+00 : f32
      %17 = vector.broadcast %cst_14 : f32 to vector<16x256xf32>
      %18 = arith.maximumf %16, %17 : vector<16x256xf32>
      %c0_15 = arith.constant 0 : index
      %c0_16 = arith.constant 0 : index
      %19 = vector.load %arg6[%c0_15, %c0_16] : memref<16x256xf32, #tpu.memory_space<vmem>>, vector<16x256xf32>
      tpu.vector_store %arg6[%c0_15, %c0_16], %18 {strides = array<i32>} : memref<16x256xf32, #tpu.memory_space<vmem>>, vector<16x256xf32>,
    } else {
    }
    return
  }
  func.func @transform_0(%arg0: i32, %arg1: i32, %arg2: i32) -> (i32, i32) {
    %c0_i32 = arith.constant 0 : i32
    return %arg0, %arg2 : i32, i32
  }
  func.func @transform_1(%arg0: i32, %arg1: i32, %arg2: i32) -> (i32, i32) {
    %c0_i32 = arith.constant 0 : i32
    return %arg2, %arg1 : i32, i32
  }
  func.func @transform_2(%arg0: i32, %arg1: i32, %arg2: i32) -> (i32, i32) {
    %c0_i32 = arith.constant 0 : i32
    %c0_i32_0 = arith.constant 0 : i32
    return %c0_i32, %arg1 : i32, i32
  }
  func.func @transform_3(%arg0: i32, %arg1: i32, %arg2: i32) -> (i32, i32) {
    %c0_i32 = arith.constant 0 : i32
    return %arg0, %arg1 : i32, i32
  }
}

module attributes {stable_mosaic.version = 11 : i64} {
  func.func @kernel(%arg0: i32, %arg1: i32, %arg2: i32, %arg3: memref<16x256xf32, #tpu.memory_space<vmem>>, %arg4: memref<256x128xbf16, #tpu.memory_space<vmem>>, %arg5: memref<1x128xf32, #tpu.memory_space<vmem>>, %arg6: memref<16x128xf32, #tpu.memory_space<vmem>>, %arg7: memref<1x128xf32, #tpu.memory_space<vmem>>, %arg8: memref<1x128xf32, #tpu.memory_space<vmem>>, %arg9: memref<16x128xf32, #tpu.memory_space<vmem>>, %arg10: memref<16x128xf32, #tpu.memory_space<vmem>>) attributes {dimension_semantics = [#tpu.dimension_semantics<parallel>, #tpu.dimension_semantics<parallel>, #tpu.dimension_semantics<arbitrary>], iteration_bounds = array<i64: 1, 1, 1>, scalar_prefetch = 0 : i64, scratch_operands = 1 : i64, tpu.core_type = #tpu.core_type<tc>, window_params = [{transform_indices = @transform_0, window_bounds = array<i64: 16, 256>}, {transform_indices = @transform_1, window_bounds = array<i64: 256, 128>}, {transform_indices = @transform_2, window_bounds = array<i64: 1, 128>}, {transform_indices = @transform_3, window_bounds = array<i64: 16, 128>}, {transform_indices = @transform_4, window_bounds = array<i64: 1, 128>}, {transform_indices = @transform_5, window_bounds = array<i64: 1, 128>}, {transform_indices = @transform_6, window_bounds = array<i64: 16, 128>}]} {
    %c0_i32 = arith.constant 0 : i32
    %0 = arith.cmpi eq, %arg2, %c0_i32 : i32
    %1 = arith.extui %0 : i1 to i32
    %c0_i32_0 = arith.constant 0 : i32
    %2 = arith.cmpi ne, %1, %c0_i32_0 : i32
    scf.if %2 {
      %cst_10 = arith.constant 0.000000e+00 : f32
      %13 = vector.broadcast %cst_10 : f32 to vector<16x128xf32>
      %c0_11 = arith.constant 0 : index
      %c0_12 = arith.constant 0 : index
      %14 = vector.load %arg10[%c0_11, %c0_12] : memref<16x128xf32, #tpu.memory_space<vmem>>, vector<16x128xf32>
      tpu.vector_store %arg10[%c0_11, %c0_12], %13 {strides = array<i32>} : memref<16x128xf32, #tpu.memory_space<vmem>>, vector<16x128xf32>,
    } else {
    }
    %c0 = arith.constant 0 : index
    %c0_1 = arith.constant 0 : index
    %3 = vector.load %arg10[%c0, %c0_1] : memref<16x128xf32, #tpu.memory_space<vmem>>, vector<16x128xf32>
    %c0_2 = arith.constant 0 : index
    %c0_3 = arith.constant 0 : index
    %4 = vector.load %arg3[%c0_2, %c0_3] : memref<16x256xf32, #tpu.memory_space<vmem>>, vector<16x256xf32>
    %5 = arith.truncf %4 : vector<16x256xf32> to vector<16x256xbf16>
    %c0_4 = arith.constant 0 : index
    %c0_5 = arith.constant 0 : index
    %6 = vector.load %arg4[%c0_4, %c0_5] : memref<256x128xbf16, #tpu.memory_space<vmem>>, vector<256x128xbf16>
    %cst = arith.constant dense<0.000000e+00> : vector<16x128xf32>
    %7 = tpu.matmul %5, %6, %cst {dimension_numbers = #tpu.dot_dimension_numbers<[1], [0], [0], [1], [0, 0, 1, 1], [], []>} : vector<16x256xbf16>, vector<256x128xbf16>, vector<16x128xf32> -> vector<16x128xf32>
    %8 = arith.addf %3, %7 : vector<16x128xf32>
    %c0_6 = arith.constant 0 : index
    %c0_7 = arith.constant 0 : index
    %9 = vector.load %arg10[%c0_6, %c0_7] : memref<16x128xf32, #tpu.memory_space<vmem>>, vector<16x128xf32>
    tpu.vector_store %arg10[%c0_6, %c0_7], %8 {strides = array<i32>} : memref<16x128xf32, #tpu.memory_space<vmem>>, vector<16x128xf32>,
    %c0_i32_8 = arith.constant 0 : i32
    %10 = arith.cmpi eq, %arg2, %c0_i32_8 : i32
    %11 = arith.extui %10 : i1 to i32
    %c0_i32_9 = arith.constant 0 : i32
    %12 = arith.cmpi ne, %11, %c0_i32_9 : i32
    scf.if %12 {
      %c0_10 = arith.constant 0 : index
      %c0_11 = arith.constant 0 : index
      %13 = vector.load %arg10[%c0_10, %c0_11] : memref<16x128xf32, #tpu.memory_space<vmem>>, vector<16x128xf32>
      %c0_12 = arith.constant 0 : index
      %c0_13 = arith.constant 0 : index
      %14 = vector.load %arg5[%c0_12, %c0_13] : memref<1x128xf32, #tpu.memory_space<vmem>>, vector<1x128xf32>
      %15 = vector.broadcast %14 : vector<1x128xf32> to vector<16x128xf32>
      %16 = arith.addf %13, %15 : vector<16x128xf32>
      %c0_14 = arith.constant 0 : index
      %c0_15 = arith.constant 0 : index
      %17 = vector.load %arg6[%c0_14, %c0_15] : memref<16x128xf32, #tpu.memory_space<vmem>>, vector<16x128xf32>
      %18 = arith.addf %16, %17 : vector<16x128xf32>
      %cst_16 = arith.constant dense<0.000000e+00> : vector<16xf32>
      %19 = vector.multi_reduction <add>, %18, %cst_16 [1] : vector<16x128xf32> to vector<16xf32>
      %20 = vector.shape_cast %19 : vector<16xf32> to vector<16x1xf32>
      %cst_17 = arith.constant 7.812500e-03 : f32
      %21 = vector.broadcast %cst_17 : f32 to vector<16x1xf32>
      %22 = arith.mulf %20, %21 : vector<16x1xf32>
      %23 = vector.broadcast %22 : vector<16x1xf32> to vector<16x128xf32>
      %24 = arith.subf %18, %23 : vector<16x128xf32>
      %25 = arith.mulf %24, %24 : vector<16x128xf32>
      %cst_18 = arith.constant dense<0.000000e+00> : vector<16xf32>
      %26 = vector.multi_reduction <add>, %25, %cst_18 [1] : vector<16x128xf32> to vector<16xf32>
      %27 = vector.shape_cast %26 : vector<16xf32> to vector<16x1xf32>
      %cst_19 = arith.constant 7.812500e-03 : f32
      %28 = vector.broadcast %cst_19 : f32 to vector<16x1xf32>
      %29 = arith.mulf %27, %28 : vector<16x1xf32>
      %cst_20 = arith.constant 9.99999974E-6 : f32
      %30 = vector.broadcast %cst_20 : f32 to vector<16x1xf32>
      %31 = arith.addf %29, %30 : vector<16x1xf32>
      %32 = math.rsqrt %31 : vector<16x1xf32>
      %33 = vector.broadcast %32 : vector<16x1xf32> to vector<16x128xf32>
      %34 = arith.mulf %24, %33 : vector<16x128xf32>
      %c0_21 = arith.constant 0 : index
      %c0_22 = arith.constant 0 : index
      %35 = vector.load %arg7[%c0_21, %c0_22] : memref<1x128xf32, #tpu.memory_space<vmem>>, vector<1x128xf32>
      %36 = vector.broadcast %35 : vector<1x128xf32> to vector<16x128xf32>
      %37 = arith.mulf %34, %36 : vector<16x128xf32>
      %c0_23 = arith.constant 0 : index
      %c0_24 = arith.constant 0 : index
      %38 = vector.load %arg8[%c0_23, %c0_24] : memref<1x128xf32, #tpu.memory_space<vmem>>, vector<1x128xf32>
      %39 = vector.broadcast %38 : vector<1x128xf32> to vector<16x128xf32>
      %40 = arith.addf %37, %39 : vector<16x128xf32>
      %c0_25 = arith.constant 0 : index
      %c0_26 = arith.constant 0 : index
      %41 = vector.load %arg9[%c0_25, %c0_26] : memref<16x128xf32, #tpu.memory_space<vmem>>, vector<16x128xf32>
      tpu.vector_store %arg9[%c0_25, %c0_26], %40 {strides = array<i32>} : memref<16x128xf32, #tpu.memory_space<vmem>>, vector<16x128xf32>,
    } else {
    }
    return
  }
  func.func @transform_0(%arg0: i32, %arg1: i32, %arg2: i32) -> (i32, i32) {
    %c0_i32 = arith.constant 0 : i32
    return %arg0, %arg2 : i32, i32
  }
  func.func @transform_1(%arg0: i32, %arg1: i32, %arg2: i32) -> (i32, i32) {
    %c0_i32 = arith.constant 0 : i32
    return %arg2, %arg1 : i32, i32
  }
  func.func @transform_2(%arg0: i32, %arg1: i32, %arg2: i32) -> (i32, i32) {
    %c0_i32 = arith.constant 0 : i32
    %c0_i32_0 = arith.constant 0 : i32
    return %c0_i32, %arg1 : i32, i32
  }
  func.func @transform_3(%arg0: i32, %arg1: i32, %arg2: i32) -> (i32, i32) {
    %c0_i32 = arith.constant 0 : i32
    return %arg0, %arg1 : i32, i32
  }
  func.func @transform_4(%arg0: i32, %arg1: i32, %arg2: i32) -> (i32, i32) {
    %c0_i32 = arith.constant 0 : i32
    %c0_i32_0 = arith.constant 0 : i32
    return %c0_i32, %arg1 : i32, i32
  }
  func.func @transform_5(%arg0: i32, %arg1: i32, %arg2: i32) -> (i32, i32) {
    %c0_i32 = arith.constant 0 : i32
    %c0_i32_0 = arith.constant 0 : i32
    return %c0_i32, %arg1 : i32, i32
  }
  func.func @transform_6(%arg0: i32, %arg1: i32, %arg2: i32) -> (i32, i32) {
    %c0_i32 = arith.constant 0 : i32
    return %arg0, %arg1 : i32, i32
  }
}

module attributes {stable_mosaic.version = 11 : i64} {
  func.func @kernel(%arg0: i32, %arg1: i32, %arg2: i32, %arg3: memref<24x128xf32, #tpu.memory_space<vmem>>, %arg4: memref<128x128xbf16, #tpu.memory_space<vmem>>, %arg5: memref<1x128xf32, #tpu.memory_space<vmem>>, %arg6: memref<24x128xf32, #tpu.memory_space<vmem>>, %arg7: memref<24x128xf32, #tpu.memory_space<vmem>>) attributes {dimension_semantics = [#tpu.dimension_semantics<parallel>, #tpu.dimension_semantics<parallel>, #tpu.dimension_semantics<arbitrary>], iteration_bounds = array<i64: 1, 1, 1>, scalar_prefetch = 0 : i64, scratch_operands = 1 : i64, tpu.core_type = #tpu.core_type<tc>, window_params = [{transform_indices = @transform_0, window_bounds = array<i64: 24, 128>}, {transform_indices = @transform_1, window_bounds = array<i64: 128, 128>}, {transform_indices = @transform_2, window_bounds = array<i64: 1, 128>}, {transform_indices = @transform_3, window_bounds = array<i64: 24, 128>}]} {
    %c0_i32 = arith.constant 0 : i32
    %0 = arith.cmpi eq, %arg2, %c0_i32 : i32
    %1 = arith.extui %0 : i1 to i32
    %c0_i32_0 = arith.constant 0 : i32
    %2 = arith.cmpi ne, %1, %c0_i32_0 : i32
    scf.if %2 {
      %cst_10 = arith.constant 0.000000e+00 : f32
      %13 = vector.broadcast %cst_10 : f32 to vector<24x128xf32>
      %c0_11 = arith.constant 0 : index
      %c0_12 = arith.constant 0 : index
      %14 = vector.load %arg7[%c0_11, %c0_12] : memref<24x128xf32, #tpu.memory_space<vmem>>, vector<24x128xf32>
      tpu.vector_store %arg7[%c0_11, %c0_12], %13 {strides = array<i32>} : memref<24x128xf32, #tpu.memory_space<vmem>>, vector<24x128xf32>,
    } else {
    }
    %c0 = arith.constant 0 : index
    %c0_1 = arith.constant 0 : index
    %3 = vector.load %arg7[%c0, %c0_1] : memref<24x128xf32, #tpu.memory_space<vmem>>, vector<24x128xf32>
    %c0_2 = arith.constant 0 : index
    %c0_3 = arith.constant 0 : index
    %4 = vector.load %arg3[%c0_2, %c0_3] : memref<24x128xf32, #tpu.memory_space<vmem>>, vector<24x128xf32>
    %5 = arith.truncf %4 : vector<24x128xf32> to vector<24x128xbf16>
    %c0_4 = arith.constant 0 : index
    %c0_5 = arith.constant 0 : index
    %6 = vector.load %arg4[%c0_4, %c0_5] : memref<128x128xbf16, #tpu.memory_space<vmem>>, vector<128x128xbf16>
    %cst = arith.constant dense<0.000000e+00> : vector<24x128xf32>
    %7 = tpu.matmul %5, %6, %cst {dimension_numbers = #tpu.dot_dimension_numbers<[1], [0], [0], [1], [0, 0, 1, 1], [], []>} : vector<24x128xbf16>, vector<128x128xbf16>, vector<24x128xf32> -> vector<24x128xf32>
    %8 = arith.addf %3, %7 : vector<24x128xf32>
    %c0_6 = arith.constant 0 : index
    %c0_7 = arith.constant 0 : index
    %9 = vector.load %arg7[%c0_6, %c0_7] : memref<24x128xf32, #tpu.memory_space<vmem>>, vector<24x128xf32>
    tpu.vector_store %arg7[%c0_6, %c0_7], %8 {strides = array<i32>} : memref<24x128xf32, #tpu.memory_space<vmem>>, vector<24x128xf32>,
    %c0_i32_8 = arith.constant 0 : i32
    %10 = arith.cmpi eq, %arg2, %c0_i32_8 : i32
    %11 = arith.extui %10 : i1 to i32
    %c0_i32_9 = arith.constant 0 : i32
    %12 = arith.cmpi ne, %11, %c0_i32_9 : i32
    scf.if %12 {
      %c0_10 = arith.constant 0 : index
      %c0_11 = arith.constant 0 : index
      %13 = vector.load %arg7[%c0_10, %c0_11] : memref<24x128xf32, #tpu.memory_space<vmem>>, vector<24x128xf32>
      %c0_12 = arith.constant 0 : index
      %c0_13 = arith.constant 0 : index
      %14 = vector.load %arg5[%c0_12, %c0_13] : memref<1x128xf32, #tpu.memory_space<vmem>>, vector<1x128xf32>
      %15 = vector.broadcast %14 : vector<1x128xf32> to vector<24x128xf32>
      %16 = arith.addf %13, %15 : vector<24x128xf32>
      %c0_14 = arith.constant 0 : index
      %c0_15 = arith.constant 0 : index
      %17 = vector.load %arg6[%c0_14, %c0_15] : memref<24x128xf32, #tpu.memory_space<vmem>>, vector<24x128xf32>
      tpu.vector_store %arg6[%c0_14, %c0_15], %16 {strides = array<i32>} : memref<24x128xf32, #tpu.memory_space<vmem>>, vector<24x128xf32>,
    } else {
    }
    return
  }
  func.func @transform_0(%arg0: i32, %arg1: i32, %arg2: i32) -> (i32, i32) {
    %c0_i32 = arith.constant 0 : i32
    return %arg0, %arg2 : i32, i32
  }
  func.func @transform_1(%arg0: i32, %arg1: i32, %arg2: i32) -> (i32, i32) {
    %c0_i32 = arith.constant 0 : i32
    return %arg2, %arg1 : i32, i32
  }
  func.func @transform_2(%arg0: i32, %arg1: i32, %arg2: i32) -> (i32, i32) {
    %c0_i32 = arith.constant 0 : i32
    %c0_i32_0 = arith.constant 0 : i32
    return %c0_i32, %arg1 : i32, i32
  }
  func.func @transform_3(%arg0: i32, %arg1: i32, %arg2: i32) -> (i32, i32) {
    %c0_i32 = arith.constant 0 : i32
    return %arg0, %arg1 : i32, i32
  }
}

module attributes {stable_mosaic.version = 11 : i64} {
  func.func @kernel(%arg0: i32, %arg1: memref<1x1x6xf32, #tpu.memory_space<vmem>>, %arg2: memref<1x6x128xf32, #tpu.memory_space<vmem>>, %arg3: memref<1x6x128xf32, #tpu.memory_space<vmem>>, %arg4: memref<1x6x128xf32, #tpu.memory_space<vmem>>, %arg5: memref<1x6x128xf32, #tpu.memory_space<vmem>>, %arg6: memref<1x6x6xf32, #tpu.memory_space<vmem>>) attributes {dimension_semantics = [#tpu.dimension_semantics<parallel>], iteration_bounds = array<i64: 3>, scalar_prefetch = 0 : i64, scratch_operands = 0 : i64, tpu.core_type = #tpu.core_type<tc>, window_params = [{transform_indices = @transform_0, window_bounds = array<i64: 1, 1, 6>}, {transform_indices = @transform_1, window_bounds = array<i64: 1, 6, 128>}, {transform_indices = @transform_2, window_bounds = array<i64: 1, 6, 128>}, {transform_indices = @transform_3, window_bounds = array<i64: 1, 6, 128>}, {transform_indices = @transform_4, window_bounds = array<i64: 1, 6, 128>}, {transform_indices = @transform_5, window_bounds = array<i64: 1, 6, 6>}]} {
    %c0 = arith.constant 0 : index
    %c0_0 = arith.constant 0 : index
    %c0_1 = arith.constant 0 : index
    %0 = vector.load %arg1[%c0, %c0_0, %c0_1] : memref<1x1x6xf32, #tpu.memory_space<vmem>>, vector<1x1x6xf32>
    %1 = vector.shape_cast %0 : vector<1x1x6xf32> to vector<1x6xf32>
    %c0_2 = arith.constant 0 : index
    %c0_3 = arith.constant 0 : index
    %c0_4 = arith.constant 0 : index
    %2 = vector.load %arg2[%c0_2, %c0_3, %c0_4] : memref<1x6x128xf32, #tpu.memory_space<vmem>>, vector<1x6x128xf32>
    %3 = vector.shape_cast %2 : vector<1x6x128xf32> to vector<6x128xf32>
    %c0_5 = arith.constant 0 : index
    %c0_6 = arith.constant 0 : index
    %c0_7 = arith.constant 0 : index
    %4 = vector.load %arg3[%c0_5, %c0_6, %c0_7] : memref<1x6x128xf32, #tpu.memory_space<vmem>>, vector<1x6x128xf32>
    %5 = vector.shape_cast %4 : vector<1x6x128xf32> to vector<6x128xf32>
    %c0_8 = arith.constant 0 : index
    %c0_9 = arith.constant 0 : index
    %c0_10 = arith.constant 0 : index
    %6 = vector.load %arg4[%c0_8, %c0_9, %c0_10] : memref<1x6x128xf32, #tpu.memory_space<vmem>>, vector<1x6x128xf32>
    %7 = vector.shape_cast %6 : vector<1x6x128xf32> to vector<6x128xf32>
    %cst = arith.constant 0.000000e+00 : f32
    %8 = vector.broadcast %cst : f32 to vector<6x6xf32>
    %9 = vector.extract_strided_slice %3 {offsets = [0, 0], sizes = [6, 32], strides = [1, 1]} : vector<6x128xf32> to vector<6x32xf32>
    %10 = arith.truncf %9 : vector<6x32xf32> to vector<6x32xbf16>
    %11 = vector.extract_strided_slice %5 {offsets = [0, 0], sizes = [6, 32], strides = [1, 1]} : vector<6x128xf32> to vector<6x32xf32>
    %12 = arith.truncf %11 : vector<6x32xf32> to vector<6x32xbf16>
    %cst_11 = arith.constant dense<0.000000e+00> : vector<6x6xf32>
    %13 = tpu.matmul %10, %12, %cst_11 {dimension_numbers = #tpu.dot_dimension_numbers<[1], [1], [0], [0], [0, 0, 1, 0], [], []>} : vector<6x32xbf16>, vector<6x32xbf16>, vector<6x6xf32> -> vector<6x6xf32>
    %cst_12 = arith.constant 0.176776692 : f32
    %14 = vector.broadcast %cst_12 : f32 to vector<6x6xf32>
    %15 = arith.mulf %13, %14 : vector<6x6xf32>
    %16 = vector.broadcast %1 : vector<1x6xf32> to vector<6x6xf32>
    %17 = arith.addf %15, %16 : vector<6x6xf32>
    %cst_13 = arith.constant dense<0xFF800000> : vector<6xf32>
    %18 = vector.multi_reduction <maximumf>, %17, %cst_13 [1] : vector<6x6xf32> to vector<6xf32>
    %19 = vector.shape_cast %18 : vector<6xf32> to vector<6x1xf32>
    %20 = vector.broadcast %19 : vector<6x1xf32> to vector<6x6xf32>
    %21 = arith.subf %17, %20 : vector<6x6xf32>
    %22 = math.exp %21 : vector<6x6xf32>
    %cst_14 = arith.constant dense<0.000000e+00> : vector<6xf32>
    %23 = vector.multi_reduction <add>, %22, %cst_14 [1] : vector<6x6xf32> to vector<6xf32>
    %24 = vector.shape_cast %23 : vector<6xf32> to vector<6x1xf32>
    %25 = tpu.reciprocal %24 {approx = true} : vector<6x1xf32> -> vector<6x1xf32>
    %26 = vector.broadcast %25 : vector<6x1xf32> to vector<6x6xf32>
    %27 = arith.mulf %22, %26 : vector<6x6xf32>
    %28 = arith.truncf %27 : vector<6x6xf32> to vector<6x6xbf16>
    %29 = vector.extract_strided_slice %7 {offsets = [0, 0], sizes = [6, 32], strides = [1, 1]} : vector<6x128xf32> to vector<6x32xf32>
    %30 = arith.truncf %29 : vector<6x32xf32> to vector<6x32xbf16>
    %cst_15 = arith.constant dense<0.000000e+00> : vector<6x32xf32>
    %31 = tpu.matmul %28, %30, %cst_15 {dimension_numbers = #tpu.dot_dimension_numbers<[1], [0], [0], [1], [0, 0, 1, 1], [], []>} : vector<6x6xbf16>, vector<6x32xbf16>, vector<6x32xf32> -> vector<6x32xf32>
    %32 = arith.addf %8, %27 : vector<6x6xf32>
    %33 = vector.extract_strided_slice %3 {offsets = [0, 32], sizes = [6, 32], strides = [1, 1]} : vector<6x128xf32> to vector<6x32xf32>
    %34 = arith.truncf %33 : vector<6x32xf32> to vector<6x32xbf16>
    %35 = vector.extract_strided_slice %5 {offsets = [0, 32], sizes = [6, 32], strides = [1, 1]} : vector<6x128xf32> to vector<6x32xf32>
    %36 = arith.truncf %35 : vector<6x32xf32> to vector<6x32xbf16>
    %cst_16 = arith.constant dense<0.000000e+00> : vector<6x6xf32>
    %37 = tpu.matmul %34, %36, %cst_16 {dimension_numbers = #tpu.dot_dimension_numbers<[1], [1], [0], [0], [0, 0, 1, 0], [], []>} : vector<6x32xbf16>, vector<6x32xbf16>, vector<6x6xf32> -> vector<6x6xf32>
    %cst_17 = arith.constant 0.176776692 : f32
    %38 = vector.broadcast %cst_17 : f32 to vector<6x6xf32>
    %39 = arith.mulf %37, %38 : vector<6x6xf32>
    %40 = vector.broadcast %1 : vector<1x6xf32> to vector<6x6xf32>
    %41 = arith.addf %39, %40 : vector<6x6xf32>
    %cst_18 = arith.constant dense<0xFF800000> : vector<6xf32>
    %42 = vector.multi_reduction <maximumf>, %41, %cst_18 [1] : vector<6x6xf32> to vector<6xf32>
    %43 = vector.shape_cast %42 : vector<6xf32> to vector<6x1xf32>
    %44 = vector.broadcast %43 : vector<6x1xf32> to vector<6x6xf32>
    %45 = arith.subf %41, %44 : vector<6x6xf32>
    %46 = math.exp %45 : vector<6x6xf32>
    %cst_19 = arith.constant dense<0.000000e+00> : vector<6xf32>
    %47 = vector.multi_reduction <add>, %46, %cst_19 [1] : vector<6x6xf32> to vector<6xf32>
    %48 = vector.shape_cast %47 : vector<6xf32> to vector<6x1xf32>
    %49 = tpu.reciprocal %48 {approx = true} : vector<6x1xf32> -> vector<6x1xf32>
    %50 = vector.broadcast %49 : vector<6x1xf32> to vector<6x6xf32>
    %51 = arith.mulf %46, %50 : vector<6x6xf32>
    %52 = arith.truncf %51 : vector<6x6xf32> to vector<6x6xbf16>
    %53 = vector.extract_strided_slice %7 {offsets = [0, 32], sizes = [6, 32], strides = [1, 1]} : vector<6x128xf32> to vector<6x32xf32>
    %54 = arith.truncf %53 : vector<6x32xf32> to vector<6x32xbf16>
    %cst_20 = arith.constant dense<0.000000e+00> : vector<6x32xf32>
    %55 = tpu.matmul %52, %54, %cst_20 {dimension_numbers = #tpu.dot_dimension_numbers<[1], [0], [0], [1], [0, 0, 1, 1], [], []>} : vector<6x6xbf16>, vector<6x32xbf16>, vector<6x32xf32> -> vector<6x32xf32>
    %56 = arith.addf %32, %51 : vector<6x6xf32>
    %57 = vector.extract_strided_slice %3 {offsets = [0, 64], sizes = [6, 32], strides = [1, 1]} : vector<6x128xf32> to vector<6x32xf32>
    %58 = arith.truncf %57 : vector<6x32xf32> to vector<6x32xbf16>
    %59 = vector.extract_strided_slice %5 {offsets = [0, 64], sizes = [6, 32], strides = [1, 1]} : vector<6x128xf32> to vector<6x32xf32>
    %60 = arith.truncf %59 : vector<6x32xf32> to vector<6x32xbf16>
    %cst_21 = arith.constant dense<0.000000e+00> : vector<6x6xf32>
    %61 = tpu.matmul %58, %60, %cst_21 {dimension_numbers = #tpu.dot_dimension_numbers<[1], [1], [0], [0], [0, 0, 1, 0], [], []>} : vector<6x32xbf16>, vector<6x32xbf16>, vector<6x6xf32> -> vector<6x6xf32>
    %cst_22 = arith.constant 0.176776692 : f32
    %62 = vector.broadcast %cst_22 : f32 to vector<6x6xf32>
    %63 = arith.mulf %61, %62 : vector<6x6xf32>
    %64 = vector.broadcast %1 : vector<1x6xf32> to vector<6x6xf32>
    %65 = arith.addf %63, %64 : vector<6x6xf32>
    %cst_23 = arith.constant dense<0xFF800000> : vector<6xf32>
    %66 = vector.multi_reduction <maximumf>, %65, %cst_23 [1] : vector<6x6xf32> to vector<6xf32>
    %67 = vector.shape_cast %66 : vector<6xf32> to vector<6x1xf32>
    %68 = vector.broadcast %67 : vector<6x1xf32> to vector<6x6xf32>
    %69 = arith.subf %65, %68 : vector<6x6xf32>
    %70 = math.exp %69 : vector<6x6xf32>
    %cst_24 = arith.constant dense<0.000000e+00> : vector<6xf32>
    %71 = vector.multi_reduction <add>, %70, %cst_24 [1] : vector<6x6xf32> to vector<6xf32>
    %72 = vector.shape_cast %71 : vector<6xf32> to vector<6x1xf32>
    %73 = tpu.reciprocal %72 {approx = true} : vector<6x1xf32> -> vector<6x1xf32>
    %74 = vector.broadcast %73 : vector<6x1xf32> to vector<6x6xf32>
    %75 = arith.mulf %70, %74 : vector<6x6xf32>
    %76 = arith.truncf %75 : vector<6x6xf32> to vector<6x6xbf16>
    %77 = vector.extract_strided_slice %7 {offsets = [0, 64], sizes = [6, 32], strides = [1, 1]} : vector<6x128xf32> to vector<6x32xf32>
    %78 = arith.truncf %77 : vector<6x32xf32> to vector<6x32xbf16>
    %cst_25 = arith.constant dense<0.000000e+00> : vector<6x32xf32>
    %79 = tpu.matmul %76, %78, %cst_25 {dimension_numbers = #tpu.dot_dimension_numbers<[1], [0], [0], [1], [0, 0, 1, 1], [], []>} : vector<6x6xbf16>, vector<6x32xbf16>, vector<6x32xf32> -> vector<6x32xf32>
    %80 = arith.addf %56, %75 : vector<6x6xf32>
    %81 = vector.extract_strided_slice %3 {offsets = [0, 96], sizes = [6, 32], strides = [1, 1]} : vector<6x128xf32> to vector<6x32xf32>
    %82 = arith.truncf %81 : vector<6x32xf32> to vector<6x32xbf16>
    %83 = vector.extract_strided_slice %5 {offsets = [0, 96], sizes = [6, 32], strides = [1, 1]} : vector<6x128xf32> to vector<6x32xf32>
    %84 = arith.truncf %83 : vector<6x32xf32> to vector<6x32xbf16>
    %cst_26 = arith.constant dense<0.000000e+00> : vector<6x6xf32>
    %85 = tpu.matmul %82, %84, %cst_26 {dimension_numbers = #tpu.dot_dimension_numbers<[1], [1], [0], [0], [0, 0, 1, 0], [], []>} : vector<6x32xbf16>, vector<6x32xbf16>, vector<6x6xf32> -> vector<6x6xf32>
    %cst_27 = arith.constant 0.176776692 : f32
    %86 = vector.broadcast %cst_27 : f32 to vector<6x6xf32>
    %87 = arith.mulf %85, %86 : vector<6x6xf32>
    %88 = vector.broadcast %1 : vector<1x6xf32> to vector<6x6xf32>
    %89 = arith.addf %87, %88 : vector<6x6xf32>
    %cst_28 = arith.constant dense<0xFF800000> : vector<6xf32>
    %90 = vector.multi_reduction <maximumf>, %89, %cst_28 [1] : vector<6x6xf32> to vector<6xf32>
    %91 = vector.shape_cast %90 : vector<6xf32> to vector<6x1xf32>
    %92 = vector.broadcast %91 : vector<6x1xf32> to vector<6x6xf32>
    %93 = arith.subf %89, %92 : vector<6x6xf32>
    %94 = math.exp %93 : vector<6x6xf32>
    %cst_29 = arith.constant dense<0.000000e+00> : vector<6xf32>
    %95 = vector.multi_reduction <add>, %94, %cst_29 [1] : vector<6x6xf32> to vector<6xf32>
    %96 = vector.shape_cast %95 : vector<6xf32> to vector<6x1xf32>
    %97 = tpu.reciprocal %96 {approx = true} : vector<6x1xf32> -> vector<6x1xf32>
    %98 = vector.broadcast %97 : vector<6x1xf32> to vector<6x6xf32>
    %99 = arith.mulf %94, %98 : vector<6x6xf32>
    %100 = arith.truncf %99 : vector<6x6xf32> to vector<6x6xbf16>
    %101 = vector.extract_strided_slice %7 {offsets = [0, 96], sizes = [6, 32], strides = [1, 1]} : vector<6x128xf32> to vector<6x32xf32>
    %102 = arith.truncf %101 : vector<6x32xf32> to vector<6x32xbf16>
    %cst_30 = arith.constant dense<0.000000e+00> : vector<6x32xf32>
    %103 = tpu.matmul %100, %102, %cst_30 {dimension_numbers = #tpu.dot_dimension_numbers<[1], [0], [0], [1], [0, 0, 1, 1], [], []>} : vector<6x6xbf16>, vector<6x32xbf16>, vector<6x32xf32> -> vector<6x32xf32>
    %104 = arith.addf %80, %99 : vector<6x6xf32>
    %105 = tpu.concatenate %31, %55, %79, %103 in 1 : vector<6x32xf32>, vector<6x32xf32>, vector<6x32xf32>, vector<6x32xf32> -> vector<6x128xf32>
    %c0_31 = arith.constant 0 : index
    %c0_32 = arith.constant 0 : index
    %c0_33 = arith.constant 0 : index
    %106 = vector.load %arg5[%c0_31, %c0_32, %c0_33] : memref<1x6x128xf32, #tpu.memory_space<vmem>>, vector<1x6x128xf32>
    %107 = vector.shape_cast %106 : vector<1x6x128xf32> to vector<6x128xf32>
    %108 = vector.shape_cast %105 : vector<6x128xf32> to vector<1x6x128xf32>
    tpu.vector_store %arg5[%c0_31, %c0_32, %c0_33], %108 {strides = array<i32>} : memref<1x6x128xf32, #tpu.memory_space<vmem>>, vector<1x6x128xf32>,
    %cst_34 = arith.constant 2.500000e-01 : f32
    %109 = vector.broadcast %cst_34 : f32 to vector<6x6xf32>
    %110 = arith.mulf %104, %109 : vector<6x6xf32>
    %c0_35 = arith.constant 0 : index
    %c0_36 = arith.constant 0 : index
    %c0_37 = arith.constant 0 : index
    %111 = vector.load %arg6[%c0_35, %c0_36, %c0_37] : memref<1x6x6xf32, #tpu.memory_space<vmem>>, vector<1x6x6xf32>
    %112 = vector.shape_cast %111 : vector<1x6x6xf32> to vector<6x6xf32>
    %113 = vector.shape_cast %110 : vector<6x6xf32> to vector<1x6x6xf32>
    tpu.vector_store %arg6[%c0_35, %c0_36, %c0_37], %113 {strides = array<i32>} : memref<1x6x6xf32, #tpu.memory_space<vmem>>, vector<1x6x6xf32>,
    return
  }
  func.func @transform_0(%arg0: i32) -> (i32, i32, i32) {
    %c0_i32 = arith.constant 0 : i32
    %c0_i32_0 = arith.constant 0 : i32
    %c0_i32_1 = arith.constant 0 : i32
    return %arg0, %c0_i32, %c0_i32_0 : i32, i32, i32
  }
  func.func @transform_1(%arg0: i32) -> (i32, i32, i32) {
    %c0_i32 = arith.constant 0 : i32
    %c0_i32_0 = arith.constant 0 : i32
    %c0_i32_1 = arith.constant 0 : i32
    return %arg0, %c0_i32, %c0_i32_0 : i32, i32, i32
  }
  func.func @transform_2(%arg0: i32) -> (i32, i32, i32) {
    %c0_i32 = arith.constant 0 : i32
    %c0_i32_0 = arith.constant 0 : i32
    %c0_i32_1 = arith.constant 0 : i32
    return %arg0, %c0_i32, %c0_i32_0 : i32, i32, i32
  }
  func.func @transform_3(%arg0: i32) -> (i32, i32, i32) {
    %c0_i32 = arith.constant 0 : i32
    %c0_i32_0 = arith.constant 0 : i32
    %c0_i32_1 = arith.constant 0 : i32
    return %arg0, %c0_i32, %c0_i32_0 : i32, i32, i32
  }
  func.func @transform_4(%arg0: i32) -> (i32, i32, i32) {
    %c0_i32 = arith.constant 0 : i32
    %c0_i32_0 = arith.constant 0 : i32
    %c0_i32_1 = arith.constant 0 : i32
    return %arg0, %c0_i32, %c0_i32_0 : i32, i32, i32
  }
  func.func @transform_5(%arg0: i32) -> (i32, i32, i32) {
    %c0_i32 = arith.constant 0 : i32
    %c0_i32_0 = arith.constant 0 : i32
    %c0_i32_1 = arith.constant 0 : i32
    return %arg0, %c0_i32, %c0_i32_0 : i32, i32, i32
  }
}

module attributes {stable_mosaic.version = 11 : i64} {
  func.func @kernel(%arg0: i32, %arg1: i32, %arg2: i32, %arg3: memref<24x128xf32, #tpu.memory_space<vmem>>, %arg4: memref<128x128xbf16, #tpu.memory_space<vmem>>, %arg5: memref<1x128xf32, #tpu.memory_space<vmem>>, %arg6: memref<24x128xf32, #tpu.memory_space<vmem>>, %arg7: memref<1x128xf32, #tpu.memory_space<vmem>>, %arg8: memref<1x128xf32, #tpu.memory_space<vmem>>, %arg9: memref<24x128xf32, #tpu.memory_space<vmem>>, %arg10: memref<24x128xf32, #tpu.memory_space<vmem>>) attributes {dimension_semantics = [#tpu.dimension_semantics<parallel>, #tpu.dimension_semantics<parallel>, #tpu.dimension_semantics<arbitrary>], iteration_bounds = array<i64: 1, 1, 1>, scalar_prefetch = 0 : i64, scratch_operands = 1 : i64, tpu.core_type = #tpu.core_type<tc>, window_params = [{transform_indices = @transform_0, window_bounds = array<i64: 24, 128>}, {transform_indices = @transform_1, window_bounds = array<i64: 128, 128>}, {transform_indices = @transform_2, window_bounds = array<i64: 1, 128>}, {transform_indices = @transform_3, window_bounds = array<i64: 24, 128>}, {transform_indices = @transform_4, window_bounds = array<i64: 1, 128>}, {transform_indices = @transform_5, window_bounds = array<i64: 1, 128>}, {transform_indices = @transform_6, window_bounds = array<i64: 24, 128>}]} {
    %c0_i32 = arith.constant 0 : i32
    %0 = arith.cmpi eq, %arg2, %c0_i32 : i32
    %1 = arith.extui %0 : i1 to i32
    %c0_i32_0 = arith.constant 0 : i32
    %2 = arith.cmpi ne, %1, %c0_i32_0 : i32
    scf.if %2 {
      %cst_10 = arith.constant 0.000000e+00 : f32
      %13 = vector.broadcast %cst_10 : f32 to vector<24x128xf32>
      %c0_11 = arith.constant 0 : index
      %c0_12 = arith.constant 0 : index
      %14 = vector.load %arg10[%c0_11, %c0_12] : memref<24x128xf32, #tpu.memory_space<vmem>>, vector<24x128xf32>
      tpu.vector_store %arg10[%c0_11, %c0_12], %13 {strides = array<i32>} : memref<24x128xf32, #tpu.memory_space<vmem>>, vector<24x128xf32>,
    } else {
    }
    %c0 = arith.constant 0 : index
    %c0_1 = arith.constant 0 : index
    %3 = vector.load %arg10[%c0, %c0_1] : memref<24x128xf32, #tpu.memory_space<vmem>>, vector<24x128xf32>
    %c0_2 = arith.constant 0 : index
    %c0_3 = arith.constant 0 : index
    %4 = vector.load %arg3[%c0_2, %c0_3] : memref<24x128xf32, #tpu.memory_space<vmem>>, vector<24x128xf32>
    %5 = arith.truncf %4 : vector<24x128xf32> to vector<24x128xbf16>
    %c0_4 = arith.constant 0 : index
    %c0_5 = arith.constant 0 : index
    %6 = vector.load %arg4[%c0_4, %c0_5] : memref<128x128xbf16, #tpu.memory_space<vmem>>, vector<128x128xbf16>
    %cst = arith.constant dense<0.000000e+00> : vector<24x128xf32>
    %7 = tpu.matmul %5, %6, %cst {dimension_numbers = #tpu.dot_dimension_numbers<[1], [0], [0], [1], [0, 0, 1, 1], [], []>} : vector<24x128xbf16>, vector<128x128xbf16>, vector<24x128xf32> -> vector<24x128xf32>
    %8 = arith.addf %3, %7 : vector<24x128xf32>
    %c0_6 = arith.constant 0 : index
    %c0_7 = arith.constant 0 : index
    %9 = vector.load %arg10[%c0_6, %c0_7] : memref<24x128xf32, #tpu.memory_space<vmem>>, vector<24x128xf32>
    tpu.vector_store %arg10[%c0_6, %c0_7], %8 {strides = array<i32>} : memref<24x128xf32, #tpu.memory_space<vmem>>, vector<24x128xf32>,
    %c0_i32_8 = arith.constant 0 : i32
    %10 = arith.cmpi eq, %arg2, %c0_i32_8 : i32
    %11 = arith.extui %10 : i1 to i32
    %c0_i32_9 = arith.constant 0 : i32
    %12 = arith.cmpi ne, %11, %c0_i32_9 : i32
    scf.if %12 {
      %c0_10 = arith.constant 0 : index
      %c0_11 = arith.constant 0 : index
      %13 = vector.load %arg10[%c0_10, %c0_11] : memref<24x128xf32, #tpu.memory_space<vmem>>, vector<24x128xf32>
      %c0_12 = arith.constant 0 : index
      %c0_13 = arith.constant 0 : index
      %14 = vector.load %arg5[%c0_12, %c0_13] : memref<1x128xf32, #tpu.memory_space<vmem>>, vector<1x128xf32>
      %15 = vector.broadcast %14 : vector<1x128xf32> to vector<24x128xf32>
      %16 = arith.addf %13, %15 : vector<24x128xf32>
      %c0_14 = arith.constant 0 : index
      %c0_15 = arith.constant 0 : index
      %17 = vector.load %arg6[%c0_14, %c0_15] : memref<24x128xf32, #tpu.memory_space<vmem>>, vector<24x128xf32>
      %18 = arith.addf %16, %17 : vector<24x128xf32>
      %cst_16 = arith.constant dense<0.000000e+00> : vector<24xf32>
      %19 = vector.multi_reduction <add>, %18, %cst_16 [1] : vector<24x128xf32> to vector<24xf32>
      %20 = vector.shape_cast %19 : vector<24xf32> to vector<24x1xf32>
      %cst_17 = arith.constant 7.812500e-03 : f32
      %21 = vector.broadcast %cst_17 : f32 to vector<24x1xf32>
      %22 = arith.mulf %20, %21 : vector<24x1xf32>
      %23 = vector.broadcast %22 : vector<24x1xf32> to vector<24x128xf32>
      %24 = arith.subf %18, %23 : vector<24x128xf32>
      %25 = arith.mulf %24, %24 : vector<24x128xf32>
      %cst_18 = arith.constant dense<0.000000e+00> : vector<24xf32>
      %26 = vector.multi_reduction <add>, %25, %cst_18 [1] : vector<24x128xf32> to vector<24xf32>
      %27 = vector.shape_cast %26 : vector<24xf32> to vector<24x1xf32>
      %cst_19 = arith.constant 7.812500e-03 : f32
      %28 = vector.broadcast %cst_19 : f32 to vector<24x1xf32>
      %29 = arith.mulf %27, %28 : vector<24x1xf32>
      %cst_20 = arith.constant 9.99999974E-6 : f32
      %30 = vector.broadcast %cst_20 : f32 to vector<24x1xf32>
      %31 = arith.addf %29, %30 : vector<24x1xf32>
      %32 = math.rsqrt %31 : vector<24x1xf32>
      %33 = vector.broadcast %32 : vector<24x1xf32> to vector<24x128xf32>
      %34 = arith.mulf %24, %33 : vector<24x128xf32>
      %c0_21 = arith.constant 0 : index
      %c0_22 = arith.constant 0 : index
      %35 = vector.load %arg7[%c0_21, %c0_22] : memref<1x128xf32, #tpu.memory_space<vmem>>, vector<1x128xf32>
      %36 = vector.broadcast %35 : vector<1x128xf32> to vector<24x128xf32>
      %37 = arith.mulf %34, %36 : vector<24x128xf32>
      %c0_23 = arith.constant 0 : index
      %c0_24 = arith.constant 0 : index
      %38 = vector.load %arg8[%c0_23, %c0_24] : memref<1x128xf32, #tpu.memory_space<vmem>>, vector<1x128xf32>
      %39 = vector.broadcast %38 : vector<1x128xf32> to vector<24x128xf32>
      %40 = arith.addf %37, %39 : vector<24x128xf32>
      %c0_25 = arith.constant 0 : index
      %c0_26 = arith.constant 0 : index
      %41 = vector.load %arg9[%c0_25, %c0_26] : memref<24x128xf32, #tpu.memory_space<vmem>>, vector<24x128xf32>
      tpu.vector_store %arg9[%c0_25, %c0_26], %40 {strides = array<i32>} : memref<24x128xf32, #tpu.memory_space<vmem>>, vector<24x128xf32>,
    } else {
    }
    return
  }
  func.func @transform_0(%arg0: i32, %arg1: i32, %arg2: i32) -> (i32, i32) {
    %c0_i32 = arith.constant 0 : i32
    return %arg0, %arg2 : i32, i32
  }
  func.func @transform_1(%arg0: i32, %arg1: i32, %arg2: i32) -> (i32, i32) {
    %c0_i32 = arith.constant 0 : i32
    return %arg2, %arg1 : i32, i32
  }
  func.func @transform_2(%arg0: i32, %arg1: i32, %arg2: i32) -> (i32, i32) {
    %c0_i32 = arith.constant 0 : i32
    %c0_i32_0 = arith.constant 0 : i32
    return %c0_i32, %arg1 : i32, i32
  }
  func.func @transform_3(%arg0: i32, %arg1: i32, %arg2: i32) -> (i32, i32) {
    %c0_i32 = arith.constant 0 : i32
    return %arg0, %arg1 : i32, i32
  }
  func.func @transform_4(%arg0: i32, %arg1: i32, %arg2: i32) -> (i32, i32) {
    %c0_i32 = arith.constant 0 : i32
    %c0_i32_0 = arith.constant 0 : i32
    return %c0_i32, %arg1 : i32, i32
  }
  func.func @transform_5(%arg0: i32, %arg1: i32, %arg2: i32) -> (i32, i32) {
    %c0_i32 = arith.constant 0 : i32
    %c0_i32_0 = arith.constant 0 : i32
    return %c0_i32, %arg1 : i32, i32
  }
  func.func @transform_6(%arg0: i32, %arg1: i32, %arg2: i32) -> (i32, i32) {
    %c0_i32 = arith.constant 0 : i32
    return %arg0, %arg1 : i32, i32
  }
}

module attributes {stable_mosaic.version = 11 : i64} {
  func.func @kernel(%arg0: i32, %arg1: i32, %arg2: i32, %arg3: memref<24x128xf32, #tpu.memory_space<vmem>>, %arg4: memref<128x256xbf16, #tpu.memory_space<vmem>>, %arg5: memref<1x256xf32, #tpu.memory_space<vmem>>, %arg6: memref<24x256xf32, #tpu.memory_space<vmem>>, %arg7: memref<24x256xf32, #tpu.memory_space<vmem>>) attributes {dimension_semantics = [#tpu.dimension_semantics<parallel>, #tpu.dimension_semantics<parallel>, #tpu.dimension_semantics<arbitrary>], iteration_bounds = array<i64: 1, 1, 1>, scalar_prefetch = 0 : i64, scratch_operands = 1 : i64, tpu.core_type = #tpu.core_type<tc>, window_params = [{transform_indices = @transform_0, window_bounds = array<i64: 24, 128>}, {transform_indices = @transform_1, window_bounds = array<i64: 128, 256>}, {transform_indices = @transform_2, window_bounds = array<i64: 1, 256>}, {transform_indices = @transform_3, window_bounds = array<i64: 24, 256>}]} {
    %c0_i32 = arith.constant 0 : i32
    %0 = arith.cmpi eq, %arg2, %c0_i32 : i32
    %1 = arith.extui %0 : i1 to i32
    %c0_i32_0 = arith.constant 0 : i32
    %2 = arith.cmpi ne, %1, %c0_i32_0 : i32
    scf.if %2 {
      %cst_10 = arith.constant 0.000000e+00 : f32
      %13 = vector.broadcast %cst_10 : f32 to vector<24x256xf32>
      %c0_11 = arith.constant 0 : index
      %c0_12 = arith.constant 0 : index
      %14 = vector.load %arg7[%c0_11, %c0_12] : memref<24x256xf32, #tpu.memory_space<vmem>>, vector<24x256xf32>
      tpu.vector_store %arg7[%c0_11, %c0_12], %13 {strides = array<i32>} : memref<24x256xf32, #tpu.memory_space<vmem>>, vector<24x256xf32>,
    } else {
    }
    %c0 = arith.constant 0 : index
    %c0_1 = arith.constant 0 : index
    %3 = vector.load %arg7[%c0, %c0_1] : memref<24x256xf32, #tpu.memory_space<vmem>>, vector<24x256xf32>
    %c0_2 = arith.constant 0 : index
    %c0_3 = arith.constant 0 : index
    %4 = vector.load %arg3[%c0_2, %c0_3] : memref<24x128xf32, #tpu.memory_space<vmem>>, vector<24x128xf32>
    %5 = arith.truncf %4 : vector<24x128xf32> to vector<24x128xbf16>
    %c0_4 = arith.constant 0 : index
    %c0_5 = arith.constant 0 : index
    %6 = vector.load %arg4[%c0_4, %c0_5] : memref<128x256xbf16, #tpu.memory_space<vmem>>, vector<128x256xbf16>
    %cst = arith.constant dense<0.000000e+00> : vector<24x256xf32>
    %7 = tpu.matmul %5, %6, %cst {dimension_numbers = #tpu.dot_dimension_numbers<[1], [0], [0], [1], [0, 0, 1, 1], [], []>} : vector<24x128xbf16>, vector<128x256xbf16>, vector<24x256xf32> -> vector<24x256xf32>
    %8 = arith.addf %3, %7 : vector<24x256xf32>
    %c0_6 = arith.constant 0 : index
    %c0_7 = arith.constant 0 : index
    %9 = vector.load %arg7[%c0_6, %c0_7] : memref<24x256xf32, #tpu.memory_space<vmem>>, vector<24x256xf32>
    tpu.vector_store %arg7[%c0_6, %c0_7], %8 {strides = array<i32>} : memref<24x256xf32, #tpu.memory_space<vmem>>, vector<24x256xf32>,
    %c0_i32_8 = arith.constant 0 : i32
    %10 = arith.cmpi eq, %arg2, %c0_i32_8 : i32
    %11 = arith.extui %10 : i1 to i32
    %c0_i32_9 = arith.constant 0 : i32
    %12 = arith.cmpi ne, %11, %c0_i32_9 : i32
    scf.if %12 {
      %c0_10 = arith.constant 0 : index
      %c0_11 = arith.constant 0 : index
      %13 = vector.load %arg7[%c0_10, %c0_11] : memref<24x256xf32, #tpu.memory_space<vmem>>, vector<24x256xf32>
      %c0_12 = arith.constant 0 : index
      %c0_13 = arith.constant 0 : index
      %14 = vector.load %arg5[%c0_12, %c0_13] : memref<1x256xf32, #tpu.memory_space<vmem>>, vector<1x256xf32>
      %15 = vector.broadcast %14 : vector<1x256xf32> to vector<24x256xf32>
      %16 = arith.addf %13, %15 : vector<24x256xf32>
      %cst_14 = arith.constant 0.000000e+00 : f32
      %17 = vector.broadcast %cst_14 : f32 to vector<24x256xf32>
      %18 = arith.maximumf %16, %17 : vector<24x256xf32>
      %c0_15 = arith.constant 0 : index
      %c0_16 = arith.constant 0 : index
      %19 = vector.load %arg6[%c0_15, %c0_16] : memref<24x256xf32, #tpu.memory_space<vmem>>, vector<24x256xf32>
      tpu.vector_store %arg6[%c0_15, %c0_16], %18 {strides = array<i32>} : memref<24x256xf32, #tpu.memory_space<vmem>>, vector<24x256xf32>,
    } else {
    }
    return
  }
  func.func @transform_0(%arg0: i32, %arg1: i32, %arg2: i32) -> (i32, i32) {
    %c0_i32 = arith.constant 0 : i32
    return %arg0, %arg2 : i32, i32
  }
  func.func @transform_1(%arg0: i32, %arg1: i32, %arg2: i32) -> (i32, i32) {
    %c0_i32 = arith.constant 0 : i32
    return %arg2, %arg1 : i32, i32
  }
  func.func @transform_2(%arg0: i32, %arg1: i32, %arg2: i32) -> (i32, i32) {
    %c0_i32 = arith.constant 0 : i32
    %c0_i32_0 = arith.constant 0 : i32
    return %c0_i32, %arg1 : i32, i32
  }
  func.func @transform_3(%arg0: i32, %arg1: i32, %arg2: i32) -> (i32, i32) {
    %c0_i32 = arith.constant 0 : i32
    return %arg0, %arg1 : i32, i32
  }
}

module attributes {stable_mosaic.version = 11 : i64} {
  func.func @kernel(%arg0: i32, %arg1: i32, %arg2: i32, %arg3: memref<24x256xf32, #tpu.memory_space<vmem>>, %arg4: memref<256x128xbf16, #tpu.memory_space<vmem>>, %arg5: memref<1x128xf32, #tpu.memory_space<vmem>>, %arg6: memref<24x128xf32, #tpu.memory_space<vmem>>, %arg7: memref<24x128xf32, #tpu.memory_space<vmem>>, %arg8: memref<24x128xf32, #tpu.memory_space<vmem>>) attributes {dimension_semantics = [#tpu.dimension_semantics<parallel>, #tpu.dimension_semantics<parallel>, #tpu.dimension_semantics<arbitrary>], iteration_bounds = array<i64: 1, 1, 1>, scalar_prefetch = 0 : i64, scratch_operands = 1 : i64, tpu.core_type = #tpu.core_type<tc>, window_params = [{transform_indices = @transform_0, window_bounds = array<i64: 24, 256>}, {transform_indices = @transform_1, window_bounds = array<i64: 256, 128>}, {transform_indices = @transform_2, window_bounds = array<i64: 1, 128>}, {transform_indices = @transform_3, window_bounds = array<i64: 24, 128>}, {transform_indices = @transform_4, window_bounds = array<i64: 24, 128>}]} {
    %c0_i32 = arith.constant 0 : i32
    %0 = arith.cmpi eq, %arg2, %c0_i32 : i32
    %1 = arith.extui %0 : i1 to i32
    %c0_i32_0 = arith.constant 0 : i32
    %2 = arith.cmpi ne, %1, %c0_i32_0 : i32
    scf.if %2 {
      %cst_10 = arith.constant 0.000000e+00 : f32
      %13 = vector.broadcast %cst_10 : f32 to vector<24x128xf32>
      %c0_11 = arith.constant 0 : index
      %c0_12 = arith.constant 0 : index
      %14 = vector.load %arg8[%c0_11, %c0_12] : memref<24x128xf32, #tpu.memory_space<vmem>>, vector<24x128xf32>
      tpu.vector_store %arg8[%c0_11, %c0_12], %13 {strides = array<i32>} : memref<24x128xf32, #tpu.memory_space<vmem>>, vector<24x128xf32>,
    } else {
    }
    %c0 = arith.constant 0 : index
    %c0_1 = arith.constant 0 : index
    %3 = vector.load %arg8[%c0, %c0_1] : memref<24x128xf32, #tpu.memory_space<vmem>>, vector<24x128xf32>
    %c0_2 = arith.constant 0 : index
    %c0_3 = arith.constant 0 : index
    %4 = vector.load %arg3[%c0_2, %c0_3] : memref<24x256xf32, #tpu.memory_space<vmem>>, vector<24x256xf32>
    %5 = arith.truncf %4 : vector<24x256xf32> to vector<24x256xbf16>
    %c0_4 = arith.constant 0 : index
    %c0_5 = arith.constant 0 : index
    %6 = vector.load %arg4[%c0_4, %c0_5] : memref<256x128xbf16, #tpu.memory_space<vmem>>, vector<256x128xbf16>
    %cst = arith.constant dense<0.000000e+00> : vector<24x128xf32>
    %7 = tpu.matmul %5, %6, %cst {dimension_numbers = #tpu.dot_dimension_numbers<[1], [0], [0], [1], [0, 0, 1, 1], [], []>} : vector<24x256xbf16>, vector<256x128xbf16>, vector<24x128xf32> -> vector<24x128xf32>
    %8 = arith.addf %3, %7 : vector<24x128xf32>
    %c0_6 = arith.constant 0 : index
    %c0_7 = arith.constant 0 : index
    %9 = vector.load %arg8[%c0_6, %c0_7] : memref<24x128xf32, #tpu.memory_space<vmem>>, vector<24x128xf32>
    tpu.vector_store %arg8[%c0_6, %c0_7], %8 {strides = array<i32>} : memref<24x128xf32, #tpu.memory_space<vmem>>, vector<24x128xf32>,
    %c0_i32_8 = arith.constant 0 : i32
    %10 = arith.cmpi eq, %arg2, %c0_i32_8 : i32
    %11 = arith.extui %10 : i1 to i32
    %c0_i32_9 = arith.constant 0 : i32
    %12 = arith.cmpi ne, %11, %c0_i32_9 : i32
    scf.if %12 {
      %c0_10 = arith.constant 0 : index
      %c0_11 = arith.constant 0 : index
      %13 = vector.load %arg8[%c0_10, %c0_11] : memref<24x128xf32, #tpu.memory_space<vmem>>, vector<24x128xf32>
      %c0_12 = arith.constant 0 : index
      %c0_13 = arith.constant 0 : index
      %14 = vector.load %arg5[%c0_12, %c0_13] : memref<1x128xf32, #tpu.memory_space<vmem>>, vector<1x128xf32>
      %15 = vector.broadcast %14 : vector<1x128xf32> to vector<24x128xf32>
      %16 = arith.addf %13, %15 : vector<24x128xf32>
      %c0_14 = arith.constant 0 : index
      %c0_15 = arith.constant 0 : index
      %17 = vector.load %arg6[%c0_14, %c0_15] : memref<24x128xf32, #tpu.memory_space<vmem>>, vector<24x128xf32>
      %18 = arith.addf %16, %17 : vector<24x128xf32>
      %c0_16 = arith.constant 0 : index
      %c0_17 = arith.constant 0 : index
      %19 = vector.load %arg7[%c0_16, %c0_17] : memref<24x128xf32, #tpu.memory_space<vmem>>, vector<24x128xf32>
      tpu.vector_store %arg7[%c0_16, %c0_17], %18 {strides = array<i32>} : memref<24x128xf32, #tpu.memory_space<vmem>>, vector<24x128xf32>,
    } else {
    }
    return
  }
  func.func @transform_0(%arg0: i32, %arg1: i32, %arg2: i32) -> (i32, i32) {
    %c0_i32 = arith.constant 0 : i32
    return %arg0, %arg2 : i32, i32
  }
  func.func @transform_1(%arg0: i32, %arg1: i32, %arg2: i32) -> (i32, i32) {
    %c0_i32 = arith.constant 0 : i32
    return %arg2, %arg1 : i32, i32
  }
  func.func @transform_2(%arg0: i32, %arg1: i32, %arg2: i32) -> (i32, i32) {
    %c0_i32 = arith.constant 0 : i32
    %c0_i32_0 = arith.constant 0 : i32
    return %c0_i32, %arg1 : i32, i32
  }
  func.func @transform_3(%arg0: i32, %arg1: i32, %arg2: i32) -> (i32, i32) {
    %c0_i32 = arith.constant 0 : i32
    return %arg0, %arg1 : i32, i32
  }
  func.func @transform_4(%arg0: i32, %arg1: i32, %arg2: i32) -> (i32, i32) {
    %c0_i32 = arith.constant 0 : i32
    return %arg0, %arg1 : i32, i32
  }
}

</mosaic_0001>

<llo_original>
// kernel: _device_forward.28
$region0: #{_device_forward.28}
  #allocation0 [shape = 'u32[]', space=smem, size = 0x4, offset = 0x4, fixed_abs, tag = 'smem constant byte address 0x4 - core index']
  #allocation1 [shape = 'u32[144,128]{1,0:T(1,128)}', space=vmem, size = 0x12000, scoped, tag = 'internal scratch']
  #allocation2 [shape = 'f32[16,128]{1,0:T(8,128)}', space=vmem, size = 0x2000, scoped, tag = 'scratch operand']
  %s0 = inlined_call_operand.vmem [shape: f32[16,128], index: 0, kind: input, shape index: {}]
  %s1 = inlined_call_operand.vmem [shape: bf16[128,128], index: 1, kind: input, shape index: {}]
  %s2 = inlined_call_operand.vmem [shape: f32[1,128], index: 2, kind: input, shape index: {}]
  %s3 = inlined_call_operand.vmem [shape: f32[16,128], index: 3, kind: output, shape index: {}]
  %s4 = sld [smem:[#allocation0]]
  $region30: #{_device_forward.28} parent=0
    _
  %s6 = ssub.s32 1, %s4
  %s7 = scalar_select 0, %s6, %s4
  // Predicated region
  $region2: #{_device_forward.28} parent=0 // pred_check
    _
  $region3: #{_device_forward.28} parent=0 // pred_check_branch
    %9 = sbr.rel (0) target = $region5
  $region4: #{_device_forward.28} parent=0 // pred_region
    _
  $region5: #{_device_forward.28} parent=0 // pred_fallthru
    _
  // Predicated region
  $region6: #{_device_forward.28} parent=0 // pred_check
    _
  $region7: #{_device_forward.28} parent=0 // pred_check_branch
    %11 = sbr.rel (0) target = $region9
  $region8: #{_device_forward.28} parent=0 // pred_region
    _
  $region9: #{_device_forward.28} parent=0 // pred_fallthru
    _
  // Predicated region
  $region10: #{_device_forward.28} parent=0 // pred_check
    _
  $region11: #{_device_forward.28} parent=0 // pred_check_branch
    %13 = sbr.rel (0) target = $region13
  $region12: #{_device_forward.28} parent=0 // pred_region
    _
  $region13: #{_device_forward.28} parent=0 // pred_fallthru
    _
  %p15 = scmp.eq.s32.totalorder 0, 0
  // Predicated region
  $region14: #{_device_forward.28} parent=0 // pred_check
    %p16 = pneg %p15
  $region15: #{_device_forward.28} parent=0 // pred_check_branch
    %18 = sbr.rel (%p16) target = $region17
  $region16: #{_device_forward.28} parent=0 // pred_region
    %19 = vst [vmem:[#allocation2] sm:$0xff] 0.0
    %20 = vst [vmem:[#allocation2 + $0x8] sm:$0xff] 0.0
  $region17: #{_device_forward.28} parent=0 // pred_fallthru
    _
  %v21 = vld [vmem:[#allocation2] sm:$0xff]
  %v22 = vld [vmem:[#allocation2 + $0x8] sm:$0xff]
  %v23 = vld [vmem:[%s0] sm:$0xff]
  %v24 = vld [vmem:[%s0 + $0x8] sm:$0xff]
  %v25 = vpack.c.bf16 %v24, %v23
  %v26 = vld [vmem:[%s1] sm:$0xf]
  %v27 = vld [vmem:[%s1 + $0x4] sm:$0xf]
  %v28 = vld [vmem:[%s1 + $0x8] sm:$0xf]
  %v29 = vld [vmem:[%s1 + $0xc] sm:$0xf]
  %v30 = vld [vmem:[%s1 + $0x10] sm:$0xf]
  %v31 = vld [vmem:[%s1 + $0x14] sm:$0xf]
  %v32 = vld [vmem:[%s1 + $0x18] sm:$0xf]
  %v33 = vld [vmem:[%s1 + $0x1c] sm:$0xf]
  %v34 = vld [vmem:[%s1 + $0x20] sm:$0xf]
  %v35 = vld [vmem:[%s1 + $0x24] sm:$0xf]
  %v36 = vld [vmem:[%s1 + $0x28] sm:$0xf]
  %v37 = vld [vmem:[%s1 + $0x2c] sm:$0xf]
  %v38 = vld [vmem:[%s1 + $0x30] sm:$0xf]
  %v39 = vld [vmem:[%s1 + $0x34] sm:$0xf]
  %v40 = vld [vmem:[%s1 + $0x38] sm:$0xf]
  %v41 = vld [vmem:[%s1 + $0x3c] sm:$0xf]
  %v58 = vunpack.c.l.b16 %v26
  %v59 = vunpack.c.l.b16 %v27
  %v60 = vunpack.c.l.b16 %v28
  %v61 = vunpack.c.l.b16 %v29
  %v62 = vunpack.c.l.b16 %v30
  %v63 = vunpack.c.l.b16 %v31
  %v64 = vunpack.c.l.b16 %v32
  %v65 = vunpack.c.l.b16 %v33
  %v66 = vunpack.c.l.b16 %v34
  %v67 = vunpack.c.l.b16 %v35
  %v68 = vunpack.c.l.b16 %v36
  %v69 = vunpack.c.l.b16 %v37
  %v70 = vunpack.c.l.b16 %v38
  %v71 = vunpack.c.l.b16 %v39
  %v72 = vunpack.c.l.b16 %v40
  %v73 = vunpack.c.l.b16 %v41
  %v74 = vpack.c.b16 %v59, %v58
  %v75 = vpack.c.b16 %v61, %v60
  %v76 = vpack.c.b16 %v63, %v62
  %v77 = vpack.c.b16 %v65, %v64
  %v78 = vpack.c.b16 %v67, %v66
  %v79 = vpack.c.b16 %v69, %v68
  %v80 = vpack.c.b16 %v71, %v70
  %v81 = vpack.c.b16 %v73, %v72
  %90 = vmatprep.subr.bf16.mxu0 0
  %91 = vmatpush1.bf16.msra.mxu0 %v74
  %92 = vmatprep.subr.bf16.mxu0 0
  %93 = vmatpush1.bf16.msra.mxu0 %v75
  %94 = vmatprep.subr.bf16.mxu0 0
  %95 = vmatpush1.bf16.msra.mxu0 %v76
  %96 = vmatprep.subr.bf16.mxu0 0
  %97 = vmatpush1.bf16.msra.mxu0 %v77
  %98 = vmatprep.subr.bf16.mxu0 0
  %99 = vmatpush1.bf16.msra.mxu0 %v78
  %100 = vmatprep.subr.bf16.mxu0 0
  %101 = vmatpush1.bf16.msra.mxu0 %v79
  %102 = vmatprep.subr.bf16.mxu0 0
  %103 = vmatpush1.bf16.msra.mxu0 %v80
  %104 = vmatprep.subr.bf16.mxu0 0
  %105 = vmatpush1.bf16.msra.mxu0 %v81
  %106 = vmatprep.subr.bf16.mxu0 0
  %107 = vmatpush1.bf16.msra.mxu0 0
  %108 = vmatprep.subr.bf16.mxu0 0
  %109 = vmatpush1.bf16.msra.mxu0 0
  %110 = vmatprep.subr.bf16.mxu0 0
  %111 = vmatpush1.bf16.msra.mxu0 0
  %112 = vmatprep.subr.bf16.mxu0 0
  %113 = vmatpush1.bf16.msra.mxu0 0
  %114 = vmatprep.subr.bf16.mxu0 0
  %115 = vmatpush1.bf16.msra.mxu0 0
  %116 = vmatprep.subr.bf16.mxu0 0
  %117 = vmatpush1.bf16.msra.mxu0 0
  %118 = vmatprep.subr.bf16.mxu0 0
  %119 = vmatpush1.bf16.msra.mxu0 0
  %120 = vmatprep.subr.bf16.mxu0 0
  %121 = vmatpush1.bf16.msra.mxu0 0
  %122 = vmatprep.mubr.bf16.mxu0 0
  %123 = vmatmul.mubr.bf16.gmra.mrb[0].mxu0 %v25
  %v124 = vpop.f32.mrb[0].mxu0
  %v125 = vadd.f32 0.0, %v124
  %v126 = vpop.f32.mrb[0].mxu0
  %v127 = vpop.f32.mrb[0].mxu0
  %v128 = vadd.f32 0.0, %v127
  %v129 = vpop.f32.mrb[0].mxu0
  %130 = vdwg.mxu0
  %v131 = vadd.f32 %v21, %v125
  %v132 = vadd.f32 %v22, %v128
  %133 = vst [vmem:[#allocation2] sm:$0xff] %v131
  %134 = vst [vmem:[#allocation2 + $0x8] sm:$0xff] %v132
  // Predicated region
  $region18: #{_device_forward.28} parent=0 // pred_check
    %p135 = pneg %p15
  $region19: #{_device_forward.28} parent=0 // pred_check_branch
    %137 = sbr.rel (%p135) target = $region21
  $region20: #{_device_forward.28} parent=0 // pred_region
    %v138 = vld [vmem:[#allocation2] sm:$0xff]
    %v139 = vld [vmem:[#allocation2 + $0x8] sm:$0xff]
    %v140 = vld [vmem:[%s2] sm:$0x1]
    %v142 = vlaneseq
    %v143 = vshrl.u32 %v142, 7
    %v144 = vsub.s32 0, %v143
    %v145 = vrot.slane %v140, %v144
    %v147 = vadd.f32 %v138, %v145
    %v148 = vadd.f32 %v139, %v145
    %149 = vst [vmem:[%s3] sm:$0xff] %v147
    %150 = vst [vmem:[%s3 + $0x8] sm:$0xff] %v148
  $region21: #{_device_forward.28} parent=0 // pred_fallthru
    _
  // Predicated region
  $region22: #{_device_forward.28} parent=0 // pred_check
    _
  $region23: #{_device_forward.28} parent=0 // pred_check_branch
    %152 = sbr.rel (0) target = $region25
  $region24: #{_device_forward.28} parent=0 // pred_region
    _
  $region25: #{_device_forward.28} parent=0 // pred_fallthru
    _
  // Predicated region
  $region26: #{_device_forward.28} parent=0 // pred_check
    _
  $region27: #{_device_forward.28} parent=0 // pred_check_branch
    %154 = sbr.rel (0) target = $region29
  $region28: #{_device_forward.28} parent=0 // pred_region
    _
  $region29: #{_device_forward.28} parent=0 // pred_fallthru
    _

// kernel: _device_forward.32
$region0: #{_device_forward.32}
  #allocation0 [shape = 'u32[]', space=smem, size = 0x4, offset = 0x4, fixed_abs, tag = 'smem constant byte address 0x4 - core index']
  #allocation1 [shape = 'u32[144,128]{1,0:T(1,128)}', space=vmem, size = 0x12000, scoped, tag = 'internal scratch']
  #allocation2 [shape = 'f32[16,128]{1,0:T(8,128)}', space=vmem, size = 0x2000, scoped, tag = 'scratch operand']
  %s0 = inlined_call_operand.vmem [shape: f32[16,128], index: 0, kind: input, shape index: {}]
  %s1 = inlined_call_operand.vmem [shape: bf16[128,128], index: 1, kind: input, shape index: {}]
  %s2 = inlined_call_operand.vmem [shape: f32[1,128], index: 2, kind: input, shape index: {}]
  %s3 = inlined_call_operand.vmem [shape: f32[16,128], index: 3, kind: input, shape index: {}]
  %s4 = inlined_call_operand.vmem [shape: f32[1,128], index: 4, kind: input, shape index: {}]
  %s5 = inlined_call_operand.vmem [shape: f32[1,128], index: 5, kind: input, shape index: {}]
  %s6 = inlined_call_operand.vmem [shape: f32[16,128], index: 6, kind: output, shape index: {}]
  %s7 = sld [smem:[#allocation0]]
  $region42: #{_device_forward.32} parent=0
    _
  %s9 = ssub.s32 1, %s7
  %s10 = scalar_select 0, %s9, %s7
  // Predicated region
  $region2: #{_device_forward.32} parent=0 // pred_check
    _
  $region3: #{_device_forward.32} parent=0 // pred_check_branch
    %12 = sbr.rel (0) target = $region5
  $region4: #{_device_forward.32} parent=0 // pred_region
    _
  $region5: #{_device_forward.32} parent=0 // pred_fallthru
    _
  // Predicated region
  $region6: #{_device_forward.32} parent=0 // pred_check
    _
  $region7: #{_device_forward.32} parent=0 // pred_check_branch
    %14 = sbr.rel (0) target = $region9
  $region8: #{_device_forward.32} parent=0 // pred_region
    _
  $region9: #{_device_forward.32} parent=0 // pred_fallthru
    _
  // Predicated region
  $region10: #{_device_forward.32} parent=0 // pred_check
    _
  $region11: #{_device_forward.32} parent=0 // pred_check_branch
    %16 = sbr.rel (0) target = $region13
  $region12: #{_device_forward.32} parent=0 // pred_region
    _
  $region13: #{_device_forward.32} parent=0 // pred_fallthru
    _
  // Predicated region
  $region14: #{_device_forward.32} parent=0 // pred_check
    _
  $region15: #{_device_forward.32} parent=0 // pred_check_branch
    %18 = sbr.rel (0) target = $region17
  $region16: #{_device_forward.32} parent=0 // pred_region
    _
  $region17: #{_device_forward.32} parent=0 // pred_fallthru
    _
  // Predicated region
  $region18: #{_device_forward.32} parent=0 // pred_check
    _
  $region19: #{_device_forward.32} parent=0 // pred_check_branch
    %20 = sbr.rel (0) target = $region21
  $region20: #{_device_forward.32} parent=0 // pred_region
    _
  $region21: #{_device_forward.32} parent=0 // pred_fallthru
    _
  // Predicated region
  $region22: #{_device_forward.32} parent=0 // pred_check
    _
  $region23: #{_device_forward.32} parent=0 // pred_check_branch
    %22 = sbr.rel (0) target = $region25
  $region24: #{_device_forward.32} parent=0 // pred_region
    _
  $region25: #{_device_forward.32} parent=0 // pred_fallthru
    _
  %p24 = scmp.eq.s32.totalorder 0, 0
  // Predicated region
  $region26: #{_device_forward.32} parent=0 // pred_check
    %p25 = pneg %p24
  $region27: #{_device_forward.32} parent=0 // pred_check_branch
    %27 = sbr.rel (%p25) target = $region29
  $region28: #{_device_forward.32} parent=0 // pred_region
    %28 = vst [vmem:[#allocation2] sm:$0xff] 0.0
    %29 = vst [vmem:[#allocation2 + $0x8] sm:$0xff] 0.0
  $region29: #{_device_forward.32} parent=0 // pred_fallthru
    _
  %v30 = vld [vmem:[#allocation2] sm:$0xff]
  %v31 = vld [vmem:[#allocation2 + $0x8] sm:$0xff]
  %v32 = vld [vmem:[%s0] sm:$0xff]
  %v33 = vld [vmem:[%s0 + $0x8] sm:$0xff]
  %v34 = vpack.c.bf16 %v33, %v32
  %v35 = vld [vmem:[%s1] sm:$0xf]
  %v36 = vld [vmem:[%s1 + $0x4] sm:$0xf]
  %v37 = vld [vmem:[%s1 + $0x8] sm:$0xf]
  %v38 = vld [vmem:[%s1 + $0xc] sm:$0xf]
  %v39 = vld [vmem:[%s1 + $0x10] sm:$0xf]
  %v40 = vld [vmem:[%s1 + $0x14] sm:$0xf]
  %v41 = vld [vmem:[%s1 + $0x18] sm:$0xf]
  %v42 = vld [vmem:[%s1 + $0x1c] sm:$0xf]
  %v43 = vld [vmem:[%s1 + $0x20] sm:$0xf]
  %v44 = vld [vmem:[%s1 + $0x24] sm:$0xf]
  %v45 = vld [vmem:[%s1 + $0x28] sm:$0xf]
  %v46 = vld [vmem:[%s1 + $0x2c] sm:$0xf]
  %v47 = vld [vmem:[%s1 + $0x30] sm:$0xf]
  %v48 = vld [vmem:[%s1 + $0x34] sm:$0xf]
  %v49 = vld [vmem:[%s1 + $0x38] sm:$0xf]
  %v50 = vld [vmem:[%s1 + $0x3c] sm:$0xf]
  %v67 = vunpack.c.l.b16 %v35
  %v68 = vunpack.c.l.b16 %v36
  %v69 = vunpack.c.l.b16 %v37
  %v70 = vunpack.c.l.b16 %v38
  %v71 = vunpack.c.l.b16 %v39
  %v72 = vunpack.c.l.b16 %v40
  %v73 = vunpack.c.l.b16 %v41
  %v74 = vunpack.c.l.b16 %v42
  %v75 = vunpack.c.l.b16 %v43
  %v76 = vunpack.c.l.b16 %v44
  %v77 = vunpack.c.l.b16 %v45
  %v78 = vunpack.c.l.b16 %v46
  %v79 = vunpack.c.l.b16 %v47
  %v80 = vunpack.c.l.b16 %v48
  %v81 = vunpack.c.l.b16 %v49
  %v82 = vunpack.c.l.b16 %v50
  %v83 = vpack.c.b16 %v68, %v67
  %v84 = vpack.c.b16 %v70, %v69
  %v85 = vpack.c.b16 %v72, %v71
  %v86 = vpack.c.b16 %v74, %v73
  %v87 = vpack.c.b16 %v76, %v75
  %v88 = vpack.c.b16 %v78, %v77
  %v89 = vpack.c.b16 %v80, %v79
  %v90 = vpack.c.b16 %v82, %v81
  %99 = vmatprep.subr.bf16.mxu0 0
  %100 = vmatpush1.bf16.msra.mxu0 %v83
  %101 = vmatprep.subr.bf16.mxu0 0
  %102 = vmatpush1.bf16.msra.mxu0 %v84
  %103 = vmatprep.subr.bf16.mxu0 0
  %104 = vmatpush1.bf16.msra.mxu0 %v85
  %105 = vmatprep.subr.bf16.mxu0 0
  %106 = vmatpush1.bf16.msra.mxu0 %v86
  %107 = vmatprep.subr.bf16.mxu0 0
  %108 = vmatpush1.bf16.msra.mxu0 %v87
  %109 = vmatprep.subr.bf16.mxu0 0
  %110 = vmatpush1.bf16.msra.mxu0 %v88
  %111 = vmatprep.subr.bf16.mxu0 0
  %112 = vmatpush1.bf16.msra.mxu0 %v89
  %113 = vmatprep.subr.bf16.mxu0 0
  %114 = vmatpush1.bf16.msra.mxu0 %v90
  %115 = vmatprep.subr.bf16.mxu0 0
  %116 = vmatpush1.bf16.msra.mxu0 0
  %117 = vmatprep.subr.bf16.mxu0 0
  %118 = vmatpush1.bf16.msra.mxu0 0
  %119 = vmatprep.subr.bf16.mxu0 0
  %120 = vmatpush1.bf16.msra.mxu0 0
  %121 = vmatprep.subr.bf16.mxu0 0
  %122 = vmatpush1.bf16.msra.mxu0 0
  %123 = vmatprep.subr.bf16.mxu0 0
  %124 = vmatpush1.bf16.msra.mxu0 0
  %125 = vmatprep.subr.bf16.mxu0 0
  %126 = vmatpush1.bf16.msra.mxu0 0
  %127 = vmatprep.subr.bf16.mxu0 0
  %128 = vmatpush1.bf16.msra.mxu0 0
  %129 = vmatprep.subr.bf16.mxu0 0
  %130 = vmatpush1.bf16.msra.mxu0 0
  %131 = vmatprep.mubr.bf16.mxu0 0
  %132 = vmatmul.mubr.bf16.gmra.mrb[0].mxu0 %v34
  %v133 = vpop.f32.mrb[0].mxu0
  %v134 = vadd.f32 0.0, %v133
  %v135 = vpop.f32.mrb[0].mxu0
  %v136 = vpop.f32.mrb[0].mxu0
  %v137 = vadd.f32 0.0, %v136
  %v138 = vpop.f32.mrb[0].mxu0
  %139 = vdwg.mxu0
  %v140 = vadd.f32 %v30, %v134
  %v141 = vadd.f32 %v31, %v137
  %142 = vst [vmem:[#allocation2] sm:$0xff] %v140
  %143 = vst [vmem:[#allocation2 + $0x8] sm:$0xff] %v141
  // Predicated region
  $region30: #{_device_forward.32} parent=0 // pred_check
    %p144 = pneg %p24
  $region31: #{_device_forward.32} parent=0 // pred_check_branch
    %146 = sbr.rel (%p144) target = $region33
  $region32: #{_device_forward.32} parent=0 // pred_region
    %v147 = vld [vmem:[#allocation2] sm:$0xff]
    %v148 = vld [vmem:[#allocation2 + $0x8] sm:$0xff]
    %v149 = vld [vmem:[%s2] sm:$0x1]
    %v151 = vlaneseq
    %v152 = vshrl.u32 %v151, 7
    %v153 = vsub.s32 0, %v152
    %v154 = vrot.slane %v149, %v153
    %v156 = vadd.f32 %v147, %v154
    %v157 = vadd.f32 %v148, %v154
    %v158 = vld [vmem:[%s3] sm:$0xff]
    %v159 = vld [vmem:[%s3 + $0x8] sm:$0xff]
    %v160 = vadd.f32 %v156, %v158
    %v161 = vadd.f32 %v157, %v159
    %162 = vadd.xlane.f32.xlu0 %v160
    %v163 = vpop.xlane.xlu0 %162
    %164 = vadd.xlane.f32.xlu0 %v161
    %v165 = vpop.xlane.xlu0 %164
    %v166 = vmul.f32 %v163, 0.0078125
    %v167 = vmul.f32 %v165, 0.0078125
    %v168 = vsub.f32 %v160, %v166
    %v169 = vsub.f32 %v161, %v167
    %v170 = vmul.f32 %v168, %v168
    %v171 = vmul.f32 %v169, %v169
    %172 = vadd.xlane.f32.xlu0 %v170
    %v173 = vpop.xlane.xlu0 %172
    %174 = vadd.xlane.f32.xlu0 %v171
    %v175 = vpop.xlane.xlu0 %174
    %v176 = vmul.f32 %v173, 0.0078125
    %v177 = vmul.f32 %v175, 0.0078125
    %v178 = vadd.f32 %v176, 1e-05
    %v179 = vadd.f32 %v177, 1e-05
    %v180 = vrsqrt.pop %v178
    %v181 = vrsqrt.pop %v179
    %v182 = vmul.f32 %v168, %v180
    %v183 = vmul.f32 %v169, %v181
    %v184 = vld [vmem:[%s4] sm:$0x1]
    %v186 = vlaneseq
    %v187 = vshrl.u32 %v186, 7
    %v188 = vsub.s32 0, %v187
    %v189 = vrot.slane %v184, %v188
    %v191 = vmul.f32 %v182, %v189
    %v192 = vmul.f32 %v183, %v189
    %v193 = vld [vmem:[%s5] sm:$0x1]
    %v195 = vlaneseq
    %v196 = vshrl.u32 %v195, 7
    %v197 = vsub.s32 0, %v196
    %v198 = vrot.slane %v193, %v197
    %v200 = vadd.f32 %v191, %v198
    %v201 = vadd.f32 %v192, %v198
    %202 = vst [vmem:[%s6] sm:$0xff] %v200
    %203 = vst [vmem:[%s6 + $0x8] sm:$0xff] %v201
  $region33: #{_device_forward.32} parent=0 // pred_fallthru
    _
  // Predicated region
  $region34: #{_device_forward.32} parent=0 // pred_check
    _
  $region35: #{_device_forward.32} parent=0 // pred_check_branch
    %205 = sbr.rel (0) target = $region37
  $region36: #{_device_forward.32} parent=0 // pred_region
    _
  $region37: #{_device_forward.32} parent=0 // pred_fallthru
    _
  // Predicated region
  $region38: #{_device_forward.32} parent=0 // pred_check
    _
  $region39: #{_device_forward.32} parent=0 // pred_check_branch
    %207 = sbr.rel (0) target = $region41
  $region40: #{_device_forward.32} parent=0 // pred_region
    _
  $region41: #{_device_forward.32} parent=0 // pred_fallthru
    _

// kernel: _device_forward.31
$region0: #{_device_forward.31}
  #allocation0 [shape = 'u32[]', space=smem, size = 0x4, offset = 0x4, fixed_abs, tag = 'smem constant byte address 0x4 - core index']
  #allocation1 [shape = 'u32[144,128]{1,0:T(1,128)}', space=vmem, size = 0x12000, scoped, tag = 'internal scratch']
  %s0 = inlined_call_operand.vmem [shape: f32[4,1,3], index: 0, kind: input, shape index: {}]
  %s1 = inlined_call_operand.vmem [shape: f32[4,3,128], index: 1, kind: input, shape index: {}]
  %s2 = inlined_call_operand.vmem [shape: f32[4,3,128], index: 2, kind: input, shape index: {}]
  %s3 = inlined_call_operand.vmem [shape: f32[4,3,128], index: 3, kind: input, shape index: {}]
  %s4 = inlined_call_operand.vmem [shape: f32[4,3,128], index: 4, kind: output, shape index: {0}]
  %s5 = inlined_call_operand.vmem [shape: f32[4,3,3], index: 5, kind: output, shape index: {1}]
  %6 = xla_tuple %s4, %s5
  %s7 = sld [smem:[#allocation0]]
  $region57: #{_device_forward.31} parent=0
    _
  %s9 = ssub.s32 1, %s7
  %s10 = scalar_select 0, %s9, %s7
  loop: start=0, step=1, limit=6
  $region2: #{_device_forward.31} parent=0 // loop_pre_header
    _
  $region3: #{_device_forward.31} parent=0 // loop_header
    %s12 = sphi 0, %s16
    %p13 = scmp.ge.s32.totalorder %s12, 6
    %s22 = sphi 0, %s24
    %s25 = sphi 0, %s22
    %s26 = sphi 0, %s25
    %s42 = sphi 0, %s26
    %s48 = sphi 0, %s50
    %s51 = sphi 0, %s48
    %s52 = sphi 0, %s51
    %s68 = sphi 0, %s52
    %s74 = sphi 0, %s76
    %s77 = sphi 0, %s74
    %s78 = sphi 0, %s77
    %s94 = sphi 0, %s78
    %s100 = sphi 0, %s102
    %s103 = sphi 0, %s100
    %s104 = sphi 0, %s103
    %s120 = sphi 0, %s104
    %s126 = sphi 0, %s128
    %s129 = sphi 0, %s126
    %s130 = sphi 0, %s129
    %s146 = sphi 0, %s130
    %s152 = sphi 0, %s154
    %s155 = sphi 0, %s152
    %s156 = sphi 0, %s155
    %s172 = sphi 0, %s156
  $region4: #{_device_forward.31} parent=0 // loop_header_branch
    %15 = sbr.rel (%p13) target = $region8
  $region5: #{_device_forward.31} parent=0 // loop_body
    %s17 = ssub.s32 %s12, 1
    %s18 = ssub.s32 %s12, 2
    %s19 = sadd.s32 %s12, 1
    %s20 = ssub.s32 %s12, %s19
    %p21 = scmp.eq.s32.totalorder %s20, 0
    %s23 = sadd.s32 %s22, 1
    %s24 = scalar_select %p21, %s22, %s23
    %p27 = pneg %p21
    %p28 = scmp.eq.s32.totalorder %s12, 3
    %p29 = por %p27, %p28
    %p30 = scmp.ne.s32.totalorder %s22, %s25
    %p31 = scmp.eq.s32.totalorder %s12, 0
    %p32 = por %p30, %p31
    %p33 = scmp.ne.s32.totalorder %s22, %s25
    %p34 = scmp.eq.s32.totalorder %s17, 3
    %p35 = por %p33, %p34
    %p36 = scmp.ne.s32.totalorder %s25, %s26
    %p37 = scmp.eq.s32.totalorder %s17, 0
    %p38 = por %p36, %p37
    %p39 = scmp.ne.s32.totalorder %s25, %s26
    %p40 = scmp.eq.s32.totalorder %s18, 3
    %p41 = por %p39, %p40
    %p43 = scmp.ne.s32.totalorder %s26, %s42
    %p44 = scmp.eq.s32.totalorder %s18, 0
    %p45 = por %p43, %p44
    %s46 = ssub.s32 %s12, %s19
    %p47 = scmp.eq.s32.totalorder %s46, 0
    %s49 = sadd.s32 %s48, 1
    %s50 = scalar_select %p47, %s48, %s49
    %p53 = pneg %p47
    %p54 = scmp.eq.s32.totalorder %s12, 3
    %p55 = por %p53, %p54
    %p56 = scmp.ne.s32.totalorder %s48, %s51
    %p57 = scmp.eq.s32.totalorder %s12, 0
    %p58 = por %p56, %p57
    %p59 = scmp.ne.s32.totalorder %s48, %s51
    %p60 = scmp.eq.s32.totalorder %s17, 3
    %p61 = por %p59, %p60
    %p62 = scmp.ne.s32.totalorder %s51, %s52
    %p63 = scmp.eq.s32.totalorder %s17, 0
    %p64 = por %p62, %p63
    %p65 = scmp.ne.s32.totalorder %s51, %s52
    %p66 = scmp.eq.s32.totalorder %s18, 3
    %p67 = por %p65, %p66
    %p69 = scmp.ne.s32.totalorder %s52, %s68
    %p70 = scmp.eq.s32.totalorder %s18, 0
    %p71 = por %p69, %p70
    %s72 = ssub.s32 %s12, %s19
    %p73 = scmp.eq.s32.totalorder %s72, 0
    %s75 = sadd.s32 %s74, 1
    %s76 = scalar_select %p73, %s74, %s75
    %p79 = pneg %p73
    %p80 = scmp.eq.s32.totalorder %s12, 3
    %p81 = por %p79, %p80
    %p82 = scmp.ne.s32.totalorder %s74, %s77
    %p83 = scmp.eq.s32.totalorder %s12, 0
    %p84 = por %p82, %p83
    %p85 = scmp.ne.s32.totalorder %s74, %s77
    %p86 = scmp.eq.s32.totalorder %s17, 3
    %p87 = por %p85, %p86
    %p88 = scmp.ne.s32.totalorder %s77, %s78
    %p89 = scmp.eq.s32.totalorder %s17, 0
    %p90 = por %p88, %p89
    %p91 = scmp.ne.s32.totalorder %s77, %s78
    %p92 = scmp.eq.s32.totalorder %s18, 3
    %p93 = por %p91, %p92
    %p95 = scmp.ne.s32.totalorder %s78, %s94
    %p96 = scmp.eq.s32.totalorder %s18, 0
    %p97 = por %p95, %p96
    %s98 = ssub.s32 %s12, %s19
    %p99 = scmp.eq.s32.totalorder %s98, 0
    %s101 = sadd.s32 %s100, 1
    %s102 = scalar_select %p99, %s100, %s101
    %p105 = pneg %p99
    %p106 = scmp.eq.s32.totalorder %s12, 3
    %p107 = por %p105, %p106
    %p108 = scmp.ne.s32.totalorder %s100, %s103
    %p109 = scmp.eq.s32.totalorder %s12, 0
    %p110 = por %p108, %p109
    %p111 = scmp.ne.s32.totalorder %s100, %s103
    %p112 = scmp.eq.s32.totalorder %s17, 3
    %p113 = por %p111, %p112
    %p114 = scmp.ne.s32.totalorder %s103, %s104
    %p115 = scmp.eq.s32.totalorder %s17, 0
    %p116 = por %p114, %p115
    %p117 = scmp.ne.s32.totalorder %s103, %s104
    %p118 = scmp.eq.s32.totalorder %s18, 3
    %p119 = por %p117, %p118
    %p121 = scmp.ne.s32.totalorder %s104, %s120
    %p122 = scmp.eq.s32.totalorder %s18, 0
    %p123 = por %p121, %p122
    %s124 = ssub.s32 %s12, %s19
    %p125 = scmp.eq.s32.totalorder %s124, 0
    %s127 = sadd.s32 %s126, 1
    %s128 = scalar_select %p125, %s126, %s127
    %p131 = pneg %p125
    %p132 = scmp.eq.s32.totalorder %s12, 3
    %p133 = por %p131, %p132
    %p134 = scmp.ne.s32.totalorder %s126, %s129
    %p135 = scmp.eq.s32.totalorder %s12, 0
    %p136 = por %p134, %p135
    %p137 = scmp.ne.s32.totalorder %s126, %s129
    %p138 = scmp.eq.s32.totalorder %s17, 3
    %p139 = por %p137, %p138
    %p140 = scmp.ne.s32.totalorder %s129, %s130
    %p141 = scmp.eq.s32.totalorder %s17, 0
    %p142 = por %p140, %p141
    %p143 = scmp.ne.s32.totalorder %s129, %s130
    %p144 = scmp.eq.s32.totalorder %s18, 3
    %p145 = por %p143, %p144
    %p147 = scmp.ne.s32.totalorder %s130, %s146
    %p148 = scmp.eq.s32.totalorder %s18, 0
    %p149 = por %p147, %p148
    %s150 = ssub.s32 %s12, %s19
    %p151 = scmp.eq.s32.totalorder %s150, 0
    %s153 = sadd.s32 %s152, 1
    %s154 = scalar_select %p151, %s152, %s153
    %p157 = pneg %p151
    %p158 = scmp.eq.s32.totalorder %s12, 3
    %p159 = por %p157, %p158
    %p160 = scmp.ne.s32.totalorder %s152, %s155
    %p161 = scmp.eq.s32.totalorder %s12, 0
    %p162 = por %p160, %p161
    %p163 = scmp.ne.s32.totalorder %s152, %s155
    %p164 = scmp.eq.s32.totalorder %s17, 3
    %p165 = por %p163, %p164
    %p166 = scmp.ne.s32.totalorder %s155, %s156
    %p167 = scmp.eq.s32.totalorder %s17, 0
    %p168 = por %p166, %p167
    %p169 = scmp.ne.s32.totalorder %s155, %s156
    %p170 = scmp.eq.s32.totalorder %s18, 3
    %p171 = por %p169, %p170
    %p173 = scmp.ne.s32.totalorder %s156, %s172
    %p174 = scmp.eq.s32.totalorder %s18, 0
    %p175 = por %p173, %p174
    %p176 = scmp.le.s32.totalorder 1, %s12
    %p177 = scmp.lt.s32.totalorder %s12, 5
    %p178 = pnand %p176, %p177
    %p179 = pneg %p178
    // Predicated region
    $region9: #{_device_forward.31} parent=5 // pred_check
      _
    $region10: #{_device_forward.31} parent=5 // pred_check_branch
      %181 = sbr.rel (%p178) target = $region12
    $region11: #{_device_forward.31} parent=5 // pred_region
      %s182 = ssub.s32 %s12, 1
    $region12: #{_device_forward.31} parent=5 // pred_fallthru
      _
    %p183 = scmp.lt.s32.totalorder %s12, 4
    // Predicated region
    $region13: #{_device_forward.31} parent=5 // pred_check
      %p184 = pneg %p183
    $region14: #{_device_forward.31} parent=5 // pred_check_branch
      %186 = sbr.rel (%p184) target = $region16
    $region15: #{_device_forward.31} parent=5 // pred_region
      // Predicated region
      $region17: #{_device_forward.31} parent=15 // pred_check
        %p187 = pneg %p32
      $region18: #{_device_forward.31} parent=15 // pred_check_branch
        %189 = sbr.rel (%p187) target = $region20
      $region19: #{_device_forward.31} parent=15 // pred_region
        %p190 = scmp.lt.s32.totalorder %s12, 3
        %s191 = scalar_select %p190, %s12, 3
        %s192 = scalar_lea.vmem %s0, %s191
      $region20: #{_device_forward.31} parent=15 // pred_fallthru
        _
      // Predicated region
      $region21: #{_device_forward.31} parent=15 // pred_check
        %p193 = pneg %p58
      $region22: #{_device_forward.31} parent=15 // pred_check_branch
        %195 = sbr.rel (%p193) target = $region24
      $region23: #{_device_forward.31} parent=15 // pred_region
        %p196 = scmp.lt.s32.totalorder %s12, 3
        %s197 = scalar_select %p196, %s12, 3
        %s198 = smul.addr %s197, 4
        %s199 = scalar_lea.vmem %s1, %s198
      $region24: #{_device_forward.31} parent=15 // pred_fallthru
        _
      // Predicated region
      $region25: #{_device_forward.31} parent=15 // pred_check
        %p200 = pneg %p84
      $region26: #{_device_forward.31} parent=15 // pred_check_branch
        %202 = sbr.rel (%p200) target = $region28
      $region27: #{_device_forward.31} parent=15 // pred_region
        %p203 = scmp.lt.s32.totalorder %s12, 3
        %s204 = scalar_select %p203, %s12, 3
        %s205 = smul.addr %s204, 4
        %s206 = scalar_lea.vmem %s2, %s205
      $region28: #{_device_forward.31} parent=15 // pred_fallthru
        _
      // Predicated region
      $region29: #{_device_forward.31} parent=15 // pred_check
        %p207 = pneg %p110
      $region30: #{_device_forward.31} parent=15 // pred_check_branch
        %209 = sbr.rel (%p207) target = $region32
      $region31: #{_device_forward.31} parent=15 // pred_region
        %p210 = scmp.lt.s32.totalorder %s12, 3
        %s211 = scalar_select %p210, %s12, 3
        %s212 = smul.addr %s211, 4
        %s213 = scalar_lea.vmem %s3, %s212
      $region32: #{_device_forward.31} parent=15 // pred_fallthru
        _
    $region16: #{_device_forward.31} parent=5 // pred_fallthru
      _
    %p214 = scmp.le.s32.totalorder 1, %s12
    %p215 = scmp.lt.s32.totalorder %s12, 5
    %p216 = pnand %p214, %p215
    %p217 = pneg %p216
    // Predicated region
    $region33: #{_device_forward.31} parent=5 // pred_check
      _
    $region34: #{_device_forward.31} parent=5 // pred_check_branch
      %219 = sbr.rel (%p216) target = $region36
    $region35: #{_device_forward.31} parent=5 // pred_region
      %s220 = ssub.s32 %s12, 1
      %p221 = scmp.lt.s32.totalorder %s17, 3
      %s222 = scalar_select %p221, %s17, 3
      %s223 = scalar_lea.vmem %s0, %s222
      %p224 = pneg %p38
      %p225 = pneg %p35
      %p226 = scmp.lt.s32.totalorder %s17, 3
      %s227 = scalar_select %p226, %s17, 3
      %s228 = smul.addr %s227, 4
      %s229 = scalar_lea.vmem %s1, %s228
      %p230 = pneg %p64
      %p231 = pneg %p61
      %p232 = scmp.lt.s32.totalorder %s17, 3
      %s233 = scalar_select %p232, %s17, 3
      %s234 = smul.addr %s233, 4
      %s235 = scalar_lea.vmem %s2, %s234
      %p236 = pneg %p90
      %p237 = pneg %p87
      %p238 = scmp.lt.s32.totalorder %s17, 3
      %s239 = scalar_select %p238, %s17, 3
      %s240 = smul.addr %s239, 4
      %s241 = scalar_lea.vmem %s3, %s240
      %p242 = pneg %p116
      %p243 = pneg %p113
      %p244 = pneg %p142
      %p245 = pneg %p139
      %p246 = scmp.lt.s32.totalorder %s17, 3
      %s247 = scalar_select %p246, %s17, 3
      %s248 = smul.addr %s247, 4
      %s249 = scalar_lea.vmem %s4, %s248
      %p250 = pneg %p168
      %p251 = pneg %p165
      %p252 = scmp.lt.s32.totalorder %s17, 3
      %s253 = scalar_select %p252, %s17, 3
      %s254 = smul.addr %s253, 4
      %s255 = scalar_lea.vmem %s5, %s254
      %p256 = scmp.lt.s32.totalorder %s17, 3
      %s257 = scalar_select %p256, %s17, 3
      %s258 = scalar_lea.vmem %s0, %s257
      %p259 = scmp.lt.s32.totalorder %s17, 3
      %s260 = scalar_select %p259, %s17, 3
      %s261 = smul.addr %s260, 4
      %s262 = scalar_lea.vmem %s1, %s261
      %p263 = scmp.lt.s32.totalorder %s17, 3
      %s264 = scalar_select %p263, %s17, 3
      %s265 = smul.addr %s264, 4
      %s266 = scalar_lea.vmem %s2, %s265
      %p267 = scmp.lt.s32.totalorder %s17, 3
      %s268 = scalar_select %p267, %s17, 3
      %s269 = smul.addr %s268, 4
      %s270 = scalar_lea.vmem %s3, %s269
      %p271 = scmp.lt.s32.totalorder %s17, 3
      %s272 = scalar_select %p271, %s17, 3
      %s273 = smul.addr %s272, 4
      %s274 = scalar_lea.vmem %s4, %s273
      %p275 = scmp.lt.s32.totalorder %s17, 3
      %s276 = scalar_select %p275, %s17, 3
      %s277 = smul.addr %s276, 4
      %s278 = scalar_lea.vmem %s5, %s277
      %v280 = vld [vmem:[%s258] sm:$0x1]
      %v281 = vld [vmem:[%s262] sm:$0x7]
      %v282 = vld [vmem:[%s266] sm:$0x7]
      %v283 = vld [vmem:[%s270] sm:$0x7]
      %v284 = vpack.c.bf16 %v281, %v281
      %v285 = vpack.c.bf16 %v282, %v282
      %vm286 = vcmask 261120
      %v288 = vsel %vm286, %v284, 0
      %v291 = vsel %vm286, %v285, 0
      %293 = vmatprep.subr.bf16.mxu0 0
      %294 = vmatpush1.bf16.xpose.msra.mxu0 %v291
      %295 = vmatprep.subr.bf16.mxu0 0
      %296 = vmatpush1.bf16.xpose.msra.mxu0 0
      %297 = vmatprep.subr.bf16.mxu0 0
      %298 = vmatpush1.bf16.xpose.msra.mxu0 0
      %299 = vmatprep.subr.bf16.mxu0 0
      %300 = vmatpush1.bf16.xpose.msra.mxu0 0
      %301 = vmatprep.subr.bf16.mxu0 0
      %302 = vmatpush1.bf16.xpose.msra.mxu0 0
      %303 = vmatprep.subr.bf16.mxu0 0
      %304 = vmatpush1.bf16.xpose.msra.mxu0 0
      %305 = vmatprep.subr.bf16.mxu0 0
      %306 = vmatpush1.bf16.xpose.msra.mxu0 0
      %307 = vmatprep.subr.bf16.mxu0 0
      %308 = vmatpush1.bf16.xpose.msra.mxu0 0
      %309 = vmatprep.subr.bf16.mxu0 0
      %310 = vmatpush1.bf16.xpose.msra.mxu0 0
      %311 = vmatprep.subr.bf16.mxu0 0
      %312 = vmatpush1.bf16.xpose.msra.mxu0 0
      %313 = vmatprep.subr.bf16.mxu0 0
      %314 = vmatpush1.bf16.xpose.msra.mxu0 0
      %315 = vmatprep.subr.bf16.mxu0 0
      %316 = vmatpush1.bf16.xpose.msra.mxu0 0
      %317 = vmatprep.subr.bf16.mxu0 0
      %318 = vmatpush1.bf16.xpose.msra.mxu0 0
      %319 = vmatprep.subr.bf16.mxu0 0
      %320 = vmatpush1.bf16.xpose.msra.mxu0 0
      %321 = vmatprep.subr.bf16.mxu0 0
      %322 = vmatpush1.bf16.xpose.msra.mxu0 0
      %323 = vmatprep.subr.bf16.mxu0 0
      %324 = vmatpush1.bf16.xpose.msra.mxu0 0
      %325 = vmatprep.mubr.bf16.mxu0 0
      %326 = vmatmul.mubr.bf16.gmra.mrb[0].mxu0 %v288
      %v327 = vpop.f32.mrb[0].mxu0
      %v328 = vadd.f32 0.0, %v327
      %v329 = vpop.f32.mrb[0].mxu0
      %v330 = vpop.f32.mrb[0].mxu0
      %v331 = vpop.f32.mrb[0].mxu0
      %332 = vdwg.mxu0
      %v333 = vmul.f32 %v328, 0.17677669
      %v335 = vlaneseq
      %v336 = vshrl.u32 %v335, 7
      %v337 = vsub.s32 0, %v336
      %v338 = vrot.slane %v280, %v337
      %v340 = vadd.f32 %v333, %v338
      %vm341 = vcmask 18432
      %v342 = vsel %vm341, %v340, -inf
      %343 = vmax.xlane.f32.xlu0 %v342
      %v344 = vpop.xlane.xlu0 %343
      %v345 = vsub.f32 %v340, %v344
      %v346 = vmul.f32 %v345, 1.442695
      %v347 = vpow.pop %v346
      %v348 = vsel %vm341, %v347, 0.0
      %349 = vadd.xlane.f32.xlu0 %v348
      %v350 = vpop.xlane.xlu0 %349
      %v351 = vrcp.pop %v350
      %v352 = vmul.f32 %v347, %v351
      %v353 = vpack.c.bf16 %v352, %v352
      %v354 = vpack.c.bf16 %v283, %v283
      %vm355 = vcmask 23552
      %v357 = vsel %vm355, %v353, 0
      %vm359 = vcmask 1040384
      %vm360 = vcmask 1041408
      %v361 = vsel %vm359, 4294967295, 65535
      %v362 = vsel %vm360, %v361, 0
      %v364 = vand.u32 %v354, %v362
      %366 = vmatprep.subr.bf16.mxu0 0
      %367 = vmatpush1.bf16.msra.mxu0 %v364
      %368 = vmatprep.subr.bf16.mxu0 0
      %369 = vmatpush1.bf16.msra.mxu0 0
      %370 = vmatprep.subr.bf16.mxu0 0
      %371 = vmatpush1.bf16.msra.mxu0 0
      %372 = vmatprep.subr.bf16.mxu0 0
      %373 = vmatpush1.bf16.msra.mxu0 0
      %374 = vmatprep.subr.bf16.mxu0 0
      %375 = vmatpush1.bf16.msra.mxu0 0
      %376 = vmatprep.subr.bf16.mxu0 0
      %377 = vmatpush1.bf16.msra.mxu0 0
      %378 = vmatprep.subr.bf16.mxu0 0
      %379 = vmatpush1.bf16.msra.mxu0 0
      %380 = vmatprep.subr.bf16.mxu0 0
      %381 = vmatpush1.bf16.msra.mxu0 0
      %382 = vmatprep.subr.bf16.mxu0 0
      %383 = vmatpush1.bf16.msra.mxu0 0
      %384 = vmatprep.subr.bf16.mxu0 0
      %385 = vmatpush1.bf16.msra.mxu0 0
      %386 = vmatprep.subr.bf16.mxu0 0
      %387 = vmatpush1.bf16.msra.mxu0 0
      %388 = vmatprep.subr.bf16.mxu0 0
      %389 = vmatpush1.bf16.msra.mxu0 0
      %390 = vmatprep.subr.bf16.mxu0 0
      %391 = vmatpush1.bf16.msra.mxu0 0
      %392 = vmatprep.subr.bf16.mxu0 0
      %393 = vmatpush1.bf16.msra.mxu0 0
      %394 = vmatprep.subr.bf16.mxu0 0
      %395 = vmatpush1.bf16.msra.mxu0 0
      %396 = vmatprep.subr.bf16.mxu0 0
      %397 = vmatpush1.bf16.msra.mxu0 0
      %398 = vmatprep.mubr.bf16.mxu0 0
      %399 = vmatmul.mubr.bf16.gmra.mrb[0].mxu0 %v357
      %v400 = vpop.f32.mrb[0].mxu0
      %v401 = vadd.f32 0.0, %v400
      %v402 = vpop.f32.mrb[0].mxu0
      %v403 = vpop.f32.mrb[0].mxu0
      %v404 = vpop.f32.mrb[0].mxu0
      %405 = vdwg.mxu0
      %v406 = vadd.f32 %v352, 0.0
      %408 = vrot.lane.b32.xlu0 %v284, 96
      %v409 = vpop.permute.xlu0 %408
      %411 = vrot.lane.b32.xlu0 %v285, 96
      %v412 = vpop.permute.xlu0 %411
      %v414 = vsel %vm286, %v409, 0
      %v417 = vsel %vm286, %v412, 0
      %419 = vmatprep.subr.bf16.mxu0 0
      %420 = vmatpush1.bf16.xpose.msra.mxu0 %v417
      %421 = vmatprep.subr.bf16.mxu0 0
      %422 = vmatpush1.bf16.xpose.msra.mxu0 0
      %423 = vmatprep.subr.bf16.mxu0 0
      %424 = vmatpush1.bf16.xpose.msra.mxu0 0
      %425 = vmatprep.subr.bf16.mxu0 0
      %426 = vmatpush1.bf16.xpose.msra.mxu0 0
      %427 = vmatprep.subr.bf16.mxu0 0
      %428 = vmatpush1.bf16.xpose.msra.mxu0 0
      %429 = vmatprep.subr.bf16.mxu0 0
      %430 = vmatpush1.bf16.xpose.msra.mxu0 0
      %431 = vmatprep.subr.bf16.mxu0 0
      %432 = vmatpush1.bf16.xpose.msra.mxu0 0
      %433 = vmatprep.subr.bf16.mxu0 0
      %434 = vmatpush1.bf16.xpose.msra.mxu0 0
      %435 = vmatprep.subr.bf16.mxu0 0
      %436 = vmatpush1.bf16.xpose.msra.mxu0 0
      %437 = vmatprep.subr.bf16.mxu0 0
      %438 = vmatpush1.bf16.xpose.msra.mxu0 0
      %439 = vmatprep.subr.bf16.mxu0 0
      %440 = vmatpush1.bf16.xpose.msra.mxu0 0
      %441 = vmatprep.subr.bf16.mxu0 0
      %442 = vmatpush1.bf16.xpose.msra.mxu0 0
      %443 = vmatprep.subr.bf16.mxu0 0
      %444 = vmatpush1.bf16.xpose.msra.mxu0 0
      %445 = vmatprep.subr.bf16.mxu0 0
      %446 = vmatpush1.bf16.xpose.msra.mxu0 0
      %447 = vmatprep.subr.bf16.mxu0 0
      %448 = vmatpush1.bf16.xpose.msra.mxu0 0
      %449 = vmatprep.subr.bf16.mxu0 0
      %450 = vmatpush1.bf16.xpose.msra.mxu0 0
      %451 = vmatprep.mubr.bf16.mxu0 0
      %452 = vmatmul.mubr.bf16.gmra.mrb[0].mxu0 %v414
      %v453 = vpop.f32.mrb[0].mxu0
      %v454 = vadd.f32 0.0, %v453
      %v455 = vpop.f32.mrb[0].mxu0
      %v456 = vpop.f32.mrb[0].mxu0
      %v457 = vpop.f32.mrb[0].mxu0
      %458 = vdwg.mxu0
      %v459 = vmul.f32 %v454, 0.17677669
      %v460 = vadd.f32 %v459, %v338
      %v461 = vsel %vm341, %v460, -inf
      %462 = vmax.xlane.f32.xlu0 %v461
      %v463 = vpop.xlane.xlu0 %462
      %v464 = vsub.f32 %v460, %v463
      %v465 = vmul.f32 %v464, 1.442695
      %v466 = vpow.pop %v465
      %v467 = vsel %vm341, %v466, 0.0
      %468 = vadd.xlane.f32.xlu0 %v467
      %v469 = vpop.xlane.xlu0 %468
      %v470 = vrcp.pop %v469
      %v471 = vmul.f32 %v466, %v470
      %v472 = vpack.c.bf16 %v471, %v471
      %474 = vrot.lane.b32.xlu0 %v354, 96
      %v475 = vpop.permute.xlu0 %474
      %v477 = vsel %vm355, %v472, 0
      %v480 = vand.u32 %v475, %v362
      %482 = vmatprep.subr.bf16.mxu0 0
      %483 = vmatpush1.bf16.msra.mxu0 %v480
      %484 = vmatprep.subr.bf16.mxu0 0
      %485 = vmatpush1.bf16.msra.mxu0 0
      %486 = vmatprep.subr.bf16.mxu0 0
      %487 = vmatpush1.bf16.msra.mxu0 0
      %488 = vmatprep.subr.bf16.mxu0 0
      %489 = vmatpush1.bf16.msra.mxu0 0
      %490 = vmatprep.subr.bf16.mxu0 0
      %491 = vmatpush1.bf16.msra.mxu0 0
      %492 = vmatprep.subr.bf16.mxu0 0
      %493 = vmatpush1.bf16.msra.mxu0 0
      %494 = vmatprep.subr.bf16.mxu0 0
      %495 = vmatpush1.bf16.msra.mxu0 0
      %496 = vmatprep.subr.bf16.mxu0 0
      %497 = vmatpush1.bf16.msra.mxu0 0
      %498 = vmatprep.subr.bf16.mxu0 0
      %499 = vmatpush1.bf16.msra.mxu0 0
      %500 = vmatprep.subr.bf16.mxu0 0
      %501 = vmatpush1.bf16.msra.mxu0 0
      %502 = vmatprep.subr.bf16.mxu0 0
      %503 = vmatpush1.bf16.msra.mxu0 0
      %504 = vmatprep.subr.bf16.mxu0 0
      %505 = vmatpush1.bf16.msra.mxu0 0
      %506 = vmatprep.subr.bf16.mxu0 0
      %507 = vmatpush1.bf16.msra.mxu0 0
      %508 = vmatprep.subr.bf16.mxu0 0
      %509 = vmatpush1.bf16.msra.mxu0 0
      %510 = vmatprep.subr.bf16.mxu0 0
      %511 = vmatpush1.bf16.msra.mxu0 0
      %512 = vmatprep.subr.bf16.mxu0 0
      %513 = vmatpush1.bf16.msra.mxu0 0
      %514 = vmatprep.mubr.bf16.mxu0 0
      %515 = vmatmul.mubr.bf16.gmra.mrb[0].mxu0 %v477
      %v516 = vpop.f32.mrb[0].mxu0
      %v517 = vadd.f32 0.0, %v516
      %v518 = vpop.f32.mrb[0].mxu0
      %v519 = vpop.f32.mrb[0].mxu0
      %v520 = vpop.f32.mrb[0].mxu0
      %521 = vdwg.mxu0
      %v522 = vadd.f32 %v406, %v471
      %523 = vrot.lane.b32.xlu0 %v284, 64
      %v524 = vpop.permute.xlu0 %523
      %525 = vrot.lane.b32.xlu0 %v285, 64
      %v526 = vpop.permute.xlu0 %525
      %v528 = vsel %vm286, %v524, 0
      %v531 = vsel %vm286, %v526, 0
      %533 = vmatprep.subr.bf16.mxu0 0
      %534 = vmatpush1.bf16.xpose.msra.mxu0 %v531
      %535 = vmatprep.subr.bf16.mxu0 0
      %536 = vmatpush1.bf16.xpose.msra.mxu0 0
      %537 = vmatprep.subr.bf16.mxu0 0
      %538 = vmatpush1.bf16.xpose.msra.mxu0 0
      %539 = vmatprep.subr.bf16.mxu0 0
      %540 = vmatpush1.bf16.xpose.msra.mxu0 0
      %541 = vmatprep.subr.bf16.mxu0 0
      %542 = vmatpush1.bf16.xpose.msra.mxu0 0
      %543 = vmatprep.subr.bf16.mxu0 0
      %544 = vmatpush1.bf16.xpose.msra.mxu0 0
      %545 = vmatprep.subr.bf16.mxu0 0
      %546 = vmatpush1.bf16.xpose.msra.mxu0 0
      %547 = vmatprep.subr.bf16.mxu0 0
      %548 = vmatpush1.bf16.xpose.msra.mxu0 0
      %549 = vmatprep.subr.bf16.mxu0 0
      %550 = vmatpush1.bf16.xpose.msra.mxu0 0
      %551 = vmatprep.subr.bf16.mxu0 0
      %552 = vmatpush1.bf16.xpose.msra.mxu0 0
      %553 = vmatprep.subr.bf16.mxu0 0
      %554 = vmatpush1.bf16.xpose.msra.mxu0 0
      %555 = vmatprep.subr.bf16.mxu0 0
      %556 = vmatpush1.bf16.xpose.msra.mxu0 0
      %557 = vmatprep.subr.bf16.mxu0 0
      %558 = vmatpush1.bf16.xpose.msra.mxu0 0
      %559 = vmatprep.subr.bf16.mxu0 0
      %560 = vmatpush1.bf16.xpose.msra.mxu0 0
      %561 = vmatprep.subr.bf16.mxu0 0
      %562 = vmatpush1.bf16.xpose.msra.mxu0 0
      %563 = vmatprep.subr.bf16.mxu0 0
      %564 = vmatpush1.bf16.xpose.msra.mxu0 0
      %565 = vmatprep.mubr.bf16.mxu0 0
      %566 = vmatmul.mubr.bf16.gmra.mrb[0].mxu0 %v528
      %v567 = vpop.f32.mrb[0].mxu0
      %v568 = vadd.f32 0.0, %v567
      %v569 = vpop.f32.mrb[0].mxu0
      %v570 = vpop.f32.mrb[0].mxu0
      %v571 = vpop.f32.mrb[0].mxu0
      %572 = vdwg.mxu0
      %v573 = vmul.f32 %v568, 0.17677669
      %v574 = vadd.f32 %v573, %v338
      %v575 = vsel %vm341, %v574, -inf
      %576 = vmax.xlane.f32.xlu0 %v575
      %v577 = vpop.xlane.xlu0 %576
      %v578 = vsub.f32 %v574, %v577
      %v579 = vmul.f32 %v578, 1.442695
      %v580 = vpow.pop %v579
      %v581 = vsel %vm341, %v580, 0.0
      %582 = vadd.xlane.f32.xlu0 %v581
      %v583 = vpop.xlane.xlu0 %582
      %v584 = vrcp.pop %v583
      %v585 = vmul.f32 %v580, %v584
      %v586 = vpack.c.bf16 %v585, %v585
      %587 = vrot.lane.b32.xlu0 %v354, 64
      %v588 = vpop.permute.xlu0 %587
      %v590 = vsel %vm355, %v586, 0
      %v593 = vand.u32 %v588, %v362
      %595 = vmatprep.subr.bf16.mxu0 0
      %596 = vmatpush1.bf16.msra.mxu0 %v593
      %597 = vmatprep.subr.bf16.mxu0 0
      %598 = vmatpush1.bf16.msra.mxu0 0
      %599 = vmatprep.subr.bf16.mxu0 0
      %600 = vmatpush1.bf16.msra.mxu0 0
      %601 = vmatprep.subr.bf16.mxu0 0
      %602 = vmatpush1.bf16.msra.mxu0 0
      %603 = vmatprep.subr.bf16.mxu0 0
      %604 = vmatpush1.bf16.msra.mxu0 0
      %605 = vmatprep.subr.bf16.mxu0 0
      %606 = vmatpush1.bf16.msra.mxu0 0
      %607 = vmatprep.subr.bf16.mxu0 0
      %608 = vmatpush1.bf16.msra.mxu0 0
      %609 = vmatprep.subr.bf16.mxu0 0
      %610 = vmatpush1.bf16.msra.mxu0 0
      %611 = vmatprep.subr.bf16.mxu0 0
      %612 = vmatpush1.bf16.msra.mxu0 0
      %613 = vmatprep.subr.bf16.mxu0 0
      %614 = vmatpush1.bf16.msra.mxu0 0
      %615 = vmatprep.subr.bf16.mxu0 0
      %616 = vmatpush1.bf16.msra.mxu0 0
      %617 = vmatprep.subr.bf16.mxu0 0
      %618 = vmatpush1.bf16.msra.mxu0 0
      %619 = vmatprep.subr.bf16.mxu0 0
      %620 = vmatpush1.bf16.msra.mxu0 0
      %621 = vmatprep.subr.bf16.mxu0 0
      %622 = vmatpush1.bf16.msra.mxu0 0
      %623 = vmatprep.subr.bf16.mxu0 0
      %624 = vmatpush1.bf16.msra.mxu0 0
      %625 = vmatprep.subr.bf16.mxu0 0
      %626 = vmatpush1.bf16.msra.mxu0 0
      %627 = vmatprep.mubr.bf16.mxu0 0
      %628 = vmatmul.mubr.bf16.gmra.mrb[0].mxu0 %v590
      %v629 = vpop.f32.mrb[0].mxu0
      %v630 = vadd.f32 0.0, %v629
      %v631 = vpop.f32.mrb[0].mxu0
      %v632 = vpop.f32.mrb[0].mxu0
      %v633 = vpop.f32.mrb[0].mxu0
      %634 = vdwg.mxu0
      %v635 = vadd.f32 %v522, %v585
      %636 = vrot.lane.b32.xlu0 %v284, 32
      %v637 = vpop.permute.xlu0 %636
      %638 = vrot.lane.b32.xlu0 %v285, 32
      %v639 = vpop.permute.xlu0 %638
      %v641 = vsel %vm286, %v637, 0
      %v644 = vsel %vm286, %v639, 0
      %646 = vmatprep.subr.bf16.mxu0 0
      %647 = vmatpush1.bf16.xpose.msra.mxu0 %v644
      %648 = vmatprep.subr.bf16.mxu0 0
      %649 = vmatpush1.bf16.xpose.msra.mxu0 0
      %650 = vmatprep.subr.bf16.mxu0 0
      %651 = vmatpush1.bf16.xpose.msra.mxu0 0
      %652 = vmatprep.subr.bf16.mxu0 0
      %653 = vmatpush1.bf16.xpose.msra.mxu0 0
      %654 = vmatprep.subr.bf16.mxu0 0
      %655 = vmatpush1.bf16.xpose.msra.mxu0 0
      %656 = vmatprep.subr.bf16.mxu0 0
      %657 = vmatpush1.bf16.xpose.msra.mxu0 0
      %658 = vmatprep.subr.bf16.mxu0 0
      %659 = vmatpush1.bf16.xpose.msra.mxu0 0
      %660 = vmatprep.subr.bf16.mxu0 0
      %661 = vmatpush1.bf16.xpose.msra.mxu0 0
      %662 = vmatprep.subr.bf16.mxu0 0
      %663 = vmatpush1.bf16.xpose.msra.mxu0 0
      %664 = vmatprep.subr.bf16.mxu0 0
      %665 = vmatpush1.bf16.xpose.msra.mxu0 0
      %666 = vmatprep.subr.bf16.mxu0 0
      %667 = vmatpush1.bf16.xpose.msra.mxu0 0
      %668 = vmatprep.subr.bf16.mxu0 0
      %669 = vmatpush1.bf16.xpose.msra.mxu0 0
      %670 = vmatprep.subr.bf16.mxu0 0
      %671 = vmatpush1.bf16.xpose.msra.mxu0 0
      %672 = vmatprep.subr.bf16.mxu0 0
      %673 = vmatpush1.bf16.xpose.msra.mxu0 0
      %674 = vmatprep.subr.bf16.mxu0 0
      %675 = vmatpush1.bf16.xpose.msra.mxu0 0
      %676 = vmatprep.subr.bf16.mxu0 0
      %677 = vmatpush1.bf16.xpose.msra.mxu0 0
      %678 = vmatprep.mubr.bf16.mxu0 0
      %679 = vmatmul.mubr.bf16.gmra.mrb[0].mxu0 %v641
      %v680 = vpop.f32.mrb[0].mxu0
      %v681 = vadd.f32 0.0, %v680
      %v682 = vpop.f32.mrb[0].mxu0
      %v683 = vpop.f32.mrb[0].mxu0
      %v684 = vpop.f32.mrb[0].mxu0
      %685 = vdwg.mxu0
      %v686 = vmul.f32 %v681, 0.17677669
      %v687 = vadd.f32 %v686, %v338
      %v688 = vsel %vm341, %v687, -inf
      %689 = vmax.xlane.f32.xlu0 %v688
      %v690 = vpop.xlane.xlu0 %689
      %v691 = vsub.f32 %v687, %v690
      %v692 = vmul.f32 %v691, 1.442695
      %v693 = vpow.pop %v692
      %v694 = vsel %vm341, %v693, 0.0
      %695 = vadd.xlane.f32.xlu0 %v694
      %v696 = vpop.xlane.xlu0 %695
      %v697 = vrcp.pop %v696
      %v698 = vmul.f32 %v693, %v697
      %v699 = vpack.c.bf16 %v698, %v698
      %700 = vrot.lane.b32.xlu0 %v354, 32
      %v701 = vpop.permute.xlu0 %700
      %v703 = vsel %vm355, %v699, 0
      %v706 = vand.u32 %v701, %v362
      %708 = vmatprep.subr.bf16.mxu0 0
      %709 = vmatpush1.bf16.msra.mxu0 %v706
      %710 = vmatprep.subr.bf16.mxu0 0
      %711 = vmatpush1.bf16.msra.mxu0 0
      %712 = vmatprep.subr.bf16.mxu0 0
      %713 = vmatpush1.bf16.msra.mxu0 0
      %714 = vmatprep.subr.bf16.mxu0 0
      %715 = vmatpush1.bf16.msra.mxu0 0
      %716 = vmatprep.subr.bf16.mxu0 0
      %717 = vmatpush1.bf16.msra.mxu0 0
      %718 = vmatprep.subr.bf16.mxu0 0
      %719 = vmatpush1.bf16.msra.mxu0 0
      %720 = vmatprep.subr.bf16.mxu0 0
      %721 = vmatpush1.bf16.msra.mxu0 0
      %722 = vmatprep.subr.bf16.mxu0 0
      %723 = vmatpush1.bf16.msra.mxu0 0
      %724 = vmatprep.subr.bf16.mxu0 0
      %725 = vmatpush1.bf16.msra.mxu0 0
      %726 = vmatprep.subr.bf16.mxu0 0
      %727 = vmatpush1.bf16.msra.mxu0 0
      %728 = vmatprep.subr.bf16.mxu0 0
      %729 = vmatpush1.bf16.msra.mxu0 0
      %730 = vmatprep.subr.bf16.mxu0 0
      %731 = vmatpush1.bf16.msra.mxu0 0
      %732 = vmatprep.subr.bf16.mxu0 0
      %733 = vmatpush1.bf16.msra.mxu0 0
      %734 = vmatprep.subr.bf16.mxu0 0
      %735 = vmatpush1.bf16.msra.mxu0 0
      %736 = vmatprep.subr.bf16.mxu0 0
      %737 = vmatpush1.bf16.msra.mxu0 0
      %738 = vmatprep.subr.bf16.mxu0 0
      %739 = vmatpush1.bf16.msra.mxu0 0
      %740 = vmatprep.mubr.bf16.mxu0 0
      %741 = vmatmul.mubr.bf16.gmra.mrb[0].mxu0 %v703
      %v742 = vpop.f32.mrb[0].mxu0
      %v743 = vadd.f32 0.0, %v742
      %v744 = vpop.f32.mrb[0].mxu0
      %v745 = vpop.f32.mrb[0].mxu0
      %v746 = vpop.f32.mrb[0].mxu0
      %747 = vdwg.mxu0
      %v748 = vadd.f32 %v635, %v698
      %750 = vrot.lane.b32.xlu0 %v517, 32
      %v751 = vpop.permute.xlu0 %750
      %754 = vrot.lane.b32.xlu0 %v630, 64
      %v755 = vpop.permute.xlu0 %754
      %758 = vrot.lane.b32.xlu0 %v743, 96
      %v759 = vpop.permute.xlu0 %758
      %v761 = vsel %vm286, %v401, %v751
      %vm762 = vcmask 523264
      %v763 = vsel %vm762, %v761, %v755
      %vm764 = vcmask 785408
      %v765 = vsel %vm764, %v763, %v759
      %766 = vst [vmem:[%s274] sm:$0x7] %v765
      %v767 = vmul.f32 %v748, 0.25
      %768 = vst.msk [vmem:[%s278] sm:$0x7] %vm341, %v767
      %p769 = scmp.lt.s32.totalorder %s17, 3
      %s770 = scalar_select %p769, %s17, 3
      %s771 = smul.addr %s770, 4
      %s772 = scalar_lea.vmem %s4, %s771
      %p773 = scmp.lt.s32.totalorder %s17, 3
      %s774 = scalar_select %p773, %s17, 3
      %s775 = smul.addr %s774, 4
      %s776 = scalar_lea.vmem %s5, %s775
      // Predicated region
      $region37: #{_device_forward.31} parent=35 // pred_check
        %p777 = pneg %p139
      $region38: #{_device_forward.31} parent=35 // pred_check_branch
        %779 = sbr.rel (%p777) target = $region40
      $region39: #{_device_forward.31} parent=35 // pred_region
        _
      $region40: #{_device_forward.31} parent=35 // pred_fallthru
        _
      // Predicated region
      $region41: #{_device_forward.31} parent=35 // pred_check
        %p780 = pneg %p165
      $region42: #{_device_forward.31} parent=35 // pred_check_branch
        %782 = sbr.rel (%p780) target = $region44
      $region43: #{_device_forward.31} parent=35 // pred_region
        _
      $region44: #{_device_forward.31} parent=35 // pred_fallthru
        _
    $region36: #{_device_forward.31} parent=5 // pred_fallthru
      _
    %p783 = scmp.le.s32.totalorder 2, %s12
    // Predicated region
    $region45: #{_device_forward.31} parent=5 // pred_check
      %p784 = pneg %p783
    $region46: #{_device_forward.31} parent=5 // pred_check_branch
      %786 = sbr.rel (%p784) target = $region48
    $region47: #{_device_forward.31} parent=5 // pred_region
      %s787 = ssub.s32 %s12, 2
      // Predicated region
      $region49: #{_device_forward.31} parent=47 // pred_check
        %p788 = pneg %p145
      $region50: #{_device_forward.31} parent=47 // pred_check_branch
        %790 = sbr.rel (%p788) target = $region52
      $region51: #{_device_forward.31} parent=47 // pred_region
        %p791 = scmp.lt.s32.totalorder %s18, 3
        %s792 = scalar_select %p791, %s18, 3
        %s793 = smul.addr %s792, 4
        %s794 = scalar_lea.vmem %s4, %s793
      $region52: #{_device_forward.31} parent=47 // pred_fallthru
        _
      // Predicated region
      $region53: #{_device_forward.31} parent=47 // pred_check
        %p795 = pneg %p171
      $region54: #{_device_forward.31} parent=47 // pred_check_branch
        %797 = sbr.rel (%p795) target = $region56
      $region55: #{_device_forward.31} parent=47 // pred_region
        %p798 = scmp.lt.s32.totalorder %s18, 3
        %s799 = scalar_select %p798, %s18, 3
        %s800 = smul.addr %s799, 4
        %s801 = scalar_lea.vmem %s5, %s800
      $region56: #{_device_forward.31} parent=47 // pred_fallthru
        _
    $region48: #{_device_forward.31} parent=5 // pred_fallthru
      _
  $region6: #{_device_forward.31} parent=0 // loop_footer
    %s16 = sadd.s32 1, %s12
  $region7: #{_device_forward.31} parent=0 // loop_footer_branch
    %11 = sbr.rel target = $region3
  $region8: #{_device_forward.31} parent=0 // loop_exit
    _

// kernel: _device_forward.33
$region0: #{_device_forward.33}
  #allocation0 [shape = 'u32[]', space=smem, size = 0x4, offset = 0x4, fixed_abs, tag = 'smem constant byte address 0x4 - core index']
  #allocation1 [shape = 'u32[144,128]{1,0:T(1,128)}', space=vmem, size = 0x12000, scoped, tag = 'internal scratch']
  #allocation2 [shape = 'f32[16,256]{1,0:T(8,128)}', space=vmem, size = 0x4000, scoped, tag = 'scratch operand']
  %s0 = inlined_call_operand.vmem [shape: f32[16,128], index: 0, kind: input, shape index: {}]
  %s1 = inlined_call_operand.vmem [shape: bf16[128,256], index: 1, kind: input, shape index: {}]
  %s2 = inlined_call_operand.vmem [shape: f32[1,256], index: 2, kind: input, shape index: {}]
  %s3 = inlined_call_operand.vmem [shape: f32[16,256], index: 3, kind: output, shape index: {}]
  %s4 = sld [smem:[#allocation0]]
  $region30: #{_device_forward.33} parent=0
    _
  %s6 = ssub.s32 1, %s4
  %s7 = scalar_select 0, %s6, %s4
  // Predicated region
  $region2: #{_device_forward.33} parent=0 // pred_check
    _
  $region3: #{_device_forward.33} parent=0 // pred_check_branch
    %9 = sbr.rel (0) target = $region5
  $region4: #{_device_forward.33} parent=0 // pred_region
    _
  $region5: #{_device_forward.33} parent=0 // pred_fallthru
    _
  // Predicated region
  $region6: #{_device_forward.33} parent=0 // pred_check
    _
  $region7: #{_device_forward.33} parent=0 // pred_check_branch
    %11 = sbr.rel (0) target = $region9
  $region8: #{_device_forward.33} parent=0 // pred_region
    _
  $region9: #{_device_forward.33} parent=0 // pred_fallthru
    _
  // Predicated region
  $region10: #{_device_forward.33} parent=0 // pred_check
    _
  $region11: #{_device_forward.33} parent=0 // pred_check_branch
    %13 = sbr.rel (0) target = $region13
  $region12: #{_device_forward.33} parent=0 // pred_region
    _
  $region13: #{_device_forward.33} parent=0 // pred_fallthru
    _
  %p15 = scmp.eq.s32.totalorder 0, 0
  // Predicated region
  $region14: #{_device_forward.33} parent=0 // pred_check
    %p16 = pneg %p15
  $region15: #{_device_forward.33} parent=0 // pred_check_branch
    %18 = sbr.rel (%p16) target = $region17
  $region16: #{_device_forward.33} parent=0 // pred_region
    %19 = vst [vmem:[#allocation2] sm:$0xff] 0.0
    %20 = vst [vmem:[#allocation2 + $0x8] sm:$0xff] 0.0
    %21 = vst [vmem:[#allocation2 + $0x10] sm:$0xff] 0.0
    %22 = vst [vmem:[#allocation2 + $0x18] sm:$0xff] 0.0
  $region17: #{_device_forward.33} parent=0 // pred_fallthru
    _
  %v23 = vld [vmem:[#allocation2] sm:$0xff]
  %v24 = vld [vmem:[#allocation2 + $0x8] sm:$0xff]
  %v25 = vld [vmem:[#allocation2 + $0x10] sm:$0xff]
  %v26 = vld [vmem:[#allocation2 + $0x18] sm:$0xff]
  %v27 = vld [vmem:[%s0] sm:$0xff]
  %v28 = vld [vmem:[%s0 + $0x8] sm:$0xff]
  %v29 = vpack.c.bf16 %v28, %v27
  %v30 = vld [vmem:[%s1] sm:$0xff]
  %v31 = vld [vmem:[%s1 + $0x8] sm:$0xff]
  %v32 = vld [vmem:[%s1 + $0x10] sm:$0xff]
  %v33 = vld [vmem:[%s1 + $0x18] sm:$0xff]
  %v34 = vld [vmem:[%s1 + $0x20] sm:$0xff]
  %v35 = vld [vmem:[%s1 + $0x28] sm:$0xff]
  %v36 = vld [vmem:[%s1 + $0x30] sm:$0xff]
  %v37 = vld [vmem:[%s1 + $0x38] sm:$0xff]
  %v38 = vld [vmem:[%s1 + $0x40] sm:$0xff]
  %v39 = vld [vmem:[%s1 + $0x48] sm:$0xff]
  %v40 = vld [vmem:[%s1 + $0x50] sm:$0xff]
  %v41 = vld [vmem:[%s1 + $0x58] sm:$0xff]
  %v42 = vld [vmem:[%s1 + $0x60] sm:$0xff]
  %v43 = vld [vmem:[%s1 + $0x68] sm:$0xff]
  %v44 = vld [vmem:[%s1 + $0x70] sm:$0xff]
  %v45 = vld [vmem:[%s1 + $0x78] sm:$0xff]
  %v62 = vunpack.c.l.b16 %v30
  %v63 = vunpack.c.h.b16 %v30
  %v64 = vunpack.c.l.b16 %v31
  %v65 = vunpack.c.h.b16 %v31
  %v66 = vunpack.c.l.b16 %v32
  %v67 = vunpack.c.h.b16 %v32
  %v68 = vunpack.c.l.b16 %v33
  %v69 = vunpack.c.h.b16 %v33
  %v70 = vunpack.c.l.b16 %v34
  %v71 = vunpack.c.h.b16 %v34
  %v72 = vunpack.c.l.b16 %v35
  %v73 = vunpack.c.h.b16 %v35
  %v74 = vunpack.c.l.b16 %v36
  %v75 = vunpack.c.h.b16 %v36
  %v76 = vunpack.c.l.b16 %v37
  %v77 = vunpack.c.h.b16 %v37
  %v78 = vunpack.c.l.b16 %v38
  %v79 = vunpack.c.h.b16 %v38
  %v80 = vunpack.c.l.b16 %v39
  %v81 = vunpack.c.h.b16 %v39
  %v82 = vunpack.c.l.b16 %v40
  %v83 = vunpack.c.h.b16 %v40
  %v84 = vunpack.c.l.b16 %v41
  %v85 = vunpack.c.h.b16 %v41
  %v86 = vunpack.c.l.b16 %v42
  %v87 = vunpack.c.h.b16 %v42
  %v88 = vunpack.c.l.b16 %v43
  %v89 = vunpack.c.h.b16 %v43
  %v90 = vunpack.c.l.b16 %v44
  %v91 = vunpack.c.h.b16 %v44
  %v92 = vunpack.c.l.b16 %v45
  %v93 = vunpack.c.h.b16 %v45
  %v94 = vpack.c.b16 %v64, %v62
  %v95 = vpack.c.b16 %v65, %v63
  %v96 = vpack.c.b16 %v68, %v66
  %v97 = vpack.c.b16 %v69, %v67
  %v98 = vpack.c.b16 %v72, %v70
  %v99 = vpack.c.b16 %v73, %v71
  %v100 = vpack.c.b16 %v76, %v74
  %v101 = vpack.c.b16 %v77, %v75
  %v102 = vpack.c.b16 %v80, %v78
  %v103 = vpack.c.b16 %v81, %v79
  %v104 = vpack.c.b16 %v84, %v82
  %v105 = vpack.c.b16 %v85, %v83
  %v106 = vpack.c.b16 %v88, %v86
  %v107 = vpack.c.b16 %v89, %v87
  %v108 = vpack.c.b16 %v92, %v90
  %v109 = vpack.c.b16 %v93, %v91
  %126 = vmatprep.subr.bf16.mxu0 %v95
  %127 = vmatpush1.bf16.msra.mxu0 %v94
  %128 = vmatprep.subr.bf16.mxu0 %v97
  %129 = vmatpush1.bf16.msra.mxu0 %v96
  %130 = vmatprep.subr.bf16.mxu0 %v99
  %131 = vmatpush1.bf16.msra.mxu0 %v98
  %132 = vmatprep.subr.bf16.mxu0 %v101
  %133 = vmatpush1.bf16.msra.mxu0 %v100
  %134 = vmatprep.subr.bf16.mxu0 %v103
  %135 = vmatpush1.bf16.msra.mxu0 %v102
  %136 = vmatprep.subr.bf16.mxu0 %v105
  %137 = vmatpush1.bf16.msra.mxu0 %v104
  %138 = vmatprep.subr.bf16.mxu0 %v107
  %139 = vmatpush1.bf16.msra.mxu0 %v106
  %140 = vmatprep.subr.bf16.mxu0 %v109
  %141 = vmatpush1.bf16.msra.mxu0 %v108
  %142 = vmatprep.subr.bf16.mxu0 0
  %143 = vmatpush1.bf16.msra.mxu0 0
  %144 = vmatprep.subr.bf16.mxu0 0
  %145 = vmatpush1.bf16.msra.mxu0 0
  %146 = vmatprep.subr.bf16.mxu0 0
  %147 = vmatpush1.bf16.msra.mxu0 0
  %148 = vmatprep.subr.bf16.mxu0 0
  %149 = vmatpush1.bf16.msra.mxu0 0
  %150 = vmatprep.subr.bf16.mxu0 0
  %151 = vmatpush1.bf16.msra.mxu0 0
  %152 = vmatprep.subr.bf16.mxu0 0
  %153 = vmatpush1.bf16.msra.mxu0 0
  %154 = vmatprep.subr.bf16.mxu0 0
  %155 = vmatpush1.bf16.msra.mxu0 0
  %156 = vmatprep.subr.bf16.mxu0 0
  %157 = vmatpush1.bf16.msra.mxu0 0
  %158 = vmatprep.mubr.bf16.mxu0 0
  %159 = vmatmul.mubr.bf16.gmra.mrb[0].mxu0 %v29
  %v160 = vpop.f32.mrb[0].mxu0
  %v161 = vadd.f32 0.0, %v160
  %v162 = vpop.f32.mrb[0].mxu0
  %v163 = vadd.f32 0.0, %v162
  %v164 = vpop.f32.mrb[0].mxu0
  %v165 = vadd.f32 0.0, %v164
  %v166 = vpop.f32.mrb[0].mxu0
  %v167 = vadd.f32 0.0, %v166
  %168 = vdwg.mxu0
  %v169 = vadd.f32 %v23, %v161
  %v170 = vadd.f32 %v24, %v163
  %v171 = vadd.f32 %v25, %v165
  %v172 = vadd.f32 %v26, %v167
  %173 = vst [vmem:[#allocation2] sm:$0xff] %v169
  %174 = vst [vmem:[#allocation2 + $0x8] sm:$0xff] %v170
  %175 = vst [vmem:[#allocation2 + $0x10] sm:$0xff] %v171
  %176 = vst [vmem:[#allocation2 + $0x18] sm:$0xff] %v172
  // Predicated region
  $region18: #{_device_forward.33} parent=0 // pred_check
    %p177 = pneg %p15
  $region19: #{_device_forward.33} parent=0 // pred_check_branch
    %179 = sbr.rel (%p177) target = $region21
  $region20: #{_device_forward.33} parent=0 // pred_region
    %v180 = vld [vmem:[#allocation2] sm:$0xff]
    %v181 = vld [vmem:[#allocation2 + $0x8] sm:$0xff]
    %v182 = vld [vmem:[#allocation2 + $0x10] sm:$0xff]
    %v183 = vld [vmem:[#allocation2 + $0x18] sm:$0xff]
    %v184 = vld [vmem:[%s2] sm:$0x3]
    %v186 = vlaneseq
    %v187 = vshrl.u32 %v186, 7
    %v188 = vsub.s32 0, %v187
    %v189 = vrot.slane %v184, %v188
    %v190 = vlaneseq
    %v191 = vshrl.u32 %v190, 7
    %v192 = vsub.s32 1, %v191
    %v193 = vrot.slane %v184, %v192
    %v196 = vadd.f32 %v180, %v189
    %v197 = vadd.f32 %v181, %v193
    %v198 = vadd.f32 %v182, %v189
    %v199 = vadd.f32 %v183, %v193
    %v200 = vmax.f32 %v196, 0.0
    %v201 = vmax.f32 %v197, 0.0
    %v202 = vmax.f32 %v198, 0.0
    %v203 = vmax.f32 %v199, 0.0
    %204 = vst [vmem:[%s3] sm:$0xff] %v200
    %205 = vst [vmem:[%s3 + $0x8] sm:$0xff] %v201
    %206 = vst [vmem:[%s3 + $0x10] sm:$0xff] %v202
    %207 = vst [vmem:[%s3 + $0x18] sm:$0xff] %v203
  $region21: #{_device_forward.33} parent=0 // pred_fallthru
    _
  // Predicated region
  $region22: #{_device_forward.33} parent=0 // pred_check
    _
  $region23: #{_device_forward.33} parent=0 // pred_check_branch
    %209 = sbr.rel (0) target = $region25
  $region24: #{_device_forward.33} parent=0 // pred_region
    _
  $region25: #{_device_forward.33} parent=0 // pred_fallthru
    _
  // Predicated region
  $region26: #{_device_forward.33} parent=0 // pred_check
    _
  $region27: #{_device_forward.33} parent=0 // pred_check_branch
    %211 = sbr.rel (0) target = $region29
  $region28: #{_device_forward.33} parent=0 // pred_region
    _
  $region29: #{_device_forward.33} parent=0 // pred_fallthru
    _

// kernel: _device_forward.34
$region0: #{_device_forward.34}
  #allocation0 [shape = 'u32[]', space=smem, size = 0x4, offset = 0x4, fixed_abs, tag = 'smem constant byte address 0x4 - core index']
  #allocation1 [shape = 'u32[144,128]{1,0:T(1,128)}', space=vmem, size = 0x12000, scoped, tag = 'internal scratch']
  #allocation2 [shape = 'f32[16,128]{1,0:T(8,128)}', space=vmem, size = 0x2000, scoped, tag = 'scratch operand']
  %s0 = inlined_call_operand.vmem [shape: f32[16,256], index: 0, kind: input, shape index: {}]
  %s1 = inlined_call_operand.vmem [shape: bf16[256,128], index: 1, kind: input, shape index: {}]
  %s2 = inlined_call_operand.vmem [shape: f32[1,128], index: 2, kind: input, shape index: {}]
  %s3 = inlined_call_operand.vmem [shape: f32[16,128], index: 3, kind: input, shape index: {}]
  %s4 = inlined_call_operand.vmem [shape: f32[1,128], index: 4, kind: input, shape index: {}]
  %s5 = inlined_call_operand.vmem [shape: f32[1,128], index: 5, kind: input, shape index: {}]
  %s6 = inlined_call_operand.vmem [shape: f32[16,128], index: 6, kind: output, shape index: {}]
  %s7 = sld [smem:[#allocation0]]
  $region42: #{_device_forward.34} parent=0
    _
  %s9 = ssub.s32 1, %s7
  %s10 = scalar_select 0, %s9, %s7
  // Predicated region
  $region2: #{_device_forward.34} parent=0 // pred_check
    _
  $region3: #{_device_forward.34} parent=0 // pred_check_branch
    %12 = sbr.rel (0) target = $region5
  $region4: #{_device_forward.34} parent=0 // pred_region
    _
  $region5: #{_device_forward.34} parent=0 // pred_fallthru
    _
  // Predicated region
  $region6: #{_device_forward.34} parent=0 // pred_check
    _
  $region7: #{_device_forward.34} parent=0 // pred_check_branch
    %14 = sbr.rel (0) target = $region9
  $region8: #{_device_forward.34} parent=0 // pred_region
    _
  $region9: #{_device_forward.34} parent=0 // pred_fallthru
    _
  // Predicated region
  $region10: #{_device_forward.34} parent=0 // pred_check
    _
  $region11: #{_device_forward.34} parent=0 // pred_check_branch
    %16 = sbr.rel (0) target = $region13
  $region12: #{_device_forward.34} parent=0 // pred_region
    _
  $region13: #{_device_forward.34} parent=0 // pred_fallthru
    _
  // Predicated region
  $region14: #{_device_forward.34} parent=0 // pred_check
    _
  $region15: #{_device_forward.34} parent=0 // pred_check_branch
    %18 = sbr.rel (0) target = $region17
  $region16: #{_device_forward.34} parent=0 // pred_region
    _
  $region17: #{_device_forward.34} parent=0 // pred_fallthru
    _
  // Predicated region
  $region18: #{_device_forward.34} parent=0 // pred_check
    _
  $region19: #{_device_forward.34} parent=0 // pred_check_branch
    %20 = sbr.rel (0) target = $region21
  $region20: #{_device_forward.34} parent=0 // pred_region
    _
  $region21: #{_device_forward.34} parent=0 // pred_fallthru
    _
  // Predicated region
  $region22: #{_device_forward.34} parent=0 // pred_check
    _
  $region23: #{_device_forward.34} parent=0 // pred_check_branch
    %22 = sbr.rel (0) target = $region25
  $region24: #{_device_forward.34} parent=0 // pred_region
    _
  $region25: #{_device_forward.34} parent=0 // pred_fallthru
    _
  %p24 = scmp.eq.s32.totalorder 0, 0
  // Predicated region
  $region26: #{_device_forward.34} parent=0 // pred_check
    %p25 = pneg %p24
  $region27: #{_device_forward.34} parent=0 // pred_check_branch
    %27 = sbr.rel (%p25) target = $region29
  $region28: #{_device_forward.34} parent=0 // pred_region
    %28 = vst [vmem:[#allocation2] sm:$0xff] 0.0
    %29 = vst [vmem:[#allocation2 + $0x8] sm:$0xff] 0.0
  $region29: #{_device_forward.34} parent=0 // pred_fallthru
    _
  %v30 = vld [vmem:[#allocation2] sm:$0xff]
  %v31 = vld [vmem:[#allocation2 + $0x8] sm:$0xff]
  %v32 = vld [vmem:[%s0] sm:$0xff]
  %v33 = vld [vmem:[%s0 + $0x8] sm:$0xff]
  %v34 = vld [vmem:[%s0 + $0x10] sm:$0xff]
  %v35 = vld [vmem:[%s0 + $0x18] sm:$0xff]
  %v36 = vpack.c.bf16 %v34, %v32
  %v37 = vpack.c.bf16 %v35, %v33
  %v38 = vld [vmem:[%s1] sm:$0xf]
  %v39 = vld [vmem:[%s1 + $0x4] sm:$0xf]
  %v40 = vld [vmem:[%s1 + $0x8] sm:$0xf]
  %v41 = vld [vmem:[%s1 + $0xc] sm:$0xf]
  %v42 = vld [vmem:[%s1 + $0x10] sm:$0xf]
  %v43 = vld [vmem:[%s1 + $0x14] sm:$0xf]
  %v44 = vld [vmem:[%s1 + $0x18] sm:$0xf]
  %v45 = vld [vmem:[%s1 + $0x1c] sm:$0xf]
  %v46 = vld [vmem:[%s1 + $0x20] sm:$0xf]
  %v47 = vld [vmem:[%s1 + $0x24] sm:$0xf]
  %v48 = vld [vmem:[%s1 + $0x28] sm:$0xf]
  %v49 = vld [vmem:[%s1 + $0x2c] sm:$0xf]
  %v50 = vld [vmem:[%s1 + $0x30] sm:$0xf]
  %v51 = vld [vmem:[%s1 + $0x34] sm:$0xf]
  %v52 = vld [vmem:[%s1 + $0x38] sm:$0xf]
  %v53 = vld [vmem:[%s1 + $0x3c] sm:$0xf]
  %v54 = vld [vmem:[%s1 + $0x40] sm:$0xf]
  %v55 = vld [vmem:[%s1 + $0x44] sm:$0xf]
  %v56 = vld [vmem:[%s1 + $0x48] sm:$0xf]
  %v57 = vld [vmem:[%s1 + $0x4c] sm:$0xf]
  %v58 = vld [vmem:[%s1 + $0x50] sm:$0xf]
  %v59 = vld [vmem:[%s1 + $0x54] sm:$0xf]
  %v60 = vld [vmem:[%s1 + $0x58] sm:$0xf]
  %v61 = vld [vmem:[%s1 + $0x5c] sm:$0xf]
  %v62 = vld [vmem:[%s1 + $0x60] sm:$0xf]
  %v63 = vld [vmem:[%s1 + $0x64] sm:$0xf]
  %v64 = vld [vmem:[%s1 + $0x68] sm:$0xf]
  %v65 = vld [vmem:[%s1 + $0x6c] sm:$0xf]
  %v66 = vld [vmem:[%s1 + $0x70] sm:$0xf]
  %v67 = vld [vmem:[%s1 + $0x74] sm:$0xf]
  %v68 = vld [vmem:[%s1 + $0x78] sm:$0xf]
  %v69 = vld [vmem:[%s1 + $0x7c] sm:$0xf]
  %v102 = vunpack.c.l.b16 %v38
  %v103 = vunpack.c.l.b16 %v39
  %v104 = vunpack.c.l.b16 %v40
  %v105 = vunpack.c.l.b16 %v41
  %v106 = vunpack.c.l.b16 %v42
  %v107 = vunpack.c.l.b16 %v43
  %v108 = vunpack.c.l.b16 %v44
  %v109 = vunpack.c.l.b16 %v45
  %v110 = vunpack.c.l.b16 %v46
  %v111 = vunpack.c.l.b16 %v47
  %v112 = vunpack.c.l.b16 %v48
  %v113 = vunpack.c.l.b16 %v49
  %v114 = vunpack.c.l.b16 %v50
  %v115 = vunpack.c.l.b16 %v51
  %v116 = vunpack.c.l.b16 %v52
  %v117 = vunpack.c.l.b16 %v53
  %v118 = vunpack.c.l.b16 %v54
  %v119 = vunpack.c.l.b16 %v55
  %v120 = vunpack.c.l.b16 %v56
  %v121 = vunpack.c.l.b16 %v57
  %v122 = vunpack.c.l.b16 %v58
  %v123 = vunpack.c.l.b16 %v59
  %v124 = vunpack.c.l.b16 %v60
  %v125 = vunpack.c.l.b16 %v61
  %v126 = vunpack.c.l.b16 %v62
  %v127 = vunpack.c.l.b16 %v63
  %v128 = vunpack.c.l.b16 %v64
  %v129 = vunpack.c.l.b16 %v65
  %v130 = vunpack.c.l.b16 %v66
  %v131 = vunpack.c.l.b16 %v67
  %v132 = vunpack.c.l.b16 %v68
  %v133 = vunpack.c.l.b16 %v69
  %v134 = vpack.c.b16 %v103, %v102
  %v135 = vpack.c.b16 %v105, %v104
  %v136 = vpack.c.b16 %v107, %v106
  %v137 = vpack.c.b16 %v109, %v108
  %v138 = vpack.c.b16 %v111, %v110
  %v139 = vpack.c.b16 %v113, %v112
  %v140 = vpack.c.b16 %v115, %v114
  %v141 = vpack.c.b16 %v117, %v116
  %v142 = vpack.c.b16 %v119, %v118
  %v143 = vpack.c.b16 %v121, %v120
  %v144 = vpack.c.b16 %v123, %v122
  %v145 = vpack.c.b16 %v125, %v124
  %v146 = vpack.c.b16 %v127, %v126
  %v147 = vpack.c.b16 %v129, %v128
  %v148 = vpack.c.b16 %v131, %v130
  %v149 = vpack.c.b16 %v133, %v132
  %166 = vmatprep.subr.bf16.mxu0 0
  %167 = vmatpush1.bf16.msra.mxu0 %v134
  %168 = vmatprep.subr.bf16.mxu0 0
  %169 = vmatpush1.bf16.msra.mxu0 %v135
  %170 = vmatprep.subr.bf16.mxu0 0
  %171 = vmatpush1.bf16.msra.mxu0 %v136
  %172 = vmatprep.subr.bf16.mxu0 0
  %173 = vmatpush1.bf16.msra.mxu0 %v137
  %174 = vmatprep.subr.bf16.mxu0 0
  %175 = vmatpush1.bf16.msra.mxu0 %v138
  %176 = vmatprep.subr.bf16.mxu0 0
  %177 = vmatpush1.bf16.msra.mxu0 %v139
  %178 = vmatprep.subr.bf16.mxu0 0
  %179 = vmatpush1.bf16.msra.mxu0 %v140
  %180 = vmatprep.subr.bf16.mxu0 0
  %181 = vmatpush1.bf16.msra.mxu0 %v141
  %182 = vmatprep.subr.bf16.mxu0 0
  %183 = vmatpush1.bf16.msra.mxu0 %v142
  %184 = vmatprep.subr.bf16.mxu0 0
  %185 = vmatpush1.bf16.msra.mxu0 %v143
  %186 = vmatprep.subr.bf16.mxu0 0
  %187 = vmatpush1.bf16.msra.mxu0 %v144
  %188 = vmatprep.subr.bf16.mxu0 0
  %189 = vmatpush1.bf16.msra.mxu0 %v145
  %190 = vmatprep.subr.bf16.mxu0 0
  %191 = vmatpush1.bf16.msra.mxu0 %v146
  %192 = vmatprep.subr.bf16.mxu0 0
  %193 = vmatpush1.bf16.msra.mxu0 %v147
  %194 = vmatprep.subr.bf16.mxu0 0
  %195 = vmatpush1.bf16.msra.mxu0 %v148
  %196 = vmatprep.subr.bf16.mxu0 0
  %197 = vmatpush1.bf16.msra.mxu0 %v149
  %198 = vmatprep.mubr.bf16.mxu0 %v37
  %199 = vmatmul.mubr.bf16.gmra.mrb[0].mxu0 %v36
  %v200 = vpop.f32.mrb[0].mxu0
  %v201 = vadd.f32 0.0, %v200
  %v202 = vpop.f32.mrb[0].mxu0
  %v203 = vpop.f32.mrb[0].mxu0
  %v204 = vadd.f32 0.0, %v203
  %v205 = vpop.f32.mrb[0].mxu0
  %206 = vdwg.mxu0
  %v207 = vadd.f32 %v30, %v201
  %v208 = vadd.f32 %v31, %v204
  %209 = vst [vmem:[#allocation2] sm:$0xff] %v207
  %210 = vst [vmem:[#allocation2 + $0x8] sm:$0xff] %v208
  // Predicated region
  $region30: #{_device_forward.34} parent=0 // pred_check
    %p211 = pneg %p24
  $region31: #{_device_forward.34} parent=0 // pred_check_branch
    %213 = sbr.rel (%p211) target = $region33
  $region32: #{_device_forward.34} parent=0 // pred_region
    %v214 = vld [vmem:[#allocation2] sm:$0xff]
    %v215 = vld [vmem:[#allocation2 + $0x8] sm:$0xff]
    %v216 = vld [vmem:[%s2] sm:$0x1]
    %v218 = vlaneseq
    %v219 = vshrl.u32 %v218, 7
    %v220 = vsub.s32 0, %v219
    %v221 = vrot.slane %v216, %v220
    %v223 = vadd.f32 %v214, %v221
    %v224 = vadd.f32 %v215, %v221
    %v225 = vld [vmem:[%s3] sm:$0xff]
    %v226 = vld [vmem:[%s3 + $0x8] sm:$0xff]
    %v227 = vadd.f32 %v223, %v225
    %v228 = vadd.f32 %v224, %v226
    %229 = vadd.xlane.f32.xlu0 %v227
    %v230 = vpop.xlane.xlu0 %229
    %231 = vadd.xlane.f32.xlu0 %v228
    %v232 = vpop.xlane.xlu0 %231
    %v233 = vmul.f32 %v230, 0.0078125
    %v234 = vmul.f32 %v232, 0.0078125
    %v235 = vsub.f32 %v227, %v233
    %v236 = vsub.f32 %v228, %v234
    %v237 = vmul.f32 %v235, %v235
    %v238 = vmul.f32 %v236, %v236
    %239 = vadd.xlane.f32.xlu0 %v237
    %v240 = vpop.xlane.xlu0 %239
    %241 = vadd.xlane.f32.xlu0 %v238
    %v242 = vpop.xlane.xlu0 %241
    %v243 = vmul.f32 %v240, 0.0078125
    %v244 = vmul.f32 %v242, 0.0078125
    %v245 = vadd.f32 %v243, 1e-05
    %v246 = vadd.f32 %v244, 1e-05
    %v247 = vrsqrt.pop %v245
    %v248 = vrsqrt.pop %v246
    %v249 = vmul.f32 %v235, %v247
    %v250 = vmul.f32 %v236, %v248
    %v251 = vld [vmem:[%s4] sm:$0x1]
    %v253 = vlaneseq
    %v254 = vshrl.u32 %v253, 7
    %v255 = vsub.s32 0, %v254
    %v256 = vrot.slane %v251, %v255
    %v258 = vmul.f32 %v249, %v256
    %v259 = vmul.f32 %v250, %v256
    %v260 = vld [vmem:[%s5] sm:$0x1]
    %v262 = vlaneseq
    %v263 = vshrl.u32 %v262, 7
    %v264 = vsub.s32 0, %v263
    %v265 = vrot.slane %v260, %v264
    %v267 = vadd.f32 %v258, %v265
    %v268 = vadd.f32 %v259, %v265
    %269 = vst [vmem:[%s6] sm:$0xff] %v267
    %270 = vst [vmem:[%s6 + $0x8] sm:$0xff] %v268
  $region33: #{_device_forward.34} parent=0 // pred_fallthru
    _
  // Predicated region
  $region34: #{_device_forward.34} parent=0 // pred_check
    _
  $region35: #{_device_forward.34} parent=0 // pred_check_branch
    %272 = sbr.rel (0) target = $region37
  $region36: #{_device_forward.34} parent=0 // pred_region
    _
  $region37: #{_device_forward.34} parent=0 // pred_fallthru
    _
  // Predicated region
  $region38: #{_device_forward.34} parent=0 // pred_check
    _
  $region39: #{_device_forward.34} parent=0 // pred_check_branch
    %274 = sbr.rel (0) target = $region41
  $region40: #{_device_forward.34} parent=0 // pred_region
    _
  $region41: #{_device_forward.34} parent=0 // pred_fallthru
    _

// kernel: _device_forward.35
$region0: #{_device_forward.35}
  #allocation0 [shape = 'u32[]', space=smem, size = 0x4, offset = 0x4, fixed_abs, tag = 'smem constant byte address 0x4 - core index']
  #allocation1 [shape = 'u32[144,128]{1,0:T(1,128)}', space=vmem, size = 0x12000, scoped, tag = 'internal scratch']
  #allocation2 [shape = 'f32[24,128]{1,0:T(8,128)}', space=vmem, size = 0x3000, scoped, tag = 'scratch operand']
  %s0 = inlined_call_operand.vmem [shape: f32[24,128], index: 0, kind: input, shape index: {}]
  %s1 = inlined_call_operand.vmem [shape: bf16[128,128], index: 1, kind: input, shape index: {}]
  %s2 = inlined_call_operand.vmem [shape: f32[1,128], index: 2, kind: input, shape index: {}]
  %s3 = inlined_call_operand.vmem [shape: f32[24,128], index: 3, kind: output, shape index: {}]
  %s4 = sld [smem:[#allocation0]]
  $region30: #{_device_forward.35} parent=0
    _
  %s6 = ssub.s32 1, %s4
  %s7 = scalar_select 0, %s6, %s4
  // Predicated region
  $region2: #{_device_forward.35} parent=0 // pred_check
    _
  $region3: #{_device_forward.35} parent=0 // pred_check_branch
    %9 = sbr.rel (0) target = $region5
  $region4: #{_device_forward.35} parent=0 // pred_region
    _
  $region5: #{_device_forward.35} parent=0 // pred_fallthru
    _
  // Predicated region
  $region6: #{_device_forward.35} parent=0 // pred_check
    _
  $region7: #{_device_forward.35} parent=0 // pred_check_branch
    %11 = sbr.rel (0) target = $region9
  $region8: #{_device_forward.35} parent=0 // pred_region
    _
  $region9: #{_device_forward.35} parent=0 // pred_fallthru
    _
  // Predicated region
  $region10: #{_device_forward.35} parent=0 // pred_check
    _
  $region11: #{_device_forward.35} parent=0 // pred_check_branch
    %13 = sbr.rel (0) target = $region13
  $region12: #{_device_forward.35} parent=0 // pred_region
    _
  $region13: #{_device_forward.35} parent=0 // pred_fallthru
    _
  %p15 = scmp.eq.s32.totalorder 0, 0
  // Predicated region
  $region14: #{_device_forward.35} parent=0 // pred_check
    %p16 = pneg %p15
  $region15: #{_device_forward.35} parent=0 // pred_check_branch
    %18 = sbr.rel (%p16) target = $region17
  $region16: #{_device_forward.35} parent=0 // pred_region
    %19 = vst [vmem:[#allocation2] sm:$0xff] 0.0
    %20 = vst [vmem:[#allocation2 + $0x8] sm:$0xff] 0.0
    %21 = vst [vmem:[#allocation2 + $0x10] sm:$0xff] 0.0
  $region17: #{_device_forward.35} parent=0 // pred_fallthru
    _
  %v22 = vld [vmem:[#allocation2] sm:$0xff]
  %v23 = vld [vmem:[#allocation2 + $0x8] sm:$0xff]
  %v24 = vld [vmem:[#allocation2 + $0x10] sm:$0xff]
  %v25 = vld [vmem:[%s0] sm:$0xff]
  %v26 = vld [vmem:[%s0 + $0x8] sm:$0xff]
  %v27 = vld [vmem:[%s0 + $0x10] sm:$0xff]
  %v28 = vpack.c.bf16 %v26, %v25
  %v29 = vpack.c.bf16 %v27, %v27
  %v30 = vld [vmem:[%s1] sm:$0xf]
  %v31 = vld [vmem:[%s1 + $0x4] sm:$0xf]
  %v32 = vld [vmem:[%s1 + $0x8] sm:$0xf]
  %v33 = vld [vmem:[%s1 + $0xc] sm:$0xf]
  %v34 = vld [vmem:[%s1 + $0x10] sm:$0xf]
  %v35 = vld [vmem:[%s1 + $0x14] sm:$0xf]
  %v36 = vld [vmem:[%s1 + $0x18] sm:$0xf]
  %v37 = vld [vmem:[%s1 + $0x1c] sm:$0xf]
  %v38 = vld [vmem:[%s1 + $0x20] sm:$0xf]
  %v39 = vld [vmem:[%s1 + $0x24] sm:$0xf]
  %v40 = vld [vmem:[%s1 + $0x28] sm:$0xf]
  %v41 = vld [vmem:[%s1 + $0x2c] sm:$0xf]
  %v42 = vld [vmem:[%s1 + $0x30] sm:$0xf]
  %v43 = vld [vmem:[%s1 + $0x34] sm:$0xf]
  %v44 = vld [vmem:[%s1 + $0x38] sm:$0xf]
  %v45 = vld [vmem:[%s1 + $0x3c] sm:$0xf]
  %v62 = vunpack.c.l.b16 %v30
  %v63 = vunpack.c.l.b16 %v31
  %v64 = vunpack.c.l.b16 %v32
  %v65 = vunpack.c.l.b16 %v33
  %v66 = vunpack.c.l.b16 %v34
  %v67 = vunpack.c.l.b16 %v35
  %v68 = vunpack.c.l.b16 %v36
  %v69 = vunpack.c.l.b16 %v37
  %v70 = vunpack.c.l.b16 %v38
  %v71 = vunpack.c.l.b16 %v39
  %v72 = vunpack.c.l.b16 %v40
  %v73 = vunpack.c.l.b16 %v41
  %v74 = vunpack.c.l.b16 %v42
  %v75 = vunpack.c.l.b16 %v43
  %v76 = vunpack.c.l.b16 %v44
  %v77 = vunpack.c.l.b16 %v45
  %v78 = vpack.c.b16 %v63, %v62
  %v79 = vpack.c.b16 %v65, %v64
  %v80 = vpack.c.b16 %v67, %v66
  %v81 = vpack.c.b16 %v69, %v68
  %v82 = vpack.c.b16 %v71, %v70
  %v83 = vpack.c.b16 %v73, %v72
  %v84 = vpack.c.b16 %v75, %v74
  %v85 = vpack.c.b16 %v77, %v76
  %94 = vmatprep.subr.bf16.mxu0 0
  %95 = vmatpush1.bf16.msra.mxu0 %v78
  %96 = vmatprep.subr.bf16.mxu0 0
  %97 = vmatpush1.bf16.msra.mxu0 %v79
  %98 = vmatprep.subr.bf16.mxu0 0
  %99 = vmatpush1.bf16.msra.mxu0 %v80
  %100 = vmatprep.subr.bf16.mxu0 0
  %101 = vmatpush1.bf16.msra.mxu0 %v81
  %102 = vmatprep.subr.bf16.mxu0 0
  %103 = vmatpush1.bf16.msra.mxu0 %v82
  %104 = vmatprep.subr.bf16.mxu0 0
  %105 = vmatpush1.bf16.msra.mxu0 %v83
  %106 = vmatprep.subr.bf16.mxu0 0
  %107 = vmatpush1.bf16.msra.mxu0 %v84
  %108 = vmatprep.subr.bf16.mxu0 0
  %109 = vmatpush1.bf16.msra.mxu0 %v85
  %110 = vmatprep.subr.bf16.mxu0 0
  %111 = vmatpush1.bf16.msra.mxu0 0
  %112 = vmatprep.subr.bf16.mxu0 0
  %113 = vmatpush1.bf16.msra.mxu0 0
  %114 = vmatprep.subr.bf16.mxu0 0
  %115 = vmatpush1.bf16.msra.mxu0 0
  %116 = vmatprep.subr.bf16.mxu0 0
  %117 = vmatpush1.bf16.msra.mxu0 0
  %118 = vmatprep.subr.bf16.mxu0 0
  %119 = vmatpush1.bf16.msra.mxu0 0
  %120 = vmatprep.subr.bf16.mxu0 0
  %121 = vmatpush1.bf16.msra.mxu0 0
  %122 = vmatprep.subr.bf16.mxu0 0
  %123 = vmatpush1.bf16.msra.mxu0 0
  %124 = vmatprep.subr.bf16.mxu0 0
  %125 = vmatpush1.bf16.msra.mxu0 0
  %126 = vmatprep.mubr.bf16.mxu0 0
  %127 = vmatmul.mubr.bf16.gmra.mrb[0].mxu0 %v28
  %v128 = vpop.f32.mrb[0].mxu0
  %v129 = vadd.f32 0.0, %v128
  %v130 = vpop.f32.mrb[0].mxu0
  %v131 = vpop.f32.mrb[0].mxu0
  %v132 = vadd.f32 0.0, %v131
  %v133 = vpop.f32.mrb[0].mxu0
  %134 = vmatprep.mubr.bf16.mxu0 0
  %135 = vmatmul.mubr.bf16.gmra.mrb[0].mxu0 %v29
  %v136 = vpop.f32.mrb[0].mxu0
  %v137 = vadd.f32 0.0, %v136
  %v138 = vpop.f32.mrb[0].mxu0
  %v139 = vpop.f32.mrb[0].mxu0
  %v140 = vpop.f32.mrb[0].mxu0
  %141 = vdwg.mxu0
  %v142 = vadd.f32 %v22, %v129
  %v143 = vadd.f32 %v23, %v132
  %v144 = vadd.f32 %v24, %v137
  %145 = vst [vmem:[#allocation2] sm:$0xff] %v142
  %146 = vst [vmem:[#allocation2 + $0x8] sm:$0xff] %v143
  %147 = vst [vmem:[#allocation2 + $0x10] sm:$0xff] %v144
  // Predicated region
  $region18: #{_device_forward.35} parent=0 // pred_check
    %p148 = pneg %p15
  $region19: #{_device_forward.35} parent=0 // pred_check_branch
    %150 = sbr.rel (%p148) target = $region21
  $region20: #{_device_forward.35} parent=0 // pred_region
    %v151 = vld [vmem:[#allocation2] sm:$0xff]
    %v152 = vld [vmem:[#allocation2 + $0x8] sm:$0xff]
    %v153 = vld [vmem:[#allocation2 + $0x10] sm:$0xff]
    %v154 = vld [vmem:[%s2] sm:$0x1]
    %v156 = vlaneseq
    %v157 = vshrl.u32 %v156, 7
    %v158 = vsub.s32 0, %v157
    %v159 = vrot.slane %v154, %v158
    %v161 = vadd.f32 %v151, %v159
    %v162 = vadd.f32 %v152, %v159
    %v163 = vadd.f32 %v153, %v159
    %164 = vst [vmem:[%s3] sm:$0xff] %v161
    %165 = vst [vmem:[%s3 + $0x8] sm:$0xff] %v162
    %166 = vst [vmem:[%s3 + $0x10] sm:$0xff] %v163
  $region21: #{_device_forward.35} parent=0 // pred_fallthru
    _
  // Predicated region
  $region22: #{_device_forward.35} parent=0 // pred_check
    _
  $region23: #{_device_forward.35} parent=0 // pred_check_branch
    %168 = sbr.rel (0) target = $region25
  $region24: #{_device_forward.35} parent=0 // pred_region
    _
  $region25: #{_device_forward.35} parent=0 // pred_fallthru
    _
  // Predicated region
  $region26: #{_device_forward.35} parent=0 // pred_check
    _
  $region27: #{_device_forward.35} parent=0 // pred_check_branch
    %170 = sbr.rel (0) target = $region29
  $region28: #{_device_forward.35} parent=0 // pred_region
    _
  $region29: #{_device_forward.35} parent=0 // pred_fallthru
    _

// kernel: _device_forward.40
$region0: #{_device_forward.40}
  #allocation0 [shape = 'u32[]', space=smem, size = 0x4, offset = 0x4, fixed_abs, tag = 'smem constant byte address 0x4 - core index']
  #allocation1 [shape = 'u32[144,128]{1,0:T(1,128)}', space=vmem, size = 0x12000, scoped, tag = 'internal scratch']
  #allocation2 [shape = 'f32[24,256]{1,0:T(8,128)}', space=vmem, size = 0x6000, scoped, tag = 'scratch operand']
  %s0 = inlined_call_operand.vmem [shape: f32[24,128], index: 0, kind: input, shape index: {}]
  %s1 = inlined_call_operand.vmem [shape: bf16[128,256], index: 1, kind: input, shape index: {}]
  %s2 = inlined_call_operand.vmem [shape: f32[1,256], index: 2, kind: input, shape index: {}]
  %s3 = inlined_call_operand.vmem [shape: f32[24,256], index: 3, kind: output, shape index: {}]
  %s4 = sld [smem:[#allocation0]]
  $region30: #{_device_forward.40} parent=0
    _
  %s6 = ssub.s32 1, %s4
  %s7 = scalar_select 0, %s6, %s4
  // Predicated region
  $region2: #{_device_forward.40} parent=0 // pred_check
    _
  $region3: #{_device_forward.40} parent=0 // pred_check_branch
    %9 = sbr.rel (0) target = $region5
  $region4: #{_device_forward.40} parent=0 // pred_region
    _
  $region5: #{_device_forward.40} parent=0 // pred_fallthru
    _
  // Predicated region
  $region6: #{_device_forward.40} parent=0 // pred_check
    _
  $region7: #{_device_forward.40} parent=0 // pred_check_branch
    %11 = sbr.rel (0) target = $region9
  $region8: #{_device_forward.40} parent=0 // pred_region
    _
  $region9: #{_device_forward.40} parent=0 // pred_fallthru
    _
  // Predicated region
  $region10: #{_device_forward.40} parent=0 // pred_check
    _
  $region11: #{_device_forward.40} parent=0 // pred_check_branch
    %13 = sbr.rel (0) target = $region13
  $region12: #{_device_forward.40} parent=0 // pred_region
    _
  $region13: #{_device_forward.40} parent=0 // pred_fallthru
    _
  %p15 = scmp.eq.s32.totalorder 0, 0
  // Predicated region
  $region14: #{_device_forward.40} parent=0 // pred_check
    %p16 = pneg %p15
  $region15: #{_device_forward.40} parent=0 // pred_check_branch
    %18 = sbr.rel (%p16) target = $region17
  $region16: #{_device_forward.40} parent=0 // pred_region
    %19 = vst [vmem:[#allocation2] sm:$0xff] 0.0
    %20 = vst [vmem:[#allocation2 + $0x8] sm:$0xff] 0.0
    %21 = vst [vmem:[#allocation2 + $0x10] sm:$0xff] 0.0
    %22 = vst [vmem:[#allocation2 + $0x18] sm:$0xff] 0.0
    %23 = vst [vmem:[#allocation2 + $0x20] sm:$0xff] 0.0
    %24 = vst [vmem:[#allocation2 + $0x28] sm:$0xff] 0.0
  $region17: #{_device_forward.40} parent=0 // pred_fallthru
    _
  %v25 = vld [vmem:[#allocation2] sm:$0xff]
  %v26 = vld [vmem:[#allocation2 + $0x8] sm:$0xff]
  %v27 = vld [vmem:[#allocation2 + $0x10] sm:$0xff]
  %v28 = vld [vmem:[#allocation2 + $0x18] sm:$0xff]
  %v29 = vld [vmem:[#allocation2 + $0x20] sm:$0xff]
  %v30 = vld [vmem:[#allocation2 + $0x28] sm:$0xff]
  %v31 = vld [vmem:[%s0] sm:$0xff]
  %v32 = vld [vmem:[%s0 + $0x8] sm:$0xff]
  %v33 = vld [vmem:[%s0 + $0x10] sm:$0xff]
  %v34 = vpack.c.bf16 %v32, %v31
  %v35 = vpack.c.bf16 %v33, %v33
  %v36 = vld [vmem:[%s1] sm:$0xff]
  %v37 = vld [vmem:[%s1 + $0x8] sm:$0xff]
  %v38 = vld [vmem:[%s1 + $0x10] sm:$0xff]
  %v39 = vld [vmem:[%s1 + $0x18] sm:$0xff]
  %v40 = vld [vmem:[%s1 + $0x20] sm:$0xff]
  %v41 = vld [vmem:[%s1 + $0x28] sm:$0xff]
  %v42 = vld [vmem:[%s1 + $0x30] sm:$0xff]
  %v43 = vld [vmem:[%s1 + $0x38] sm:$0xff]
  %v44 = vld [vmem:[%s1 + $0x40] sm:$0xff]
  %v45 = vld [vmem:[%s1 + $0x48] sm:$0xff]
  %v46 = vld [vmem:[%s1 + $0x50] sm:$0xff]
  %v47 = vld [vmem:[%s1 + $0x58] sm:$0xff]
  %v48 = vld [vmem:[%s1 + $0x60] sm:$0xff]
  %v49 = vld [vmem:[%s1 + $0x68] sm:$0xff]
  %v50 = vld [vmem:[%s1 + $0x70] sm:$0xff]
  %v51 = vld [vmem:[%s1 + $0x78] sm:$0xff]
  %v68 = vunpack.c.l.b16 %v36
  %v69 = vunpack.c.h.b16 %v36
  %v70 = vunpack.c.l.b16 %v37
  %v71 = vunpack.c.h.b16 %v37
  %v72 = vunpack.c.l.b16 %v38
  %v73 = vunpack.c.h.b16 %v38
  %v74 = vunpack.c.l.b16 %v39
  %v75 = vunpack.c.h.b16 %v39
  %v76 = vunpack.c.l.b16 %v40
  %v77 = vunpack.c.h.b16 %v40
  %v78 = vunpack.c.l.b16 %v41
  %v79 = vunpack.c.h.b16 %v41
  %v80 = vunpack.c.l.b16 %v42
  %v81 = vunpack.c.h.b16 %v42
  %v82 = vunpack.c.l.b16 %v43
  %v83 = vunpack.c.h.b16 %v43
  %v84 = vunpack.c.l.b16 %v44
  %v85 = vunpack.c.h.b16 %v44
  %v86 = vunpack.c.l.b16 %v45
  %v87 = vunpack.c.h.b16 %v45
  %v88 = vunpack.c.l.b16 %v46
  %v89 = vunpack.c.h.b16 %v46
  %v90 = vunpack.c.l.b16 %v47
  %v91 = vunpack.c.h.b16 %v47
  %v92 = vunpack.c.l.b16 %v48
  %v93 = vunpack.c.h.b16 %v48
  %v94 = vunpack.c.l.b16 %v49
  %v95 = vunpack.c.h.b16 %v49
  %v96 = vunpack.c.l.b16 %v50
  %v97 = vunpack.c.h.b16 %v50
  %v98 = vunpack.c.l.b16 %v51
  %v99 = vunpack.c.h.b16 %v51
  %v100 = vpack.c.b16 %v70, %v68
  %v101 = vpack.c.b16 %v71, %v69
  %v102 = vpack.c.b16 %v74, %v72
  %v103 = vpack.c.b16 %v75, %v73
  %v104 = vpack.c.b16 %v78, %v76
  %v105 = vpack.c.b16 %v79, %v77
  %v106 = vpack.c.b16 %v82, %v80
  %v107 = vpack.c.b16 %v83, %v81
  %v108 = vpack.c.b16 %v86, %v84
  %v109 = vpack.c.b16 %v87, %v85
  %v110 = vpack.c.b16 %v90, %v88
  %v111 = vpack.c.b16 %v91, %v89
  %v112 = vpack.c.b16 %v94, %v92
  %v113 = vpack.c.b16 %v95, %v93
  %v114 = vpack.c.b16 %v98, %v96
  %v115 = vpack.c.b16 %v99, %v97
  %132 = vmatprep.subr.bf16.mxu0 %v101
  %133 = vmatpush1.bf16.msra.mxu0 %v100
  %134 = vmatprep.subr.bf16.mxu0 %v103
  %135 = vmatpush1.bf16.msra.mxu0 %v102
  %136 = vmatprep.subr.bf16.mxu0 %v105
  %137 = vmatpush1.bf16.msra.mxu0 %v104
  %138 = vmatprep.subr.bf16.mxu0 %v107
  %139 = vmatpush1.bf16.msra.mxu0 %v106
  %140 = vmatprep.subr.bf16.mxu0 %v109
  %141 = vmatpush1.bf16.msra.mxu0 %v108
  %142 = vmatprep.subr.bf16.mxu0 %v111
  %143 = vmatpush1.bf16.msra.mxu0 %v110
  %144 = vmatprep.subr.bf16.mxu0 %v113
  %145 = vmatpush1.bf16.msra.mxu0 %v112
  %146 = vmatprep.subr.bf16.mxu0 %v115
  %147 = vmatpush1.bf16.msra.mxu0 %v114
  %148 = vmatprep.subr.bf16.mxu0 0
  %149 = vmatpush1.bf16.msra.mxu0 0
  %150 = vmatprep.subr.bf16.mxu0 0
  %151 = vmatpush1.bf16.msra.mxu0 0
  %152 = vmatprep.subr.bf16.mxu0 0
  %153 = vmatpush1.bf16.msra.mxu0 0
  %154 = vmatprep.subr.bf16.mxu0 0
  %155 = vmatpush1.bf16.msra.mxu0 0
  %156 = vmatprep.subr.bf16.mxu0 0
  %157 = vmatpush1.bf16.msra.mxu0 0
  %158 = vmatprep.subr.bf16.mxu0 0
  %159 = vmatpush1.bf16.msra.mxu0 0
  %160 = vmatprep.subr.bf16.mxu0 0
  %161 = vmatpush1.bf16.msra.mxu0 0
  %162 = vmatprep.subr.bf16.mxu0 0
  %163 = vmatpush1.bf16.msra.mxu0 0
  %164 = vmatprep.mubr.bf16.mxu0 0
  %165 = vmatmul.mubr.bf16.gmra.mrb[0].mxu0 %v34
  %v166 = vpop.f32.mrb[0].mxu0
  %v167 = vadd.f32 0.0, %v166
  %v168 = vpop.f32.mrb[0].mxu0
  %v169 = vadd.f32 0.0, %v168
  %v170 = vpop.f32.mrb[0].mxu0
  %v171 = vadd.f32 0.0, %v170
  %v172 = vpop.f32.mrb[0].mxu0
  %v173 = vadd.f32 0.0, %v172
  %174 = vmatprep.mubr.bf16.mxu0 0
  %175 = vmatmul.mubr.bf16.gmra.mrb[0].mxu0 %v35
  %v176 = vpop.f32.mrb[0].mxu0
  %v177 = vadd.f32 0.0, %v176
  %v178 = vpop.f32.mrb[0].mxu0
  %v179 = vadd.f32 0.0, %v178
  %v180 = vpop.f32.mrb[0].mxu0
  %v181 = vpop.f32.mrb[0].mxu0
  %182 = vdwg.mxu0
  %v183 = vadd.f32 %v25, %v167
  %v184 = vadd.f32 %v26, %v169
  %v185 = vadd.f32 %v27, %v171
  %v186 = vadd.f32 %v28, %v173
  %v187 = vadd.f32 %v29, %v177
  %v188 = vadd.f32 %v30, %v179
  %189 = vst [vmem:[#allocation2] sm:$0xff] %v183
  %190 = vst [vmem:[#allocation2 + $0x8] sm:$0xff] %v184
  %191 = vst [vmem:[#allocation2 + $0x10] sm:$0xff] %v185
  %192 = vst [vmem:[#allocation2 + $0x18] sm:$0xff] %v186
  %193 = vst [vmem:[#allocation2 + $0x20] sm:$0xff] %v187
  %194 = vst [vmem:[#allocation2 + $0x28] sm:$0xff] %v188
  // Predicated region
  $region18: #{_device_forward.40} parent=0 // pred_check
    %p195 = pneg %p15
  $region19: #{_device_forward.40} parent=0 // pred_check_branch
    %197 = sbr.rel (%p195) target = $region21
  $region20: #{_device_forward.40} parent=0 // pred_region
    %v198 = vld [vmem:[#allocation2] sm:$0xff]
    %v199 = vld [vmem:[#allocation2 + $0x8] sm:$0xff]
    %v200 = vld [vmem:[#allocation2 + $0x10] sm:$0xff]
    %v201 = vld [vmem:[#allocation2 + $0x18] sm:$0xff]
    %v202 = vld [vmem:[#allocation2 + $0x20] sm:$0xff]
    %v203 = vld [vmem:[#allocation2 + $0x28] sm:$0xff]
    %v204 = vld [vmem:[%s2] sm:$0x3]
    %v206 = vlaneseq
    %v207 = vshrl.u32 %v206, 7
    %v208 = vsub.s32 0, %v207
    %v209 = vrot.slane %v204, %v208
    %v210 = vlaneseq
    %v211 = vshrl.u32 %v210, 7
    %v212 = vsub.s32 1, %v211
    %v213 = vrot.slane %v204, %v212
    %v216 = vadd.f32 %v198, %v209
    %v217 = vadd.f32 %v199, %v213
    %v218 = vadd.f32 %v200, %v209
    %v219 = vadd.f32 %v201, %v213
    %v220 = vadd.f32 %v202, %v209
    %v221 = vadd.f32 %v203, %v213
    %v222 = vmax.f32 %v216, 0.0
    %v223 = vmax.f32 %v217, 0.0
    %v224 = vmax.f32 %v218, 0.0
    %v225 = vmax.f32 %v219, 0.0
    %v226 = vmax.f32 %v220, 0.0
    %v227 = vmax.f32 %v221, 0.0
    %228 = vst [vmem:[%s3] sm:$0xff] %v222
    %229 = vst [vmem:[%s3 + $0x8] sm:$0xff] %v223
    %230 = vst [vmem:[%s3 + $0x10] sm:$0xff] %v224
    %231 = vst [vmem:[%s3 + $0x18] sm:$0xff] %v225
    %232 = vst [vmem:[%s3 + $0x20] sm:$0xff] %v226
    %233 = vst [vmem:[%s3 + $0x28] sm:$0xff] %v227
  $region21: #{_device_forward.40} parent=0 // pred_fallthru
    _
  // Predicated region
  $region22: #{_device_forward.40} parent=0 // pred_check
    _
  $region23: #{_device_forward.40} parent=0 // pred_check_branch
    %235 = sbr.rel (0) target = $region25
  $region24: #{_device_forward.40} parent=0 // pred_region
    _
  $region25: #{_device_forward.40} parent=0 // pred_fallthru
    _
  // Predicated region
  $region26: #{_device_forward.40} parent=0 // pred_check
    _
  $region27: #{_device_forward.40} parent=0 // pred_check_branch
    %237 = sbr.rel (0) target = $region29
  $region28: #{_device_forward.40} parent=0 // pred_region
    _
  $region29: #{_device_forward.40} parent=0 // pred_fallthru
    _

// kernel: _device_forward.38
$region0: #{_device_forward.38}
  #allocation0 [shape = 'u32[]', space=smem, size = 0x4, offset = 0x4, fixed_abs, tag = 'smem constant byte address 0x4 - core index']
  #allocation1 [shape = 'u32[144,128]{1,0:T(1,128)}', space=vmem, size = 0x12000, scoped, tag = 'internal scratch']
  %s0 = inlined_call_operand.vmem [shape: f32[3,1,6], index: 0, kind: input, shape index: {}]
  %s1 = inlined_call_operand.vmem [shape: f32[3,6,128], index: 1, kind: input, shape index: {}]
  %s2 = inlined_call_operand.vmem [shape: f32[3,6,128], index: 2, kind: input, shape index: {}]
  %s3 = inlined_call_operand.vmem [shape: f32[3,6,128], index: 3, kind: input, shape index: {}]
  %s4 = inlined_call_operand.vmem [shape: f32[3,6,128], index: 4, kind: output, shape index: {0}]
  %s5 = inlined_call_operand.vmem [shape: f32[3,6,6], index: 5, kind: output, shape index: {1}]
  %6 = xla_tuple %s4, %s5
  %s7 = sld [smem:[#allocation0]]
  $region57: #{_device_forward.38} parent=0
    _
  %s9 = ssub.s32 1, %s7
  %s10 = scalar_select 0, %s9, %s7
  loop: start=0, step=1, limit=5
  $region2: #{_device_forward.38} parent=0 // loop_pre_header
    _
  $region3: #{_device_forward.38} parent=0 // loop_header
    %s12 = sphi 0, %s16
    %p13 = scmp.ge.s32.totalorder %s12, 5
    %s22 = sphi 0, %s24
    %s25 = sphi 0, %s22
    %s26 = sphi 0, %s25
    %s42 = sphi 0, %s26
    %s48 = sphi 0, %s50
    %s51 = sphi 0, %s48
    %s52 = sphi 0, %s51
    %s68 = sphi 0, %s52
    %s74 = sphi 0, %s76
    %s77 = sphi 0, %s74
    %s78 = sphi 0, %s77
    %s94 = sphi 0, %s78
    %s100 = sphi 0, %s102
    %s103 = sphi 0, %s100
    %s104 = sphi 0, %s103
    %s120 = sphi 0, %s104
    %s126 = sphi 0, %s128
    %s129 = sphi 0, %s126
    %s130 = sphi 0, %s129
    %s146 = sphi 0, %s130
    %s152 = sphi 0, %s154
    %s155 = sphi 0, %s152
    %s156 = sphi 0, %s155
    %s172 = sphi 0, %s156
  $region4: #{_device_forward.38} parent=0 // loop_header_branch
    %15 = sbr.rel (%p13) target = $region8
  $region5: #{_device_forward.38} parent=0 // loop_body
    %s17 = ssub.s32 %s12, 1
    %s18 = ssub.s32 %s12, 2
    %s19 = sadd.s32 %s12, 1
    %s20 = ssub.s32 %s12, %s19
    %p21 = scmp.eq.s32.totalorder %s20, 0
    %s23 = sadd.s32 %s22, 1
    %s24 = scalar_select %p21, %s22, %s23
    %p27 = pneg %p21
    %p28 = scmp.eq.s32.totalorder %s12, 2
    %p29 = por %p27, %p28
    %p30 = scmp.ne.s32.totalorder %s22, %s25
    %p31 = scmp.eq.s32.totalorder %s12, 0
    %p32 = por %p30, %p31
    %p33 = scmp.ne.s32.totalorder %s22, %s25
    %p34 = scmp.eq.s32.totalorder %s17, 2
    %p35 = por %p33, %p34
    %p36 = scmp.ne.s32.totalorder %s25, %s26
    %p37 = scmp.eq.s32.totalorder %s17, 0
    %p38 = por %p36, %p37
    %p39 = scmp.ne.s32.totalorder %s25, %s26
    %p40 = scmp.eq.s32.totalorder %s18, 2
    %p41 = por %p39, %p40
    %p43 = scmp.ne.s32.totalorder %s26, %s42
    %p44 = scmp.eq.s32.totalorder %s18, 0
    %p45 = por %p43, %p44
    %s46 = ssub.s32 %s12, %s19
    %p47 = scmp.eq.s32.totalorder %s46, 0
    %s49 = sadd.s32 %s48, 1
    %s50 = scalar_select %p47, %s48, %s49
    %p53 = pneg %p47
    %p54 = scmp.eq.s32.totalorder %s12, 2
    %p55 = por %p53, %p54
    %p56 = scmp.ne.s32.totalorder %s48, %s51
    %p57 = scmp.eq.s32.totalorder %s12, 0
    %p58 = por %p56, %p57
    %p59 = scmp.ne.s32.totalorder %s48, %s51
    %p60 = scmp.eq.s32.totalorder %s17, 2
    %p61 = por %p59, %p60
    %p62 = scmp.ne.s32.totalorder %s51, %s52
    %p63 = scmp.eq.s32.totalorder %s17, 0
    %p64 = por %p62, %p63
    %p65 = scmp.ne.s32.totalorder %s51, %s52
    %p66 = scmp.eq.s32.totalorder %s18, 2
    %p67 = por %p65, %p66
    %p69 = scmp.ne.s32.totalorder %s52, %s68
    %p70 = scmp.eq.s32.totalorder %s18, 0
    %p71 = por %p69, %p70
    %s72 = ssub.s32 %s12, %s19
    %p73 = scmp.eq.s32.totalorder %s72, 0
    %s75 = sadd.s32 %s74, 1
    %s76 = scalar_select %p73, %s74, %s75
    %p79 = pneg %p73
    %p80 = scmp.eq.s32.totalorder %s12, 2
    %p81 = por %p79, %p80
    %p82 = scmp.ne.s32.totalorder %s74, %s77
    %p83 = scmp.eq.s32.totalorder %s12, 0
    %p84 = por %p82, %p83
    %p85 = scmp.ne.s32.totalorder %s74, %s77
    %p86 = scmp.eq.s32.totalorder %s17, 2
    %p87 = por %p85, %p86
    %p88 = scmp.ne.s32.totalorder %s77, %s78
    %p89 = scmp.eq.s32.totalorder %s17, 0
    %p90 = por %p88, %p89
    %p91 = scmp.ne.s32.totalorder %s77, %s78
    %p92 = scmp.eq.s32.totalorder %s18, 2
    %p93 = por %p91, %p92
    %p95 = scmp.ne.s32.totalorder %s78, %s94
    %p96 = scmp.eq.s32.totalorder %s18, 0
    %p97 = por %p95, %p96
    %s98 = ssub.s32 %s12, %s19
    %p99 = scmp.eq.s32.totalorder %s98, 0
    %s101 = sadd.s32 %s100, 1
    %s102 = scalar_select %p99, %s100, %s101
    %p105 = pneg %p99
    %p106 = scmp.eq.s32.totalorder %s12, 2
    %p107 = por %p105, %p106
    %p108 = scmp.ne.s32.totalorder %s100, %s103
    %p109 = scmp.eq.s32.totalorder %s12, 0
    %p110 = por %p108, %p109
    %p111 = scmp.ne.s32.totalorder %s100, %s103
    %p112 = scmp.eq.s32.totalorder %s17, 2
    %p113 = por %p111, %p112
    %p114 = scmp.ne.s32.totalorder %s103, %s104
    %p115 = scmp.eq.s32.totalorder %s17, 0
    %p116 = por %p114, %p115
    %p117 = scmp.ne.s32.totalorder %s103, %s104
    %p118 = scmp.eq.s32.totalorder %s18, 2
    %p119 = por %p117, %p118
    %p121 = scmp.ne.s32.totalorder %s104, %s120
    %p122 = scmp.eq.s32.totalorder %s18, 0
    %p123 = por %p121, %p122
    %s124 = ssub.s32 %s12, %s19
    %p125 = scmp.eq.s32.totalorder %s124, 0
    %s127 = sadd.s32 %s126, 1
    %s128 = scalar_select %p125, %s126, %s127
    %p131 = pneg %p125
    %p132 = scmp.eq.s32.totalorder %s12, 2
    %p133 = por %p131, %p132
    %p134 = scmp.ne.s32.totalorder %s126, %s129
    %p135 = scmp.eq.s32.totalorder %s12, 0
    %p136 = por %p134, %p135
    %p137 = scmp.ne.s32.totalorder %s126, %s129
    %p138 = scmp.eq.s32.totalorder %s17, 2
    %p139 = por %p137, %p138
    %p140 = scmp.ne.s32.totalorder %s129, %s130
    %p141 = scmp.eq.s32.totalorder %s17, 0
    %p142 = por %p140, %p141
    %p143 = scmp.ne.s32.totalorder %s129, %s130
    %p144 = scmp.eq.s32.totalorder %s18, 2
    %p145 = por %p143, %p144
    %p147 = scmp.ne.s32.totalorder %s130, %s146
    %p148 = scmp.eq.s32.totalorder %s18, 0
    %p149 = por %p147, %p148
    %s150 = ssub.s32 %s12, %s19
    %p151 = scmp.eq.s32.totalorder %s150, 0
    %s153 = sadd.s32 %s152, 1
    %s154 = scalar_select %p151, %s152, %s153
    %p157 = pneg %p151
    %p158 = scmp.eq.s32.totalorder %s12, 2
    %p159 = por %p157, %p158
    %p160 = scmp.ne.s32.totalorder %s152, %s155
    %p161 = scmp.eq.s32.totalorder %s12, 0
    %p162 = por %p160, %p161
    %p163 = scmp.ne.s32.totalorder %s152, %s155
    %p164 = scmp.eq.s32.totalorder %s17, 2
    %p165 = por %p163, %p164
    %p166 = scmp.ne.s32.totalorder %s155, %s156
    %p167 = scmp.eq.s32.totalorder %s17, 0
    %p168 = por %p166, %p167
    %p169 = scmp.ne.s32.totalorder %s155, %s156
    %p170 = scmp.eq.s32.totalorder %s18, 2
    %p171 = por %p169, %p170
    %p173 = scmp.ne.s32.totalorder %s156, %s172
    %p174 = scmp.eq.s32.totalorder %s18, 0
    %p175 = por %p173, %p174
    %p176 = scmp.le.s32.totalorder 1, %s12
    %p177 = scmp.lt.s32.totalorder %s12, 4
    %p178 = pnand %p176, %p177
    %p179 = pneg %p178
    // Predicated region
    $region9: #{_device_forward.38} parent=5 // pred_check
      _
    $region10: #{_device_forward.38} parent=5 // pred_check_branch
      %181 = sbr.rel (%p178) target = $region12
    $region11: #{_device_forward.38} parent=5 // pred_region
      %s182 = ssub.s32 %s12, 1
    $region12: #{_device_forward.38} parent=5 // pred_fallthru
      _
    %p183 = scmp.lt.s32.totalorder %s12, 3
    // Predicated region
    $region13: #{_device_forward.38} parent=5 // pred_check
      %p184 = pneg %p183
    $region14: #{_device_forward.38} parent=5 // pred_check_branch
      %186 = sbr.rel (%p184) target = $region16
    $region15: #{_device_forward.38} parent=5 // pred_region
      // Predicated region
      $region17: #{_device_forward.38} parent=15 // pred_check
        %p187 = pneg %p32
      $region18: #{_device_forward.38} parent=15 // pred_check_branch
        %189 = sbr.rel (%p187) target = $region20
      $region19: #{_device_forward.38} parent=15 // pred_region
        %p190 = scmp.lt.s32.totalorder %s12, 2
        %s191 = scalar_select %p190, %s12, 2
        %s192 = scalar_lea.vmem %s0, %s191
      $region20: #{_device_forward.38} parent=15 // pred_fallthru
        _
      // Predicated region
      $region21: #{_device_forward.38} parent=15 // pred_check
        %p193 = pneg %p58
      $region22: #{_device_forward.38} parent=15 // pred_check_branch
        %195 = sbr.rel (%p193) target = $region24
      $region23: #{_device_forward.38} parent=15 // pred_region
        %p196 = scmp.lt.s32.totalorder %s12, 2
        %s197 = scalar_select %p196, %s12, 2
        %s198 = smul.addr %s197, 8
        %s199 = scalar_lea.vmem %s1, %s198
      $region24: #{_device_forward.38} parent=15 // pred_fallthru
        _
      // Predicated region
      $region25: #{_device_forward.38} parent=15 // pred_check
        %p200 = pneg %p84
      $region26: #{_device_forward.38} parent=15 // pred_check_branch
        %202 = sbr.rel (%p200) target = $region28
      $region27: #{_device_forward.38} parent=15 // pred_region
        %p203 = scmp.lt.s32.totalorder %s12, 2
        %s204 = scalar_select %p203, %s12, 2
        %s205 = smul.addr %s204, 8
        %s206 = scalar_lea.vmem %s2, %s205
      $region28: #{_device_forward.38} parent=15 // pred_fallthru
        _
      // Predicated region
      $region29: #{_device_forward.38} parent=15 // pred_check
        %p207 = pneg %p110
      $region30: #{_device_forward.38} parent=15 // pred_check_branch
        %209 = sbr.rel (%p207) target = $region32
      $region31: #{_device_forward.38} parent=15 // pred_region
        %p210 = scmp.lt.s32.totalorder %s12, 2
        %s211 = scalar_select %p210, %s12, 2
        %s212 = smul.addr %s211, 8
        %s213 = scalar_lea.vmem %s3, %s212
      $region32: #{_device_forward.38} parent=15 // pred_fallthru
        _
    $region16: #{_device_forward.38} parent=5 // pred_fallthru
      _
    %p214 = scmp.le.s32.totalorder 1, %s12
    %p215 = scmp.lt.s32.totalorder %s12, 4
    %p216 = pnand %p214, %p215
    %p217 = pneg %p216
    // Predicated region
    $region33: #{_device_forward.38} parent=5 // pred_check
      _
    $region34: #{_device_forward.38} parent=5 // pred_check_branch
      %219 = sbr.rel (%p216) target = $region36
    $region35: #{_device_forward.38} parent=5 // pred_region
      %s220 = ssub.s32 %s12, 1
      %p221 = scmp.lt.s32.totalorder %s17, 2
      %s222 = scalar_select %p221, %s17, 2
      %s223 = scalar_lea.vmem %s0, %s222
      %p224 = pneg %p38
      %p225 = pneg %p35
      %p226 = scmp.lt.s32.totalorder %s17, 2
      %s227 = scalar_select %p226, %s17, 2
      %s228 = smul.addr %s227, 8
      %s229 = scalar_lea.vmem %s1, %s228
      %p230 = pneg %p64
      %p231 = pneg %p61
      %p232 = scmp.lt.s32.totalorder %s17, 2
      %s233 = scalar_select %p232, %s17, 2
      %s234 = smul.addr %s233, 8
      %s235 = scalar_lea.vmem %s2, %s234
      %p236 = pneg %p90
      %p237 = pneg %p87
      %p238 = scmp.lt.s32.totalorder %s17, 2
      %s239 = scalar_select %p238, %s17, 2
      %s240 = smul.addr %s239, 8
      %s241 = scalar_lea.vmem %s3, %s240
      %p242 = pneg %p116
      %p243 = pneg %p113
      %p244 = pneg %p142
      %p245 = pneg %p139
      %p246 = scmp.lt.s32.totalorder %s17, 2
      %s247 = scalar_select %p246, %s17, 2
      %s248 = smul.addr %s247, 8
      %s249 = scalar_lea.vmem %s4, %s248
      %p250 = pneg %p168
      %p251 = pneg %p165
      %p252 = scmp.lt.s32.totalorder %s17, 2
      %s253 = scalar_select %p252, %s17, 2
      %s254 = smul.addr %s253, 8
      %s255 = scalar_lea.vmem %s5, %s254
      %p256 = scmp.lt.s32.totalorder %s17, 2
      %s257 = scalar_select %p256, %s17, 2
      %s258 = scalar_lea.vmem %s0, %s257
      %p259 = scmp.lt.s32.totalorder %s17, 2
      %s260 = scalar_select %p259, %s17, 2
      %s261 = smul.addr %s260, 8
      %s262 = scalar_lea.vmem %s1, %s261
      %p263 = scmp.lt.s32.totalorder %s17, 2
      %s264 = scalar_select %p263, %s17, 2
      %s265 = smul.addr %s264, 8
      %s266 = scalar_lea.vmem %s2, %s265
      %p267 = scmp.lt.s32.totalorder %s17, 2
      %s268 = scalar_select %p267, %s17, 2
      %s269 = smul.addr %s268, 8
      %s270 = scalar_lea.vmem %s3, %s269
      %p271 = scmp.lt.s32.totalorder %s17, 2
      %s272 = scalar_select %p271, %s17, 2
      %s273 = smul.addr %s272, 8
      %s274 = scalar_lea.vmem %s4, %s273
      %p275 = scmp.lt.s32.totalorder %s17, 2
      %s276 = scalar_select %p275, %s17, 2
      %s277 = smul.addr %s276, 8
      %s278 = scalar_lea.vmem %s5, %s277
      %v280 = vld [vmem:[%s258] sm:$0x1]
      %v281 = vld [vmem:[%s262] sm:$0x3f]
      %v282 = vld [vmem:[%s266] sm:$0x3f]
      %v283 = vld [vmem:[%s270] sm:$0x3f]
      %v284 = vpack.c.bf16 %v281, %v281
      %v285 = vpack.c.bf16 %v282, %v282
      %vm286 = vcmask 261120
      %v288 = vsel %vm286, %v284, 0
      %v291 = vsel %vm286, %v285, 0
      %293 = vmatprep.subr.bf16.mxu0 0
      %294 = vmatpush1.bf16.xpose.msra.mxu0 %v291
      %295 = vmatprep.subr.bf16.mxu0 0
      %296 = vmatpush1.bf16.xpose.msra.mxu0 0
      %297 = vmatprep.subr.bf16.mxu0 0
      %298 = vmatpush1.bf16.xpose.msra.mxu0 0
      %299 = vmatprep.subr.bf16.mxu0 0
      %300 = vmatpush1.bf16.xpose.msra.mxu0 0
      %301 = vmatprep.subr.bf16.mxu0 0
      %302 = vmatpush1.bf16.xpose.msra.mxu0 0
      %303 = vmatprep.subr.bf16.mxu0 0
      %304 = vmatpush1.bf16.xpose.msra.mxu0 0
      %305 = vmatprep.subr.bf16.mxu0 0
      %306 = vmatpush1.bf16.xpose.msra.mxu0 0
      %307 = vmatprep.subr.bf16.mxu0 0
      %308 = vmatpush1.bf16.xpose.msra.mxu0 0
      %309 = vmatprep.subr.bf16.mxu0 0
      %310 = vmatpush1.bf16.xpose.msra.mxu0 0
      %311 = vmatprep.subr.bf16.mxu0 0
      %312 = vmatpush1.bf16.xpose.msra.mxu0 0
      %313 = vmatprep.subr.bf16.mxu0 0
      %314 = vmatpush1.bf16.xpose.msra.mxu0 0
      %315 = vmatprep.subr.bf16.mxu0 0
      %316 = vmatpush1.bf16.xpose.msra.mxu0 0
      %317 = vmatprep.subr.bf16.mxu0 0
      %318 = vmatpush1.bf16.xpose.msra.mxu0 0
      %319 = vmatprep.subr.bf16.mxu0 0
      %320 = vmatpush1.bf16.xpose.msra.mxu0 0
      %321 = vmatprep.subr.bf16.mxu0 0
      %322 = vmatpush1.bf16.xpose.msra.mxu0 0
      %323 = vmatprep.subr.bf16.mxu0 0
      %324 = vmatpush1.bf16.xpose.msra.mxu0 0
      %325 = vmatprep.mubr.bf16.mxu0 0
      %326 = vmatmul.mubr.bf16.gmra.mrb[0].mxu0 %v288
      %v327 = vpop.f32.mrb[0].mxu0
      %v328 = vadd.f32 0.0, %v327
      %v329 = vpop.f32.mrb[0].mxu0
      %v330 = vpop.f32.mrb[0].mxu0
      %v331 = vpop.f32.mrb[0].mxu0
      %332 = vdwg.mxu0
      %v333 = vmul.f32 %v328, 0.17677669
      %v335 = vlaneseq
      %v336 = vshrl.u32 %v335, 7
      %v337 = vsub.s32 0, %v336
      %v338 = vrot.slane %v280, %v337
      %v340 = vadd.f32 %v333, %v338
      %vm341 = vcmask 46080
      %v342 = vsel %vm341, %v340, -inf
      %343 = vmax.xlane.f32.xlu0 %v342
      %v344 = vpop.xlane.xlu0 %343
      %v345 = vsub.f32 %v340, %v344
      %v346 = vmul.f32 %v345, 1.442695
      %v347 = vpow.pop %v346
      %v348 = vsel %vm341, %v347, 0.0
      %349 = vadd.xlane.f32.xlu0 %v348
      %v350 = vpop.xlane.xlu0 %349
      %v351 = vrcp.pop %v350
      %v352 = vmul.f32 %v347, %v351
      %v353 = vpack.c.bf16 %v352, %v352
      %v354 = vpack.c.bf16 %v283, %v283
      %vm355 = vcmask 48128
      %v357 = vsel %vm355, %v353, 0
      %vm359 = vcmask 1042432
      %v361 = vsel %vm359, %v354, 0
      %363 = vmatprep.subr.bf16.mxu0 0
      %364 = vmatpush1.bf16.msra.mxu0 %v361
      %365 = vmatprep.subr.bf16.mxu0 0
      %366 = vmatpush1.bf16.msra.mxu0 0
      %367 = vmatprep.subr.bf16.mxu0 0
      %368 = vmatpush1.bf16.msra.mxu0 0
      %369 = vmatprep.subr.bf16.mxu0 0
      %370 = vmatpush1.bf16.msra.mxu0 0
      %371 = vmatprep.subr.bf16.mxu0 0
      %372 = vmatpush1.bf16.msra.mxu0 0
      %373 = vmatprep.subr.bf16.mxu0 0
      %374 = vmatpush1.bf16.msra.mxu0 0
      %375 = vmatprep.subr.bf16.mxu0 0
      %376 = vmatpush1.bf16.msra.mxu0 0
      %377 = vmatprep.subr.bf16.mxu0 0
      %378 = vmatpush1.bf16.msra.mxu0 0
      %379 = vmatprep.subr.bf16.mxu0 0
      %380 = vmatpush1.bf16.msra.mxu0 0
      %381 = vmatprep.subr.bf16.mxu0 0
      %382 = vmatpush1.bf16.msra.mxu0 0
      %383 = vmatprep.subr.bf16.mxu0 0
      %384 = vmatpush1.bf16.msra.mxu0 0
      %385 = vmatprep.subr.bf16.mxu0 0
      %386 = vmatpush1.bf16.msra.mxu0 0
      %387 = vmatprep.subr.bf16.mxu0 0
      %388 = vmatpush1.bf16.msra.mxu0 0
      %389 = vmatprep.subr.bf16.mxu0 0
      %390 = vmatpush1.bf16.msra.mxu0 0
      %391 = vmatprep.subr.bf16.mxu0 0
      %392 = vmatpush1.bf16.msra.mxu0 0
      %393 = vmatprep.subr.bf16.mxu0 0
      %394 = vmatpush1.bf16.msra.mxu0 0
      %395 = vmatprep.mubr.bf16.mxu0 0
      %396 = vmatmul.mubr.bf16.gmra.mrb[0].mxu0 %v357
      %v397 = vpop.f32.mrb[0].mxu0
      %v398 = vadd.f32 0.0, %v397
      %v399 = vpop.f32.mrb[0].mxu0
      %v400 = vpop.f32.mrb[0].mxu0
      %v401 = vpop.f32.mrb[0].mxu0
      %402 = vdwg.mxu0
      %v403 = vadd.f32 %v352, 0.0
      %405 = vrot.lane.b32.xlu0 %v284, 96
      %v406 = vpop.permute.xlu0 %405
      %408 = vrot.lane.b32.xlu0 %v285, 96
      %v409 = vpop.permute.xlu0 %408
      %v411 = vsel %vm286, %v406, 0
      %v414 = vsel %vm286, %v409, 0
      %416 = vmatprep.subr.bf16.mxu0 0
      %417 = vmatpush1.bf16.xpose.msra.mxu0 %v414
      %418 = vmatprep.subr.bf16.mxu0 0
      %419 = vmatpush1.bf16.xpose.msra.mxu0 0
      %420 = vmatprep.subr.bf16.mxu0 0
      %421 = vmatpush1.bf16.xpose.msra.mxu0 0
      %422 = vmatprep.subr.bf16.mxu0 0
      %423 = vmatpush1.bf16.xpose.msra.mxu0 0
      %424 = vmatprep.subr.bf16.mxu0 0
      %425 = vmatpush1.bf16.xpose.msra.mxu0 0
      %426 = vmatprep.subr.bf16.mxu0 0
      %427 = vmatpush1.bf16.xpose.msra.mxu0 0
      %428 = vmatprep.subr.bf16.mxu0 0
      %429 = vmatpush1.bf16.xpose.msra.mxu0 0
      %430 = vmatprep.subr.bf16.mxu0 0
      %431 = vmatpush1.bf16.xpose.msra.mxu0 0
      %432 = vmatprep.subr.bf16.mxu0 0
      %433 = vmatpush1.bf16.xpose.msra.mxu0 0
      %434 = vmatprep.subr.bf16.mxu0 0
      %435 = vmatpush1.bf16.xpose.msra.mxu0 0
      %436 = vmatprep.subr.bf16.mxu0 0
      %437 = vmatpush1.bf16.xpose.msra.mxu0 0
      %438 = vmatprep.subr.bf16.mxu0 0
      %439 = vmatpush1.bf16.xpose.msra.mxu0 0
      %440 = vmatprep.subr.bf16.mxu0 0
      %441 = vmatpush1.bf16.xpose.msra.mxu0 0
      %442 = vmatprep.subr.bf16.mxu0 0
      %443 = vmatpush1.bf16.xpose.msra.mxu0 0
      %444 = vmatprep.subr.bf16.mxu0 0
      %445 = vmatpush1.bf16.xpose.msra.mxu0 0
      %446 = vmatprep.subr.bf16.mxu0 0
      %447 = vmatpush1.bf16.xpose.msra.mxu0 0
      %448 = vmatprep.mubr.bf16.mxu0 0
      %449 = vmatmul.mubr.bf16.gmra.mrb[0].mxu0 %v411
      %v450 = vpop.f32.mrb[0].mxu0
      %v451 = vadd.f32 0.0, %v450
      %v452 = vpop.f32.mrb[0].mxu0
      %v453 = vpop.f32.mrb[0].mxu0
      %v454 = vpop.f32.mrb[0].mxu0
      %455 = vdwg.mxu0
      %v456 = vmul.f32 %v451, 0.17677669
      %v457 = vadd.f32 %v456, %v338
      %v458 = vsel %vm341, %v457, -inf
      %459 = vmax.xlane.f32.xlu0 %v458
      %v460 = vpop.xlane.xlu0 %459
      %v461 = vsub.f32 %v457, %v460
      %v462 = vmul.f32 %v461, 1.442695
      %v463 = vpow.pop %v462
      %v464 = vsel %vm341, %v463, 0.0
      %465 = vadd.xlane.f32.xlu0 %v464
      %v466 = vpop.xlane.xlu0 %465
      %v467 = vrcp.pop %v466
      %v468 = vmul.f32 %v463, %v467
      %v469 = vpack.c.bf16 %v468, %v468
      %471 = vrot.lane.b32.xlu0 %v354, 96
      %v472 = vpop.permute.xlu0 %471
      %v474 = vsel %vm355, %v469, 0
      %v477 = vsel %vm359, %v472, 0
      %479 = vmatprep.subr.bf16.mxu0 0
      %480 = vmatpush1.bf16.msra.mxu0 %v477
      %481 = vmatprep.subr.bf16.mxu0 0
      %482 = vmatpush1.bf16.msra.mxu0 0
      %483 = vmatprep.subr.bf16.mxu0 0
      %484 = vmatpush1.bf16.msra.mxu0 0
      %485 = vmatprep.subr.bf16.mxu0 0
      %486 = vmatpush1.bf16.msra.mxu0 0
      %487 = vmatprep.subr.bf16.mxu0 0
      %488 = vmatpush1.bf16.msra.mxu0 0
      %489 = vmatprep.subr.bf16.mxu0 0
      %490 = vmatpush1.bf16.msra.mxu0 0
      %491 = vmatprep.subr.bf16.mxu0 0
      %492 = vmatpush1.bf16.msra.mxu0 0
      %493 = vmatprep.subr.bf16.mxu0 0
      %494 = vmatpush1.bf16.msra.mxu0 0
      %495 = vmatprep.subr.bf16.mxu0 0
      %496 = vmatpush1.bf16.msra.mxu0 0
      %497 = vmatprep.subr.bf16.mxu0 0
      %498 = vmatpush1.bf16.msra.mxu0 0
      %499 = vmatprep.subr.bf16.mxu0 0
      %500 = vmatpush1.bf16.msra.mxu0 0
      %501 = vmatprep.subr.bf16.mxu0 0
      %502 = vmatpush1.bf16.msra.mxu0 0
      %503 = vmatprep.subr.bf16.mxu0 0
      %504 = vmatpush1.bf16.msra.mxu0 0
      %505 = vmatprep.subr.bf16.mxu0 0
      %506 = vmatpush1.bf16.msra.mxu0 0
      %507 = vmatprep.subr.bf16.mxu0 0
      %508 = vmatpush1.bf16.msra.mxu0 0
      %509 = vmatprep.subr.bf16.mxu0 0
      %510 = vmatpush1.bf16.msra.mxu0 0
      %511 = vmatprep.mubr.bf16.mxu0 0
      %512 = vmatmul.mubr.bf16.gmra.mrb[0].mxu0 %v474
      %v513 = vpop.f32.mrb[0].mxu0
      %v514 = vadd.f32 0.0, %v513
      %v515 = vpop.f32.mrb[0].mxu0
      %v516 = vpop.f32.mrb[0].mxu0
      %v517 = vpop.f32.mrb[0].mxu0
      %518 = vdwg.mxu0
      %v519 = vadd.f32 %v403, %v468
      %520 = vrot.lane.b32.xlu0 %v284, 64
      %v521 = vpop.permute.xlu0 %520
      %522 = vrot.lane.b32.xlu0 %v285, 64
      %v523 = vpop.permute.xlu0 %522
      %v525 = vsel %vm286, %v521, 0
      %v528 = vsel %vm286, %v523, 0
      %530 = vmatprep.subr.bf16.mxu0 0
      %531 = vmatpush1.bf16.xpose.msra.mxu0 %v528
      %532 = vmatprep.subr.bf16.mxu0 0
      %533 = vmatpush1.bf16.xpose.msra.mxu0 0
      %534 = vmatprep.subr.bf16.mxu0 0
      %535 = vmatpush1.bf16.xpose.msra.mxu0 0
      %536 = vmatprep.subr.bf16.mxu0 0
      %537 = vmatpush1.bf16.xpose.msra.mxu0 0
      %538 = vmatprep.subr.bf16.mxu0 0
      %539 = vmatpush1.bf16.xpose.msra.mxu0 0
      %540 = vmatprep.subr.bf16.mxu0 0
      %541 = vmatpush1.bf16.xpose.msra.mxu0 0
      %542 = vmatprep.subr.bf16.mxu0 0
      %543 = vmatpush1.bf16.xpose.msra.mxu0 0
      %544 = vmatprep.subr.bf16.mxu0 0
      %545 = vmatpush1.bf16.xpose.msra.mxu0 0
      %546 = vmatprep.subr.bf16.mxu0 0
      %547 = vmatpush1.bf16.xpose.msra.mxu0 0
      %548 = vmatprep.subr.bf16.mxu0 0
      %549 = vmatpush1.bf16.xpose.msra.mxu0 0
      %550 = vmatprep.subr.bf16.mxu0 0
      %551 = vmatpush1.bf16.xpose.msra.mxu0 0
      %552 = vmatprep.subr.bf16.mxu0 0
      %553 = vmatpush1.bf16.xpose.msra.mxu0 0
      %554 = vmatprep.subr.bf16.mxu0 0
      %555 = vmatpush1.bf16.xpose.msra.mxu0 0
      %556 = vmatprep.subr.bf16.mxu0 0
      %557 = vmatpush1.bf16.xpose.msra.mxu0 0
      %558 = vmatprep.subr.bf16.mxu0 0
      %559 = vmatpush1.bf16.xpose.msra.mxu0 0
      %560 = vmatprep.subr.bf16.mxu0 0
      %561 = vmatpush1.bf16.xpose.msra.mxu0 0
      %562 = vmatprep.mubr.bf16.mxu0 0
      %563 = vmatmul.mubr.bf16.gmra.mrb[0].mxu0 %v525
      %v564 = vpop.f32.mrb[0].mxu0
      %v565 = vadd.f32 0.0, %v564
      %v566 = vpop.f32.mrb[0].mxu0
      %v567 = vpop.f32.mrb[0].mxu0
      %v568 = vpop.f32.mrb[0].mxu0
      %569 = vdwg.mxu0
      %v570 = vmul.f32 %v565, 0.17677669
      %v571 = vadd.f32 %v570, %v338
      %v572 = vsel %vm341, %v571, -inf
      %573 = vmax.xlane.f32.xlu0 %v572
      %v574 = vpop.xlane.xlu0 %573
      %v575 = vsub.f32 %v571, %v574
      %v576 = vmul.f32 %v575, 1.442695
      %v577 = vpow.pop %v576
      %v578 = vsel %vm341, %v577, 0.0
      %579 = vadd.xlane.f32.xlu0 %v578
      %v580 = vpop.xlane.xlu0 %579
      %v581 = vrcp.pop %v580
      %v582 = vmul.f32 %v577, %v581
      %v583 = vpack.c.bf16 %v582, %v582
      %584 = vrot.lane.b32.xlu0 %v354, 64
      %v585 = vpop.permute.xlu0 %584
      %v587 = vsel %vm355, %v583, 0
      %v590 = vsel %vm359, %v585, 0
      %592 = vmatprep.subr.bf16.mxu0 0
      %593 = vmatpush1.bf16.msra.mxu0 %v590
      %594 = vmatprep.subr.bf16.mxu0 0
      %595 = vmatpush1.bf16.msra.mxu0 0
      %596 = vmatprep.subr.bf16.mxu0 0
      %597 = vmatpush1.bf16.msra.mxu0 0
      %598 = vmatprep.subr.bf16.mxu0 0
      %599 = vmatpush1.bf16.msra.mxu0 0
      %600 = vmatprep.subr.bf16.mxu0 0
      %601 = vmatpush1.bf16.msra.mxu0 0
      %602 = vmatprep.subr.bf16.mxu0 0
      %603 = vmatpush1.bf16.msra.mxu0 0
      %604 = vmatprep.subr.bf16.mxu0 0
      %605 = vmatpush1.bf16.msra.mxu0 0
      %606 = vmatprep.subr.bf16.mxu0 0
      %607 = vmatpush1.bf16.msra.mxu0 0
      %608 = vmatprep.subr.bf16.mxu0 0
      %609 = vmatpush1.bf16.msra.mxu0 0
      %610 = vmatprep.subr.bf16.mxu0 0
      %611 = vmatpush1.bf16.msra.mxu0 0
      %612 = vmatprep.subr.bf16.mxu0 0
      %613 = vmatpush1.bf16.msra.mxu0 0
      %614 = vmatprep.subr.bf16.mxu0 0
      %615 = vmatpush1.bf16.msra.mxu0 0
      %616 = vmatprep.subr.bf16.mxu0 0
      %617 = vmatpush1.bf16.msra.mxu0 0
      %618 = vmatprep.subr.bf16.mxu0 0
      %619 = vmatpush1.bf16.msra.mxu0 0
      %620 = vmatprep.subr.bf16.mxu0 0
      %621 = vmatpush1.bf16.msra.mxu0 0
      %622 = vmatprep.subr.bf16.mxu0 0
      %623 = vmatpush1.bf16.msra.mxu0 0
      %624 = vmatprep.mubr.bf16.mxu0 0
      %625 = vmatmul.mubr.bf16.gmra.mrb[0].mxu0 %v587
      %v626 = vpop.f32.mrb[0].mxu0
      %v627 = vadd.f32 0.0, %v626
      %v628 = vpop.f32.mrb[0].mxu0
      %v629 = vpop.f32.mrb[0].mxu0
      %v630 = vpop.f32.mrb[0].mxu0
      %631 = vdwg.mxu0
      %v632 = vadd.f32 %v519, %v582
      %633 = vrot.lane.b32.xlu0 %v284, 32
      %v634 = vpop.permute.xlu0 %633
      %635 = vrot.lane.b32.xlu0 %v285, 32
      %v636 = vpop.permute.xlu0 %635
      %v638 = vsel %vm286, %v634, 0
      %v641 = vsel %vm286, %v636, 0
      %643 = vmatprep.subr.bf16.mxu0 0
      %644 = vmatpush1.bf16.xpose.msra.mxu0 %v641
      %645 = vmatprep.subr.bf16.mxu0 0
      %646 = vmatpush1.bf16.xpose.msra.mxu0 0
      %647 = vmatprep.subr.bf16.mxu0 0
      %648 = vmatpush1.bf16.xpose.msra.mxu0 0
      %649 = vmatprep.subr.bf16.mxu0 0
      %650 = vmatpush1.bf16.xpose.msra.mxu0 0
      %651 = vmatprep.subr.bf16.mxu0 0
      %652 = vmatpush1.bf16.xpose.msra.mxu0 0
      %653 = vmatprep.subr.bf16.mxu0 0
      %654 = vmatpush1.bf16.xpose.msra.mxu0 0
      %655 = vmatprep.subr.bf16.mxu0 0
      %656 = vmatpush1.bf16.xpose.msra.mxu0 0
      %657 = vmatprep.subr.bf16.mxu0 0
      %658 = vmatpush1.bf16.xpose.msra.mxu0 0
      %659 = vmatprep.subr.bf16.mxu0 0
      %660 = vmatpush1.bf16.xpose.msra.mxu0 0
      %661 = vmatprep.subr.bf16.mxu0 0
      %662 = vmatpush1.bf16.xpose.msra.mxu0 0
      %663 = vmatprep.subr.bf16.mxu0 0
      %664 = vmatpush1.bf16.xpose.msra.mxu0 0
      %665 = vmatprep.subr.bf16.mxu0 0
      %666 = vmatpush1.bf16.xpose.msra.mxu0 0
      %667 = vmatprep.subr.bf16.mxu0 0
      %668 = vmatpush1.bf16.xpose.msra.mxu0 0
      %669 = vmatprep.subr.bf16.mxu0 0
      %670 = vmatpush1.bf16.xpose.msra.mxu0 0
      %671 = vmatprep.subr.bf16.mxu0 0
      %672 = vmatpush1.bf16.xpose.msra.mxu0 0
      %673 = vmatprep.subr.bf16.mxu0 0
      %674 = vmatpush1.bf16.xpose.msra.mxu0 0
      %675 = vmatprep.mubr.bf16.mxu0 0
      %676 = vmatmul.mubr.bf16.gmra.mrb[0].mxu0 %v638
      %v677 = vpop.f32.mrb[0].mxu0
      %v678 = vadd.f32 0.0, %v677
      %v679 = vpop.f32.mrb[0].mxu0
      %v680 = vpop.f32.mrb[0].mxu0
      %v681 = vpop.f32.mrb[0].mxu0
      %682 = vdwg.mxu0
      %v683 = vmul.f32 %v678, 0.17677669
      %v684 = vadd.f32 %v683, %v338
      %v685 = vsel %vm341, %v684, -inf
      %686 = vmax.xlane.f32.xlu0 %v685
      %v687 = vpop.xlane.xlu0 %686
      %v688 = vsub.f32 %v684, %v687
      %v689 = vmul.f32 %v688, 1.442695
      %v690 = vpow.pop %v689
      %v691 = vsel %vm341, %v690, 0.0
      %692 = vadd.xlane.f32.xlu0 %v691
      %v693 = vpop.xlane.xlu0 %692
      %v694 = vrcp.pop %v693
      %v695 = vmul.f32 %v690, %v694
      %v696 = vpack.c.bf16 %v695, %v695
      %697 = vrot.lane.b32.xlu0 %v354, 32
      %v698 = vpop.permute.xlu0 %697
      %v700 = vsel %vm355, %v696, 0
      %v703 = vsel %vm359, %v698, 0
      %705 = vmatprep.subr.bf16.mxu0 0
      %706 = vmatpush1.bf16.msra.mxu0 %v703
      %707 = vmatprep.subr.bf16.mxu0 0
      %708 = vmatpush1.bf16.msra.mxu0 0
      %709 = vmatprep.subr.bf16.mxu0 0
      %710 = vmatpush1.bf16.msra.mxu0 0
      %711 = vmatprep.subr.bf16.mxu0 0
      %712 = vmatpush1.bf16.msra.mxu0 0
      %713 = vmatprep.subr.bf16.mxu0 0
      %714 = vmatpush1.bf16.msra.mxu0 0
      %715 = vmatprep.subr.bf16.mxu0 0
      %716 = vmatpush1.bf16.msra.mxu0 0
      %717 = vmatprep.subr.bf16.mxu0 0
      %718 = vmatpush1.bf16.msra.mxu0 0
      %719 = vmatprep.subr.bf16.mxu0 0
      %720 = vmatpush1.bf16.msra.mxu0 0
      %721 = vmatprep.subr.bf16.mxu0 0
      %722 = vmatpush1.bf16.msra.mxu0 0
      %723 = vmatprep.subr.bf16.mxu0 0
      %724 = vmatpush1.bf16.msra.mxu0 0
      %725 = vmatprep.subr.bf16.mxu0 0
      %726 = vmatpush1.bf16.msra.mxu0 0
      %727 = vmatprep.subr.bf16.mxu0 0
      %728 = vmatpush1.bf16.msra.mxu0 0
      %729 = vmatprep.subr.bf16.mxu0 0
      %730 = vmatpush1.bf16.msra.mxu0 0
      %731 = vmatprep.subr.bf16.mxu0 0
      %732 = vmatpush1.bf16.msra.mxu0 0
      %733 = vmatprep.subr.bf16.mxu0 0
      %734 = vmatpush1.bf16.msra.mxu0 0
      %735 = vmatprep.subr.bf16.mxu0 0
      %736 = vmatpush1.bf16.msra.mxu0 0
      %737 = vmatprep.mubr.bf16.mxu0 0
      %738 = vmatmul.mubr.bf16.gmra.mrb[0].mxu0 %v700
      %v739 = vpop.f32.mrb[0].mxu0
      %v740 = vadd.f32 0.0, %v739
      %v741 = vpop.f32.mrb[0].mxu0
      %v742 = vpop.f32.mrb[0].mxu0
      %v743 = vpop.f32.mrb[0].mxu0
      %744 = vdwg.mxu0
      %v745 = vadd.f32 %v632, %v695
      %747 = vrot.lane.b32.xlu0 %v514, 32
      %v748 = vpop.permute.xlu0 %747
      %751 = vrot.lane.b32.xlu0 %v627, 64
      %v752 = vpop.permute.xlu0 %751
      %755 = vrot.lane.b32.xlu0 %v740, 96
      %v756 = vpop.permute.xlu0 %755
      %v758 = vsel %vm286, %v398, %v748
      %vm759 = vcmask 523264
      %v760 = vsel %vm759, %v758, %v752
      %vm761 = vcmask 785408
      %v762 = vsel %vm761, %v760, %v756
      %763 = vst [vmem:[%s274] sm:$0x3f] %v762
      %v764 = vmul.f32 %v745, 0.25
      %765 = vst.msk [vmem:[%s278] sm:$0x3f] %vm341, %v764
      %p766 = scmp.lt.s32.totalorder %s17, 2
      %s767 = scalar_select %p766, %s17, 2
      %s768 = smul.addr %s767, 8
      %s769 = scalar_lea.vmem %s4, %s768
      %p770 = scmp.lt.s32.totalorder %s17, 2
      %s771 = scalar_select %p770, %s17, 2
      %s772 = smul.addr %s771, 8
      %s773 = scalar_lea.vmem %s5, %s772
      // Predicated region
      $region37: #{_device_forward.38} parent=35 // pred_check
        %p774 = pneg %p139
      $region38: #{_device_forward.38} parent=35 // pred_check_branch
        %776 = sbr.rel (%p774) target = $region40
      $region39: #{_device_forward.38} parent=35 // pred_region
        _
      $region40: #{_device_forward.38} parent=35 // pred_fallthru
        _
      // Predicated region
      $region41: #{_device_forward.38} parent=35 // pred_check
        %p777 = pneg %p165
      $region42: #{_device_forward.38} parent=35 // pred_check_branch
        %779 = sbr.rel (%p777) target = $region44
      $region43: #{_device_forward.38} parent=35 // pred_region
        _
      $region44: #{_device_forward.38} parent=35 // pred_fallthru
        _
    $region36: #{_device_forward.38} parent=5 // pred_fallthru
      _
    %p780 = scmp.le.s32.totalorder 2, %s12
    // Predicated region
    $region45: #{_device_forward.38} parent=5 // pred_check
      %p781 = pneg %p780
    $region46: #{_device_forward.38} parent=5 // pred_check_branch
      %783 = sbr.rel (%p781) target = $region48
    $region47: #{_device_forward.38} parent=5 // pred_region
      %s784 = ssub.s32 %s12, 2
      // Predicated region
      $region49: #{_device_forward.38} parent=47 // pred_check
        %p785 = pneg %p145
      $region50: #{_device_forward.38} parent=47 // pred_check_branch
        %787 = sbr.rel (%p785) target = $region52
      $region51: #{_device_forward.38} parent=47 // pred_region
        %p788 = scmp.lt.s32.totalorder %s18, 2
        %s789 = scalar_select %p788, %s18, 2
        %s790 = smul.addr %s789, 8
        %s791 = scalar_lea.vmem %s4, %s790
      $region52: #{_device_forward.38} parent=47 // pred_fallthru
        _
      // Predicated region
      $region53: #{_device_forward.38} parent=47 // pred_check
        %p792 = pneg %p171
      $region54: #{_device_forward.38} parent=47 // pred_check_branch
        %794 = sbr.rel (%p792) target = $region56
      $region55: #{_device_forward.38} parent=47 // pred_region
        %p795 = scmp.lt.s32.totalorder %s18, 2
        %s796 = scalar_select %p795, %s18, 2
        %s797 = smul.addr %s796, 8
        %s798 = scalar_lea.vmem %s5, %s797
      $region56: #{_device_forward.38} parent=47 // pred_fallthru
        _
    $region48: #{_device_forward.38} parent=5 // pred_fallthru
      _
  $region6: #{_device_forward.38} parent=0 // loop_footer
    %s16 = sadd.s32 1, %s12
  $region7: #{_device_forward.38} parent=0 // loop_footer_branch
    %11 = sbr.rel target = $region3
  $region8: #{_device_forward.38} parent=0 // loop_exit
    _

// kernel: _device_forward.39
$region0: #{_device_forward.39}
  #allocation0 [shape = 'u32[]', space=smem, size = 0x4, offset = 0x4, fixed_abs, tag = 'smem constant byte address 0x4 - core index']
  #allocation1 [shape = 'u32[144,128]{1,0:T(1,128)}', space=vmem, size = 0x12000, scoped, tag = 'internal scratch']
  #allocation2 [shape = 'f32[24,128]{1,0:T(8,128)}', space=vmem, size = 0x3000, scoped, tag = 'scratch operand']
  %s0 = inlined_call_operand.vmem [shape: f32[24,128], index: 0, kind: input, shape index: {}]
  %s1 = inlined_call_operand.vmem [shape: bf16[128,128], index: 1, kind: input, shape index: {}]
  %s2 = inlined_call_operand.vmem [shape: f32[1,128], index: 2, kind: input, shape index: {}]
  %s3 = inlined_call_operand.vmem [shape: f32[24,128], index: 3, kind: input, shape index: {}]
  %s4 = inlined_call_operand.vmem [shape: f32[1,128], index: 4, kind: input, shape index: {}]
  %s5 = inlined_call_operand.vmem [shape: f32[1,128], index: 5, kind: input, shape index: {}]
  %s6 = inlined_call_operand.vmem [shape: f32[24,128], index: 6, kind: output, shape index: {}]
  %s7 = sld [smem:[#allocation0]]
  $region42: #{_device_forward.39} parent=0
    _
  %s9 = ssub.s32 1, %s7
  %s10 = scalar_select 0, %s9, %s7
  // Predicated region
  $region2: #{_device_forward.39} parent=0 // pred_check
    _
  $region3: #{_device_forward.39} parent=0 // pred_check_branch
    %12 = sbr.rel (0) target = $region5
  $region4: #{_device_forward.39} parent=0 // pred_region
    _
  $region5: #{_device_forward.39} parent=0 // pred_fallthru
    _
  // Predicated region
  $region6: #{_device_forward.39} parent=0 // pred_check
    _
  $region7: #{_device_forward.39} parent=0 // pred_check_branch
    %14 = sbr.rel (0) target = $region9
  $region8: #{_device_forward.39} parent=0 // pred_region
    _
  $region9: #{_device_forward.39} parent=0 // pred_fallthru
    _
  // Predicated region
  $region10: #{_device_forward.39} parent=0 // pred_check
    _
  $region11: #{_device_forward.39} parent=0 // pred_check_branch
    %16 = sbr.rel (0) target = $region13
  $region12: #{_device_forward.39} parent=0 // pred_region
    _
  $region13: #{_device_forward.39} parent=0 // pred_fallthru
    _
  // Predicated region
  $region14: #{_device_forward.39} parent=0 // pred_check
    _
  $region15: #{_device_forward.39} parent=0 // pred_check_branch
    %18 = sbr.rel (0) target = $region17
  $region16: #{_device_forward.39} parent=0 // pred_region
    _
  $region17: #{_device_forward.39} parent=0 // pred_fallthru
    _
  // Predicated region
  $region18: #{_device_forward.39} parent=0 // pred_check
    _
  $region19: #{_device_forward.39} parent=0 // pred_check_branch
    %20 = sbr.rel (0) target = $region21
  $region20: #{_device_forward.39} parent=0 // pred_region
    _
  $region21: #{_device_forward.39} parent=0 // pred_fallthru
    _
  // Predicated region
  $region22: #{_device_forward.39} parent=0 // pred_check
    _
  $region23: #{_device_forward.39} parent=0 // pred_check_branch
    %22 = sbr.rel (0) target = $region25
  $region24: #{_device_forward.39} parent=0 // pred_region
    _
  $region25: #{_device_forward.39} parent=0 // pred_fallthru
    _
  %p24 = scmp.eq.s32.totalorder 0, 0
  // Predicated region
  $region26: #{_device_forward.39} parent=0 // pred_check
    %p25 = pneg %p24
  $region27: #{_device_forward.39} parent=0 // pred_check_branch
    %27 = sbr.rel (%p25) target = $region29
  $region28: #{_device_forward.39} parent=0 // pred_region
    %28 = vst [vmem:[#allocation2] sm:$0xff] 0.0
    %29 = vst [vmem:[#allocation2 + $0x8] sm:$0xff] 0.0
    %30 = vst [vmem:[#allocation2 + $0x10] sm:$0xff] 0.0
  $region29: #{_device_forward.39} parent=0 // pred_fallthru
    _
  %v31 = vld [vmem:[#allocation2] sm:$0xff]
  %v32 = vld [vmem:[#allocation2 + $0x8] sm:$0xff]
  %v33 = vld [vmem:[#allocation2 + $0x10] sm:$0xff]
  %v34 = vld [vmem:[%s0] sm:$0xff]
  %v35 = vld [vmem:[%s0 + $0x8] sm:$0xff]
  %v36 = vld [vmem:[%s0 + $0x10] sm:$0xff]
  %v37 = vpack.c.bf16 %v35, %v34
  %v38 = vpack.c.bf16 %v36, %v36
  %v39 = vld [vmem:[%s1] sm:$0xf]
  %v40 = vld [vmem:[%s1 + $0x4] sm:$0xf]
  %v41 = vld [vmem:[%s1 + $0x8] sm:$0xf]
  %v42 = vld [vmem:[%s1 + $0xc] sm:$0xf]
  %v43 = vld [vmem:[%s1 + $0x10] sm:$0xf]
  %v44 = vld [vmem:[%s1 + $0x14] sm:$0xf]
  %v45 = vld [vmem:[%s1 + $0x18] sm:$0xf]
  %v46 = vld [vmem:[%s1 + $0x1c] sm:$0xf]
  %v47 = vld [vmem:[%s1 + $0x20] sm:$0xf]
  %v48 = vld [vmem:[%s1 + $0x24] sm:$0xf]
  %v49 = vld [vmem:[%s1 + $0x28] sm:$0xf]
  %v50 = vld [vmem:[%s1 + $0x2c] sm:$0xf]
  %v51 = vld [vmem:[%s1 + $0x30] sm:$0xf]
  %v52 = vld [vmem:[%s1 + $0x34] sm:$0xf]
  %v53 = vld [vmem:[%s1 + $0x38] sm:$0xf]
  %v54 = vld [vmem:[%s1 + $0x3c] sm:$0xf]
  %v71 = vunpack.c.l.b16 %v39
  %v72 = vunpack.c.l.b16 %v40
  %v73 = vunpack.c.l.b16 %v41
  %v74 = vunpack.c.l.b16 %v42
  %v75 = vunpack.c.l.b16 %v43
  %v76 = vunpack.c.l.b16 %v44
  %v77 = vunpack.c.l.b16 %v45
  %v78 = vunpack.c.l.b16 %v46
  %v79 = vunpack.c.l.b16 %v47
  %v80 = vunpack.c.l.b16 %v48
  %v81 = vunpack.c.l.b16 %v49
  %v82 = vunpack.c.l.b16 %v50
  %v83 = vunpack.c.l.b16 %v51
  %v84 = vunpack.c.l.b16 %v52
  %v85 = vunpack.c.l.b16 %v53
  %v86 = vunpack.c.l.b16 %v54
  %v87 = vpack.c.b16 %v72, %v71
  %v88 = vpack.c.b16 %v74, %v73
  %v89 = vpack.c.b16 %v76, %v75
  %v90 = vpack.c.b16 %v78, %v77
  %v91 = vpack.c.b16 %v80, %v79
  %v92 = vpack.c.b16 %v82, %v81
  %v93 = vpack.c.b16 %v84, %v83
  %v94 = vpack.c.b16 %v86, %v85
  %103 = vmatprep.subr.bf16.mxu0 0
  %104 = vmatpush1.bf16.msra.mxu0 %v87
  %105 = vmatprep.subr.bf16.mxu0 0
  %106 = vmatpush1.bf16.msra.mxu0 %v88
  %107 = vmatprep.subr.bf16.mxu0 0
  %108 = vmatpush1.bf16.msra.mxu0 %v89
  %109 = vmatprep.subr.bf16.mxu0 0
  %110 = vmatpush1.bf16.msra.mxu0 %v90
  %111 = vmatprep.subr.bf16.mxu0 0
  %112 = vmatpush1.bf16.msra.mxu0 %v91
  %113 = vmatprep.subr.bf16.mxu0 0
  %114 = vmatpush1.bf16.msra.mxu0 %v92
  %115 = vmatprep.subr.bf16.mxu0 0
  %116 = vmatpush1.bf16.msra.mxu0 %v93
  %117 = vmatprep.subr.bf16.mxu0 0
  %118 = vmatpush1.bf16.msra.mxu0 %v94
  %119 = vmatprep.subr.bf16.mxu0 0
  %120 = vmatpush1.bf16.msra.mxu0 0
  %121 = vmatprep.subr.bf16.mxu0 0
  %122 = vmatpush1.bf16.msra.mxu0 0
  %123 = vmatprep.subr.bf16.mxu0 0
  %124 = vmatpush1.bf16.msra.mxu0 0
  %125 = vmatprep.subr.bf16.mxu0 0
  %126 = vmatpush1.bf16.msra.mxu0 0
  %127 = vmatprep.subr.bf16.mxu0 0
  %128 = vmatpush1.bf16.msra.mxu0 0
  %129 = vmatprep.subr.bf16.mxu0 0
  %130 = vmatpush1.bf16.msra.mxu0 0
  %131 = vmatprep.subr.bf16.mxu0 0
  %132 = vmatpush1.bf16.msra.mxu0 0
  %133 = vmatprep.subr.bf16.mxu0 0
  %134 = vmatpush1.bf16.msra.mxu0 0
  %135 = vmatprep.mubr.bf16.mxu0 0
  %136 = vmatmul.mubr.bf16.gmra.mrb[0].mxu0 %v37
  %v137 = vpop.f32.mrb[0].mxu0
  %v138 = vadd.f32 0.0, %v137
  %v139 = vpop.f32.mrb[0].mxu0
  %v140 = vpop.f32.mrb[0].mxu0
  %v141 = vadd.f32 0.0, %v140
  %v142 = vpop.f32.mrb[0].mxu0
  %143 = vmatprep.mubr.bf16.mxu0 0
  %144 = vmatmul.mubr.bf16.gmra.mrb[0].mxu0 %v38
  %v145 = vpop.f32.mrb[0].mxu0
  %v146 = vadd.f32 0.0, %v145
  %v147 = vpop.f32.mrb[0].mxu0
  %v148 = vpop.f32.mrb[0].mxu0
  %v149 = vpop.f32.mrb[0].mxu0
  %150 = vdwg.mxu0
  %v151 = vadd.f32 %v31, %v138
  %v152 = vadd.f32 %v32, %v141
  %v153 = vadd.f32 %v33, %v146
  %154 = vst [vmem:[#allocation2] sm:$0xff] %v151
  %155 = vst [vmem:[#allocation2 + $0x8] sm:$0xff] %v152
  %156 = vst [vmem:[#allocation2 + $0x10] sm:$0xff] %v153
  // Predicated region
  $region30: #{_device_forward.39} parent=0 // pred_check
    %p157 = pneg %p24
  $region31: #{_device_forward.39} parent=0 // pred_check_branch
    %159 = sbr.rel (%p157) target = $region33
  $region32: #{_device_forward.39} parent=0 // pred_region
    %v160 = vld [vmem:[#allocation2] sm:$0xff]
    %v161 = vld [vmem:[#allocation2 + $0x8] sm:$0xff]
    %v162 = vld [vmem:[#allocation2 + $0x10] sm:$0xff]
    %v163 = vld [vmem:[%s2] sm:$0x1]
    %v165 = vlaneseq
    %v166 = vshrl.u32 %v165, 7
    %v167 = vsub.s32 0, %v166
    %v168 = vrot.slane %v163, %v167
    %v170 = vadd.f32 %v160, %v168
    %v171 = vadd.f32 %v161, %v168
    %v172 = vadd.f32 %v162, %v168
    %v173 = vld [vmem:[%s3] sm:$0xff]
    %v174 = vld [vmem:[%s3 + $0x8] sm:$0xff]
    %v175 = vld [vmem:[%s3 + $0x10] sm:$0xff]
    %v176 = vadd.f32 %v170, %v173
    %v177 = vadd.f32 %v171, %v174
    %v178 = vadd.f32 %v172, %v175
    %179 = vadd.xlane.f32.xlu0 %v176
    %v180 = vpop.xlane.xlu0 %179
    %181 = vadd.xlane.f32.xlu0 %v177
    %v182 = vpop.xlane.xlu0 %181
    %183 = vadd.xlane.f32.xlu0 %v178
    %v184 = vpop.xlane.xlu0 %183
    %v185 = vmul.f32 %v180, 0.0078125
    %v186 = vmul.f32 %v182, 0.0078125
    %v187 = vmul.f32 %v184, 0.0078125
    %v188 = vsub.f32 %v176, %v185
    %v189 = vsub.f32 %v177, %v186
    %v190 = vsub.f32 %v178, %v187
    %v191 = vmul.f32 %v188, %v188
    %v192 = vmul.f32 %v189, %v189
    %v193 = vmul.f32 %v190, %v190
    %194 = vadd.xlane.f32.xlu0 %v191
    %v195 = vpop.xlane.xlu0 %194
    %196 = vadd.xlane.f32.xlu0 %v192
    %v197 = vpop.xlane.xlu0 %196
    %198 = vadd.xlane.f32.xlu0 %v193
    %v199 = vpop.xlane.xlu0 %198
    %v200 = vmul.f32 %v195, 0.0078125
    %v201 = vmul.f32 %v197, 0.0078125
    %v202 = vmul.f32 %v199, 0.0078125
    %v203 = vadd.f32 %v200, 1e-05
    %v204 = vadd.f32 %v201, 1e-05
    %v205 = vadd.f32 %v202, 1e-05
    %v206 = vrsqrt.pop %v203
    %v207 = vrsqrt.pop %v204
    %v208 = vrsqrt.pop %v205
    %v209 = vmul.f32 %v188, %v206
    %v210 = vmul.f32 %v189, %v207
    %v211 = vmul.f32 %v190, %v208
    %v212 = vld [vmem:[%s4] sm:$0x1]
    %v214 = vlaneseq
    %v215 = vshrl.u32 %v214, 7
    %v216 = vsub.s32 0, %v215
    %v217 = vrot.slane %v212, %v216
    %v219 = vmul.f32 %v209, %v217
    %v220 = vmul.f32 %v210, %v217
    %v221 = vmul.f32 %v211, %v217
    %v222 = vld [vmem:[%s5] sm:$0x1]
    %v224 = vlaneseq
    %v225 = vshrl.u32 %v224, 7
    %v226 = vsub.s32 0, %v225
    %v227 = vrot.slane %v222, %v226
    %v229 = vadd.f32 %v219, %v227
    %v230 = vadd.f32 %v220, %v227
    %v231 = vadd.f32 %v221, %v227
    %232 = vst [vmem:[%s6] sm:$0xff] %v229
    %233 = vst [vmem:[%s6 + $0x8] sm:$0xff] %v230
    %234 = vst [vmem:[%s6 + $0x10] sm:$0xff] %v231
  $region33: #{_device_forward.39} parent=0 // pred_fallthru
    _
  // Predicated region
  $region34: #{_device_forward.39} parent=0 // pred_check
    _
  $region35: #{_device_forward.39} parent=0 // pred_check_branch
    %236 = sbr.rel (0) target = $region37
  $region36: #{_device_forward.39} parent=0 // pred_region
    _
  $region37: #{_device_forward.39} parent=0 // pred_fallthru
    _
  // Predicated region
  $region38: #{_device_forward.39} parent=0 // pred_check
    _
  $region39: #{_device_forward.39} parent=0 // pred_check_branch
    %238 = sbr.rel (0) target = $region41
  $region40: #{_device_forward.39} parent=0 // pred_region
    _
  $region41: #{_device_forward.39} parent=0 // pred_fallthru
    _

// kernel: _device_forward.41
$region0: #{_device_forward.41}
  #allocation0 [shape = 'u32[]', space=smem, size = 0x4, offset = 0x4, fixed_abs, tag = 'smem constant byte address 0x4 - core index']
  #allocation1 [shape = 'u32[144,128]{1,0:T(1,128)}', space=vmem, size = 0x12000, scoped, tag = 'internal scratch']
  #allocation2 [shape = 'f32[24,128]{1,0:T(8,128)}', space=vmem, size = 0x3000, scoped, tag = 'scratch operand']
  %s0 = inlined_call_operand.vmem [shape: f32[24,256], index: 0, kind: input, shape index: {}]
  %s1 = inlined_call_operand.vmem [shape: bf16[256,128], index: 1, kind: input, shape index: {}]
  %s2 = inlined_call_operand.vmem [shape: f32[1,128], index: 2, kind: input, shape index: {}]
  %s3 = inlined_call_operand.vmem [shape: f32[24,128], index: 3, kind: input, shape index: {}]
  %s4 = inlined_call_operand.vmem [shape: f32[24,128], index: 4, kind: output, shape index: {}]
  %s5 = sld [smem:[#allocation0]]
  $region34: #{_device_forward.41} parent=0
    _
  %s7 = ssub.s32 1, %s5
  %s8 = scalar_select 0, %s7, %s5
  // Predicated region
  $region2: #{_device_forward.41} parent=0 // pred_check
    _
  $region3: #{_device_forward.41} parent=0 // pred_check_branch
    %10 = sbr.rel (0) target = $region5
  $region4: #{_device_forward.41} parent=0 // pred_region
    _
  $region5: #{_device_forward.41} parent=0 // pred_fallthru
    _
  // Predicated region
  $region6: #{_device_forward.41} parent=0 // pred_check
    _
  $region7: #{_device_forward.41} parent=0 // pred_check_branch
    %12 = sbr.rel (0) target = $region9
  $region8: #{_device_forward.41} parent=0 // pred_region
    _
  $region9: #{_device_forward.41} parent=0 // pred_fallthru
    _
  // Predicated region
  $region10: #{_device_forward.41} parent=0 // pred_check
    _
  $region11: #{_device_forward.41} parent=0 // pred_check_branch
    %14 = sbr.rel (0) target = $region13
  $region12: #{_device_forward.41} parent=0 // pred_region
    _
  $region13: #{_device_forward.41} parent=0 // pred_fallthru
    _
  // Predicated region
  $region14: #{_device_forward.41} parent=0 // pred_check
    _
  $region15: #{_device_forward.41} parent=0 // pred_check_branch
    %16 = sbr.rel (0) target = $region17
  $region16: #{_device_forward.41} parent=0 // pred_region
    _
  $region17: #{_device_forward.41} parent=0 // pred_fallthru
    _
  %p18 = scmp.eq.s32.totalorder 0, 0
  // Predicated region
  $region18: #{_device_forward.41} parent=0 // pred_check
    %p19 = pneg %p18
  $region19: #{_device_forward.41} parent=0 // pred_check_branch
    %21 = sbr.rel (%p19) target = $region21
  $region20: #{_device_forward.41} parent=0 // pred_region
    %22 = vst [vmem:[#allocation2] sm:$0xff] 0.0
    %23 = vst [vmem:[#allocation2 + $0x8] sm:$0xff] 0.0
    %24 = vst [vmem:[#allocation2 + $0x10] sm:$0xff] 0.0
  $region21: #{_device_forward.41} parent=0 // pred_fallthru
    _
  %v25 = vld [vmem:[#allocation2] sm:$0xff]
  %v26 = vld [vmem:[#allocation2 + $0x8] sm:$0xff]
  %v27 = vld [vmem:[#allocation2 + $0x10] sm:$0xff]
  %v28 = vld [vmem:[%s0] sm:$0xff]
  %v29 = vld [vmem:[%s0 + $0x8] sm:$0xff]
  %v30 = vld [vmem:[%s0 + $0x10] sm:$0xff]
  %v31 = vld [vmem:[%s0 + $0x18] sm:$0xff]
  %v32 = vld [vmem:[%s0 + $0x20] sm:$0xff]
  %v33 = vld [vmem:[%s0 + $0x28] sm:$0xff]
  %v34 = vpack.c.bf16 %v30, %v28
  %v35 = vpack.c.bf16 %v31, %v29
  %v36 = vpack.c.bf16 %v32, %v32
  %v37 = vpack.c.bf16 %v33, %v33
  %v38 = vld [vmem:[%s1] sm:$0xf]
  %v39 = vld [vmem:[%s1 + $0x4] sm:$0xf]
  %v40 = vld [vmem:[%s1 + $0x8] sm:$0xf]
  %v41 = vld [vmem:[%s1 + $0xc] sm:$0xf]
  %v42 = vld [vmem:[%s1 + $0x10] sm:$0xf]
  %v43 = vld [vmem:[%s1 + $0x14] sm:$0xf]
  %v44 = vld [vmem:[%s1 + $0x18] sm:$0xf]
  %v45 = vld [vmem:[%s1 + $0x1c] sm:$0xf]
  %v46 = vld [vmem:[%s1 + $0x20] sm:$0xf]
  %v47 = vld [vmem:[%s1 + $0x24] sm:$0xf]
  %v48 = vld [vmem:[%s1 + $0x28] sm:$0xf]
  %v49 = vld [vmem:[%s1 + $0x2c] sm:$0xf]
  %v50 = vld [vmem:[%s1 + $0x30] sm:$0xf]
  %v51 = vld [vmem:[%s1 + $0x34] sm:$0xf]
  %v52 = vld [vmem:[%s1 + $0x38] sm:$0xf]
  %v53 = vld [vmem:[%s1 + $0x3c] sm:$0xf]
  %v54 = vld [vmem:[%s1 + $0x40] sm:$0xf]
  %v55 = vld [vmem:[%s1 + $0x44] sm:$0xf]
  %v56 = vld [vmem:[%s1 + $0x48] sm:$0xf]
  %v57 = vld [vmem:[%s1 + $0x4c] sm:$0xf]
  %v58 = vld [vmem:[%s1 + $0x50] sm:$0xf]
  %v59 = vld [vmem:[%s1 + $0x54] sm:$0xf]
  %v60 = vld [vmem:[%s1 + $0x58] sm:$0xf]
  %v61 = vld [vmem:[%s1 + $0x5c] sm:$0xf]
  %v62 = vld [vmem:[%s1 + $0x60] sm:$0xf]
  %v63 = vld [vmem:[%s1 + $0x64] sm:$0xf]
  %v64 = vld [vmem:[%s1 + $0x68] sm:$0xf]
  %v65 = vld [vmem:[%s1 + $0x6c] sm:$0xf]
  %v66 = vld [vmem:[%s1 + $0x70] sm:$0xf]
  %v67 = vld [vmem:[%s1 + $0x74] sm:$0xf]
  %v68 = vld [vmem:[%s1 + $0x78] sm:$0xf]
  %v69 = vld [vmem:[%s1 + $0x7c] sm:$0xf]
  %v102 = vunpack.c.l.b16 %v38
  %v103 = vunpack.c.l.b16 %v39
  %v104 = vunpack.c.l.b16 %v40
  %v105 = vunpack.c.l.b16 %v41
  %v106 = vunpack.c.l.b16 %v42
  %v107 = vunpack.c.l.b16 %v43
  %v108 = vunpack.c.l.b16 %v44
  %v109 = vunpack.c.l.b16 %v45
  %v110 = vunpack.c.l.b16 %v46
  %v111 = vunpack.c.l.b16 %v47
  %v112 = vunpack.c.l.b16 %v48
  %v113 = vunpack.c.l.b16 %v49
  %v114 = vunpack.c.l.b16 %v50
  %v115 = vunpack.c.l.b16 %v51
  %v116 = vunpack.c.l.b16 %v52
  %v117 = vunpack.c.l.b16 %v53
  %v118 = vunpack.c.l.b16 %v54
  %v119 = vunpack.c.l.b16 %v55
  %v120 = vunpack.c.l.b16 %v56
  %v121 = vunpack.c.l.b16 %v57
  %v122 = vunpack.c.l.b16 %v58
  %v123 = vunpack.c.l.b16 %v59
  %v124 = vunpack.c.l.b16 %v60
  %v125 = vunpack.c.l.b16 %v61
  %v126 = vunpack.c.l.b16 %v62
  %v127 = vunpack.c.l.b16 %v63
  %v128 = vunpack.c.l.b16 %v64
  %v129 = vunpack.c.l.b16 %v65
  %v130 = vunpack.c.l.b16 %v66
  %v131 = vunpack.c.l.b16 %v67
  %v132 = vunpack.c.l.b16 %v68
  %v133 = vunpack.c.l.b16 %v69
  %v134 = vpack.c.b16 %v103, %v102
  %v135 = vpack.c.b16 %v105, %v104
  %v136 = vpack.c.b16 %v107, %v106
  %v137 = vpack.c.b16 %v109, %v108
  %v138 = vpack.c.b16 %v111, %v110
  %v139 = vpack.c.b16 %v113, %v112
  %v140 = vpack.c.b16 %v115, %v114
  %v141 = vpack.c.b16 %v117, %v116
  %v142 = vpack.c.b16 %v119, %v118
  %v143 = vpack.c.b16 %v121, %v120
  %v144 = vpack.c.b16 %v123, %v122
  %v145 = vpack.c.b16 %v125, %v124
  %v146 = vpack.c.b16 %v127, %v126
  %v147 = vpack.c.b16 %v129, %v128
  %v148 = vpack.c.b16 %v131, %v130
  %v149 = vpack.c.b16 %v133, %v132
  %166 = vmatprep.subr.bf16.mxu0 0
  %167 = vmatpush1.bf16.msra.mxu0 %v134
  %168 = vmatprep.subr.bf16.mxu0 0
  %169 = vmatpush1.bf16.msra.mxu0 %v135
  %170 = vmatprep.subr.bf16.mxu0 0
  %171 = vmatpush1.bf16.msra.mxu0 %v136
  %172 = vmatprep.subr.bf16.mxu0 0
  %173 = vmatpush1.bf16.msra.mxu0 %v137
  %174 = vmatprep.subr.bf16.mxu0 0
  %175 = vmatpush1.bf16.msra.mxu0 %v138
  %176 = vmatprep.subr.bf16.mxu0 0
  %177 = vmatpush1.bf16.msra.mxu0 %v139
  %178 = vmatprep.subr.bf16.mxu0 0
  %179 = vmatpush1.bf16.msra.mxu0 %v140
  %180 = vmatprep.subr.bf16.mxu0 0
  %181 = vmatpush1.bf16.msra.mxu0 %v141
  %182 = vmatprep.subr.bf16.mxu0 0
  %183 = vmatpush1.bf16.msra.mxu0 %v142
  %184 = vmatprep.subr.bf16.mxu0 0
  %185 = vmatpush1.bf16.msra.mxu0 %v143
  %186 = vmatprep.subr.bf16.mxu0 0
  %187 = vmatpush1.bf16.msra.mxu0 %v144
  %188 = vmatprep.subr.bf16.mxu0 0
  %189 = vmatpush1.bf16.msra.mxu0 %v145
  %190 = vmatprep.subr.bf16.mxu0 0
  %191 = vmatpush1.bf16.msra.mxu0 %v146
  %192 = vmatprep.subr.bf16.mxu0 0
  %193 = vmatpush1.bf16.msra.mxu0 %v147
  %194 = vmatprep.subr.bf16.mxu0 0
  %195 = vmatpush1.bf16.msra.mxu0 %v148
  %196 = vmatprep.subr.bf16.mxu0 0
  %197 = vmatpush1.bf16.msra.mxu0 %v149
  %198 = vmatprep.mubr.bf16.mxu0 %v35
  %199 = vmatmul.mubr.bf16.gmra.mrb[0].mxu0 %v34
  %v200 = vpop.f32.mrb[0].mxu0
  %v201 = vadd.f32 0.0, %v200
  %v202 = vpop.f32.mrb[0].mxu0
  %v203 = vpop.f32.mrb[0].mxu0
  %v204 = vadd.f32 0.0, %v203
  %v205 = vpop.f32.mrb[0].mxu0
  %206 = vmatprep.mubr.bf16.mxu0 %v37
  %207 = vmatmul.mubr.bf16.gmra.mrb[0].mxu0 %v36
  %v208 = vpop.f32.mrb[0].mxu0
  %v209 = vadd.f32 0.0, %v208
  %v210 = vpop.f32.mrb[0].mxu0
  %v211 = vpop.f32.mrb[0].mxu0
  %v212 = vpop.f32.mrb[0].mxu0
  %213 = vdwg.mxu0
  %v214 = vadd.f32 %v25, %v201
  %v215 = vadd.f32 %v26, %v204
  %v216 = vadd.f32 %v27, %v209
  %217 = vst [vmem:[#allocation2] sm:$0xff] %v214
  %218 = vst [vmem:[#allocation2 + $0x8] sm:$0xff] %v215
  %219 = vst [vmem:[#allocation2 + $0x10] sm:$0xff] %v216
  // Predicated region
  $region22: #{_device_forward.41} parent=0 // pred_check
    %p220 = pneg %p18
  $region23: #{_device_forward.41} parent=0 // pred_check_branch
    %222 = sbr.rel (%p220) target = $region25
  $region24: #{_device_forward.41} parent=0 // pred_region
    %v223 = vld [vmem:[#allocation2] sm:$0xff]
    %v224 = vld [vmem:[#allocation2 + $0x8] sm:$0xff]
    %v225 = vld [vmem:[#allocation2 + $0x10] sm:$0xff]
    %v226 = vld [vmem:[%s2] sm:$0x1]
    %v228 = vlaneseq
    %v229 = vshrl.u32 %v228, 7
    %v230 = vsub.s32 0, %v229
    %v231 = vrot.slane %v226, %v230
    %v233 = vadd.f32 %v223, %v231
    %v234 = vadd.f32 %v224, %v231
    %v235 = vadd.f32 %v225, %v231
    %v236 = vld [vmem:[%s3] sm:$0xff]
    %v237 = vld [vmem:[%s3 + $0x8] sm:$0xff]
    %v238 = vld [vmem:[%s3 + $0x10] sm:$0xff]
    %v239 = vadd.f32 %v233, %v236
    %v240 = vadd.f32 %v234, %v237
    %v241 = vadd.f32 %v235, %v238
    %242 = vst [vmem:[%s4] sm:$0xff] %v239
    %243 = vst [vmem:[%s4 + $0x8] sm:$0xff] %v240
    %244 = vst [vmem:[%s4 + $0x10] sm:$0xff] %v241
  $region25: #{_device_forward.41} parent=0 // pred_fallthru
    _
  // Predicated region
  $region26: #{_device_forward.41} parent=0 // pred_check
    _
  $region27: #{_device_forward.41} parent=0 // pred_check_branch
    %246 = sbr.rel (0) target = $region29
  $region28: #{_device_forward.41} parent=0 // pred_region
    _
  $region29: #{_device_forward.41} parent=0 // pred_fallthru
    _
  // Predicated region
  $region30: #{_device_forward.41} parent=0 // pred_check
    _
  $region31: #{_device_forward.41} parent=0 // pred_check_branch
    %248 = sbr.rel (0) target = $region33
  $region32: #{_device_forward.41} parent=0 // pred_region
    _
  $region33: #{_device_forward.41} parent=0 // pred_fallthru
    _

</llo_original>
